<compile_context>
chip_gen: v5e
topology: v5e:2x2
jax: 0.10.0
libtpu: 0.0.40
codegen_flags: <defaults>
</compile_context>

<pallas_src>
import numpy as np
import jax
import jax.numpy as jnp
from jax.experimental import pallas as pl
from jax.experimental.pallas import tpu as pltpu


# ----------------------------------------------------------------------------
# Host-side weight fusion / packing (done once, outside the jitted forward).
# ----------------------------------------------------------------------------
def _fuse_gatewise(wp, wm, hp, hm):
    """Gate-wise block fusion of two gate-major (i,f,g,o) matrices.

    wp: [dp, 4*hp], wm: [dm, 4*hm] -> [dp+dm, 4*(hp+hm)] with per-gate blocks
    [[Wp_g, 0], [0, Wm_g]]  (columns per gate are laid out [pep | mhc])."""
    dp, dm = wp.shape[0], wm.shape[0]
    hc = hp + hm
    out = np.zeros((dp + dm, 4 * hc), np.float32)
    for g in range(4):
        out[:dp, g * hc:g * hc + hp] = wp[:, g * hp:(g + 1) * hp]
        out[dp:, g * hc + hp:(g + 1) * hc] = wm[:, g * hm:(g + 1) * hm]
    return out


def _fuse_bias(bp, bm, hp, hm):
    hc = hp + hm
    out = np.zeros((1, 4 * hc), np.float32)
    for g in range(4):
        out[0, g * hc:g * hc + hp] = bp[0, g * hp:(g + 1) * hp]
        out[0, g * hc + hp:(g + 1) * hc] = bm[0, g * hm:(g + 1) * hm]
    return out


class _Packer:
    """Packs many small [r, c] matrices into one [R, Wmax] buffer with static
    row offsets (rows padded to `row_align` so in-kernel slices stay
    tile-aligned)."""

    def __init__(self, row_align):
        self._row_align = row_align
        self._arrays = []

    def add(self, a):
        self._arrays.append(np.asarray(a, np.float32))
        return len(self._arrays) - 1

    def build(self):
        width = max(a.shape[1] for a in self._arrays)
        blocks, offs, off = [], [], 0
        for a in self._arrays:
            r, c = a.shape
            rp = ((r + self._row_align - 1) // self._row_align) * self._row_align
            blk = np.zeros((rp, width), np.float32)
            blk[:r, :c] = a
            blocks.append(blk)
            offs.append((off, r, c))
            off += rp
        return np.concatenate(blocks, axis=0), tuple(offs)


def pack_for_kernel(params):
    """One-time host-side preparation of kernel operands."""
    pep_layers = [tuple(np.asarray(a, np.float32) for a in l)
                  for l in params["pep_lstm"]]
    mhc_layers = [tuple(np.asarray(a, np.float32) for a in l)
                  for l in params["mhc_lstm"]]
    head = {k: np.asarray(v, np.float32) for k, v in params["head"].items()}

    n_pep, n_mhc = len(pep_layers), len(mhc_layers)
    nf = min(n_pep, n_mhc)
    assert nf >= 1
    E = pep_layers[0][0].shape[0]
    HP = pep_layers[0][1].shape[0]
    HM = mhc_layers[0][1].shape[0]
    L1 = head["wp"].shape[1]
    L2 = head["wo"].shape[1]

    wpk = _Packer(row_align=16)   # bf16 sublane tile
    bpk = _Packer(row_align=1)

    wd = {"fused_ih": [], "fused_hh": [], "pep_ih": [], "pep_hh": [],
          "mhc_ih": [], "mhc_hh": []}
    bd = {"fused": [], "pep": [], "mhc": []}

    # Shared (fused) layers.
    for l in range(nf):
        wih_p, whh_p, b_p = pep_layers[l]
        wih_m, whh_m, b_m = mhc_layers[l]
        wd["fused_ih"].append(wpk.add(_fuse_gatewise(wih_p, wih_m, HP, HM)))
        wd["fused_hh"].append(wpk.add(_fuse_gatewise(whh_p, whh_m, HP, HM)))
        bd["fused"].append(bpk.add(_fuse_bias(b_p, b_m, HP, HM)))
    # Remaining peptide-only layers.
    for l in range(nf, n_pep):
        wih, whh, b = pep_layers[l]
        wd["pep_ih"].append(wpk.add(wih))
        wd["pep_hh"].append(wpk.add(whh))
        bd["pep"].append(bpk.add(b))
    # Remaining MHC-only layers.
    for l in range(nf, n_mhc):
        wih, whh, b = mhc_layers[l]
        wd["mhc_ih"].append(wpk.add(wih))
        wd["mhc_hh"].append(wpk.add(whh))
        bd["mhc"].append(bpk.add(b))

    # Head weights: split so no lane-concats are needed in the kernel.
    wd["wp_h"] = wpk.add(head["wp"][:HP]); wd["wp_c"] = wpk.add(head["wp"][HP:])
    wd["wm_h"] = wpk.add(head["wm"][:HM]); wd["wm_c"] = wpk.add(head["wm"][HM:])
    wd["wh_p"] = wpk.add(head["wh"][:L1]); wd["wh_m"] = wpk.add(head["wh"][L1:])
    wd["wo"] = wpk.add(head["wo"].T if L2 == 1 else head["wo"])
    bd["bp"] = bpk.add(head["bp"]); bd["bm"] = bpk.add(head["bm"])
    bd["bh"] = bpk.add(head["bh"]); bd["bo"] = bpk.add(head["bo"])

    wbuf_np, w_offs = wpk.build()
    bbuf_np, b_offs = bpk.build()

    meta = dict(E=E, HP=HP, HM=HM, L1=L1, L2=L2,
                num_fused=nf, n_solo_pep=n_pep - nf, n_solo_mhc=n_mhc - nf,
                w_offs=w_offs, b_offs=b_offs, wd=wd, bd=bd)
    arrays = dict(
        pep_tab=jnp.asarray(params["pep_emb_table"], jnp.float32),
        mhc_tab=jnp.asarray(params["mhc_emb_table"], jnp.float32),
        wbuf=jnp.asarray(wbuf_np).astype(jnp.bfloat16),
        bbuf=jnp.asarray(bbuf_np),
    )
    return meta, arrays


# ----------------------------------------------------------------------------
# The fused kernel: in-kernel embedding gather + fused LSTM chain + head.
# ----------------------------------------------------------------------------
def _make_kernel(meta, B, T):
    E, HP, HM = meta["E"], meta["HP"], meta["HM"]
    Hc = HP + HM
    L1, L2 = meta["L1"], meta["L2"]
    nf, nsp, nsm = meta["num_fused"], meta["n_solo_pep"], meta["n_solo_mhc"]
    w_offs, b_offs = meta["w_offs"], meta["b_offs"]
    wd, bd = meta["wd"], meta["bd"]
    bf16, f32 = jnp.bfloat16, jnp.float32

    def kernel(seq_ref, ptab_ref, mtab_ref, wref, bref, out_ref, xs_ref):
        # ---- static views into the packed parameter buffers ----
        def W(idx):
            r0, r, c = w_offs[idx]
            return wref[r0:r0 + r, 0:c]                       # bf16 [r, c]

        def Bias(idx):
            r0, _, c = b_offs[idx]
            return bref[r0:r0 + 1, 0:c]                       # f32 [1, c]

        def mm(x, w):                                          # bf16 MXU, f32 acc
            return jnp.dot(x.astype(bf16), w.astype(bf16),
                           preferred_element_type=f32)

        # ---- 1) in-kernel embedding gather into the fused [T*B, 2E] layout ----
        # seq layout (flattened row-major from [B, 2, L]): (b, s, t) -> b*2*T + s*T + t
        for t in range(T):
            for b in range(B):
                m_idx = seq_ref[b * 2 * T + t]                 # [:, 0] = MHC
                p_idx = seq_ref[b * 2 * T + T + t]             # [:, 1] = peptide
                r = t * B + b
                xs_ref[r:r + 1, 0:E] = ptab_ref[pl.ds(p_idx, 1), :]
                xs_ref[r:r + 1, E:2 * E] = mtab_ref[pl.ds(m_idx, 1), :]

        # ---- 2) hoisted, time-invariant layer-0 input projection (one tall matmul)
        zx0 = mm(xs_ref[...], W(wd["fused_ih"][0])) + Bias(bd["fused"][0])
        # zx0: [T*B, 4*Hc] f32

        # ---- recurrence weights hoisted out of the unrolled time loop ----
        f_ih = [None] + [W(wd["fused_ih"][l]) for l in range(1, nf)]
        f_hh = [W(wd["fused_hh"][l]) for l in range(nf)]
        f_b = [Bias(bd["fused"][l]) for l in range(nf)]
        p_ih = [W(wd["pep_ih"][l]) for l in range(nsp)]
        p_hh = [W(wd["pep_hh"][l]) for l in range(nsp)]
        p_b = [Bias(bd["pep"][l]) for l in range(nsp)]
        m_ih = [W(wd["mhc_ih"][l]) for l in range(nsm)]
        m_hh = [W(wd["mhc_hh"][l]) for l in range(nsm)]
        m_b = [Bias(bd["mhc"][l]) for l in range(nsm)]

        def cell(z, c):
            # Whole-vreg transcendentals (2 EUP passes), then lane slices.
            Hg = z.shape[1] // 4
            sig = jax.nn.sigmoid(z)
            tnh = jnp.tanh(z)
            i_g = sig[:, 0:Hg]
            f_g = sig[:, Hg:2 * Hg]
            g_g = tnh[:, 2 * Hg:3 * Hg]
            o_g = sig[:, 3 * Hg:4 * Hg]
            c_n = f_g * c + i_g * g_g
            h_n = o_g * jnp.tanh(c_n)
            return h_n, c_n

        hf = [jnp.zeros((B, Hc), f32) for _ in range(nf)]
        cf = [jnp.zeros((B, Hc), f32) for _ in range(nf)]
        hp = [jnp.zeros((B, HP), f32) for _ in range(nsp)]
        cp = [jnp.zeros((B, HP), f32) for _ in range(nsp)]
        hm = [jnp.zeros((B, HM), f32) for _ in range(nsm)]
        cm = [jnp.zeros((B, HM), f32) for _ in range(nsm)]

        # ---- 3) wavefront recurrence: every layer advances one step per t ----
        for t in range(T):
            # fused (pep ⊕ mhc) layers
            x_cat = None
            for l in range(nf):
                if l == 0:
                    z = zx0[t * B:(t + 1) * B, :]
                else:
                    z = mm(x_cat, f_ih[l]) + f_b[l]
                z = z + mm(hf[l], f_hh[l])
                hf[l], cf[l] = cell(z, cf[l])
                x_cat = hf[l]
            # remaining peptide-only layers (fed per-step, no sequence storage)
            x = x_cat[:, 0:HP]
            for l in range(nsp):
                z = mm(x, p_ih[l]) + mm(hp[l], p_hh[l]) + p_b[l]
                hp[l], cp[l] = cell(z, cp[l])
                x = hp[l]
            # remaining MHC-only layers
            x = x_cat[:, HP:Hc]
            for l in range(nsm):
                z = mm(x, m_ih[l]) + mm(hm[l], m_hh[l]) + m_b[l]
                hm[l], cm[l] = cell(z, cm[l])
                x = hm[l]

        # ---- 4) head (no lane concats: split weights, sum matmuls) ----
        if nsp > 0:
            ph, pc = hp[-1], cp[-1]
        else:
            ph, pc = hf[-1][:, 0:HP], cf[-1][:, 0:HP]
        if nsm > 0:
            mh, mc = hm[-1], cm[-1]
        else:
            mh, mc = hf[-1][:, HP:Hc], cf[-1][:, HP:Hc]

        pep = jnp.maximum(mm(ph, W(wd["wp_h"])) + mm(pc, W(wd["wp_c"]))
                          + Bias(bd["bp"]), 0.0)
        mhc = jnp.maximum(mm(mh, W(wd["wm_h"])) + mm(mc, W(wd["wm_c"]))
                          + Bias(bd["bm"]), 0.0)
        hid = mm(pep, W(wd["wh_p"])) + mm(mhc, W(wd["wh_m"])) + Bias(bd["bh"])

        if L2 == 1:
            # Final Linear(L1 -> 1) as a VPU reduction (wo packed as [1, L1]).
            wo_row = W(wd["wo"]).astype(f32)
            logit = jnp.sum(hid * wo_row, axis=-1, keepdims=True) + Bias(bd["bo"])
        else:
            logit = mm(hid, W(wd["wo"])) + Bias(bd["bo"])

        out_ref[...] = jax.nn.sigmoid(logit)

    return kernel


def build_forward(meta):
    @jax.jit
    def forward(sequences_indexes, pep_tab, mhc_tab, wbuf, bbuf):
        B, _, T = sequences_indexes.shape
        kernel = _make_kernel(meta, B, T)
        seq_flat = sequences_indexes.reshape(-1).astype(jnp.int32)
        vmem = pl.BlockSpec(memory_space=pltpu.MemorySpace.VMEM)
        smem = pl.BlockSpec(memory_space=pltpu.MemorySpace.SMEM)
        return pl.pallas_call(
            kernel,
            out_shape=jax.ShapeDtypeStruct((B, meta["L2"]), jnp.float32),
            in_specs=[smem, vmem, vmem, vmem, vmem],
            out_specs=vmem,
            scratch_shapes=[pltpu.VMEM((T * B, 2 * meta["E"]), jnp.float32)],
        )(seq_flat, pep_tab, mhc_tab, wbuf, bbuf)

    return forward


# ----------------------------------------------------------------------------
# Pure-JAX references (f32 "PyTorch semantics" + bf16-matmul-matched variant).
# ----------------------------------------------------------------------------
def _lstm_ref(x, layer_params, cast):
    h = c = None
    for (wih, whh, b) in layer_params:
        Bsz = x.shape[0]
        H = whh.shape[0]

        def step(carry, xt):
            h, c = carry
            z = (jnp.dot(cast(xt), cast(wih), preferred_element_type=jnp.float32)
                 + jnp.dot(cast(h), cast(whh), preferred_element_type=jnp.float32)
                 + b)
            i, f, g, o = jnp.split(z, 4, axis=-1)
            c = jax.nn.sigmoid(f) * c + jax.nn.sigmoid(i) * jnp.tanh(g)
            h = jax.nn.sigmoid(o) * jnp.tanh(c)
            return (h, c), h

        (h, c), ys = jax.lax.scan(
            step,
            (jnp.zeros((Bsz, H), jnp.float32), jnp.zeros((Bsz, H), jnp.float32)),
            jnp.transpose(x, (1, 0, 2)))
        x = jnp.transpose(ys, (1, 0, 2))
    return h, c


def _ref_forward(sequences_indexes, params, bf16_matmul):
    cast = ((lambda a: a.astype(jnp.bfloat16)) if bf16_matmul else (lambda a: a))
    mhc_idx = sequences_indexes[:, 0]
    pep_idx = sequences_indexes[:, 1]
    pep_emb = jnp.take(params["pep_emb_table"], pep_idx, axis=0)
    mhc_emb = jnp.take(params["mhc_emb_table"], mhc_idx, axis=0)
    ph, pc = _lstm_ref(pep_emb, params["pep_lstm"], cast)
    mh, mc = _lstm_ref(mhc_emb, params["mhc_lstm"], cast)
    hd = params["head"]

    def lin(x, w, b):
        return jnp.dot(cast(x), cast(w), preferred_element_type=jnp.float32) + b

    pep = jax.nn.relu(lin(jnp.concatenate([ph, pc], axis=1), hd["wp"], hd["bp"]))
    mhc = jax.nn.relu(lin(jnp.concatenate([mh, mc], axis=1), hd["wm"], hd["bm"]))
    hid = lin(jnp.concatenate([pep, mhc], axis=1), hd["wh"], hd["bh"])
    return jax.nn.sigmoid(lin(hid, hd["wo"], hd["bo"]))


# ----------------------------------------------------------------------------
# Deterministic parameter construction (PyTorch-layout logical params).
# ----------------------------------------------------------------------------
def make_params(key, vocab, embed_dim, hp, hm, n_layers_pep, n_layers_mhc, l1, l2):
    keys = iter(jax.random.split(key, 64))

    def unif(shape, scale):
        return jax.random.uniform(next(keys), shape, jnp.float32, -scale, scale)

    def lstm_layers(n_layers, in_dim, hidden):
        layers = []
        k = 1.0 / np.sqrt(hidden)
        d = in_dim
        for _ in range(n_layers):
            wih = unif((d, 4 * hidden), k)        # = W_ih^T  (gate order i,f,g,o)
            whh = unif((hidden, 4 * hidden), k)   # = W_hh^T
            b = unif((1, 4 * hidden), k)          # = b_ih + b_hh (combined)
            layers.append((wih, whh, b))
            d = hidden
        return layers

    kl1 = 1.0 / np.sqrt(2 * hp)
    kl1m = 1.0 / np.sqrt(2 * hm)
    kh = 1.0 / np.sqrt(2 * l1)
    ko = 1.0 / np.sqrt(l1)
    return {
        "pep_emb_table": jax.random.normal(next(keys), (vocab, embed_dim), jnp.float32),
        "mhc_emb_table": jax.random.normal(next(keys), (vocab, embed_dim), jnp.float32),
        "pep_lstm": lstm_layers(n_layers_pep, embed_dim, hp),
        "mhc_lstm": lstm_layers(n_layers_mhc, embed_dim, hm),
        "head": {
            "wp": unif((2 * hp, l1), kl1), "bp": unif((1, l1), kl1),
            "wm": unif((2 * hm, l1), kl1m), "bm": unif((1, l1), kl1m),
            "wh": unif((2 * l1, l1), kh), "bh": unif((1, l1), kh),
            "wo": unif((l1, l2), ko), "bo": unif((1, l2), ko),
        },
    }


if __name__ == "__main__":
    # Small, forward-consistent shapes.
    B, L = 2, 10
    VOCAB, EMBED_DIM = 24, 32
    HP, HM = 32, 32                 # peptide / mhc LSTM hidden sizes
    N_LAYERS_PEP, N_LAYERS_MHC = 2, 1
    L1, L2 = 32, 1

    root = jax.random.PRNGKey(0)
    k_params, k_idx = jax.random.split(root)
    params = make_params(k_params, VOCAB, EMBED_DIM, HP, HM,
                         N_LAYERS_PEP, N_LAYERS_MHC, L1, L2)
    sequences_indexes = jax.random.randint(k_idx, (B, 2, L), 0, VOCAB,
                                           dtype=jnp.int32)

    meta, arrays = pack_for_kernel(params)
    forward = build_forward(meta)
    out = forward(sequences_indexes, arrays["pep_tab"], arrays["mhc_tab"],
                  arrays["wbuf"], arrays["bbuf"])
    out = jax.block_until_ready(out)
    assert out.shape == (B, L2), out.shape

    # Tight check against a reference that mirrors the kernel's bf16 matmul
    # operands, and a loose check against the full-f32 PyTorch semantics.
    ref_bf16 = jax.block_until_ready(_ref_forward(sequences_indexes, params, True))
    ref_f32 = jax.block_until_ready(_ref_forward(sequences_indexes, params, False))
    np.testing.assert_allclose(np.asarray(out), np.asarray(ref_bf16),
                               atol=2e-3, rtol=2e-3)
    np.testing.assert_allclose(np.asarray(out), np.asarray(ref_f32),
                               atol=5e-2, rtol=5e-2)

    # TODO(synk): nn.Dropout(p=0.5) is declared in __init__ but unused in
    # forward(); intentionally omitted.
    print("KERNEL_OK")
</pallas_src>

<mosaic_0001>
module attributes {stable_mosaic.version = 11 : i64} {
  func.func @kernel(%arg0: memref<40xi32, #tpu.memory_space<smem>>, %arg1: memref<24x32xf32, #tpu.memory_space<vmem>>, %arg2: memref<24x32xf32, #tpu.memory_space<vmem>>, %arg3: memref<400x256xbf16, #tpu.memory_space<vmem>>, %arg4: memref<6x256xf32, #tpu.memory_space<vmem>>, %arg5: memref<2x1xf32, #tpu.memory_space<vmem>>, %arg6: memref<20x64xf32, #tpu.memory_space<vmem>>) attributes {dimension_semantics = [], scalar_prefetch = 0 : i64, scratch_operands = 1 : i64, tpu.core_type = #tpu.core_type<tc>} {
    %c0 = arith.constant 0 : index
    %0 = memref.load %arg0[%c0] : memref<40xi32, #tpu.memory_space<smem>>
    %c10 = arith.constant 10 : index
    %1 = memref.load %arg0[%c10] : memref<40xi32, #tpu.memory_space<smem>>
    %2 = arith.index_cast %1 : i32 to index
    %c0_0 = arith.constant 0 : index
    %3 = vector.load %arg1[%2, %c0_0] : memref<24x32xf32, #tpu.memory_space<vmem>>, vector<1x32xf32>
    %c0_1 = arith.constant 0 : index
    %c0_2 = arith.constant 0 : index
    %4 = vector.load %arg6[%c0_1, %c0_2] : memref<20x64xf32, #tpu.memory_space<vmem>>, vector<1x32xf32>
    tpu.vector_store %arg6[%c0_1, %c0_2], %3 {strides = array<i32>} : memref<20x64xf32, #tpu.memory_space<vmem>>, vector<1x32xf32>,
    %5 = arith.index_cast %0 : i32 to index
    %c0_3 = arith.constant 0 : index
    %6 = vector.load %arg2[%5, %c0_3] : memref<24x32xf32, #tpu.memory_space<vmem>>, vector<1x32xf32>
    %c0_4 = arith.constant 0 : index
    %c32 = arith.constant 32 : index
    %7 = vector.load %arg6[%c0_4, %c32] : memref<20x64xf32, #tpu.memory_space<vmem>>, vector<1x32xf32>
    tpu.vector_store %arg6[%c0_4, %c32], %6 {strides = array<i32>} : memref<20x64xf32, #tpu.memory_space<vmem>>, vector<1x32xf32>,
    %c20 = arith.constant 20 : index
    %8 = memref.load %arg0[%c20] : memref<40xi32, #tpu.memory_space<smem>>
    %c30 = arith.constant 30 : index
    %9 = memref.load %arg0[%c30] : memref<40xi32, #tpu.memory_space<smem>>
    %10 = arith.index_cast %9 : i32 to index
    %c0_5 = arith.constant 0 : index
    %11 = vector.load %arg1[%10, %c0_5] : memref<24x32xf32, #tpu.memory_space<vmem>>, vector<1x32xf32>
    %c1 = arith.constant 1 : index
    %c0_6 = arith.constant 0 : index
    %12 = vector.load %arg6[%c1, %c0_6] : memref<20x64xf32, #tpu.memory_space<vmem>>, vector<1x32xf32>
    tpu.vector_store %arg6[%c1, %c0_6], %11 {strides = array<i32>} : memref<20x64xf32, #tpu.memory_space<vmem>>, vector<1x32xf32>,
    %13 = arith.index_cast %8 : i32 to index
    %c0_7 = arith.constant 0 : index
    %14 = vector.load %arg2[%13, %c0_7] : memref<24x32xf32, #tpu.memory_space<vmem>>, vector<1x32xf32>
    %c1_8 = arith.constant 1 : index
    %c32_9 = arith.constant 32 : index
    %15 = vector.load %arg6[%c1_8, %c32_9] : memref<20x64xf32, #tpu.memory_space<vmem>>, vector<1x32xf32>
    tpu.vector_store %arg6[%c1_8, %c32_9], %14 {strides = array<i32>} : memref<20x64xf32, #tpu.memory_space<vmem>>, vector<1x32xf32>,
    %c1_10 = arith.constant 1 : index
    %16 = memref.load %arg0[%c1_10] : memref<40xi32, #tpu.memory_space<smem>>
    %c11 = arith.constant 11 : index
    %17 = memref.load %arg0[%c11] : memref<40xi32, #tpu.memory_space<smem>>
    %18 = arith.index_cast %17 : i32 to index
    %c0_11 = arith.constant 0 : index
    %19 = vector.load %arg1[%18, %c0_11] : memref<24x32xf32, #tpu.memory_space<vmem>>, vector<1x32xf32>
    %c2 = arith.constant 2 : index
    %c0_12 = arith.constant 0 : index
    %20 = vector.load %arg6[%c2, %c0_12] : memref<20x64xf32, #tpu.memory_space<vmem>>, vector<1x32xf32>
    tpu.vector_store %arg6[%c2, %c0_12], %19 {strides = array<i32>} : memref<20x64xf32, #tpu.memory_space<vmem>>, vector<1x32xf32>,
    %21 = arith.index_cast %16 : i32 to index
    %c0_13 = arith.constant 0 : index
    %22 = vector.load %arg2[%21, %c0_13] : memref<24x32xf32, #tpu.memory_space<vmem>>, vector<1x32xf32>
    %c2_14 = arith.constant 2 : index
    %c32_15 = arith.constant 32 : index
    %23 = vector.load %arg6[%c2_14, %c32_15] : memref<20x64xf32, #tpu.memory_space<vmem>>, vector<1x32xf32>
    tpu.vector_store %arg6[%c2_14, %c32_15], %22 {strides = array<i32>} : memref<20x64xf32, #tpu.memory_space<vmem>>, vector<1x32xf32>,
    %c21 = arith.constant 21 : index
    %24 = memref.load %arg0[%c21] : memref<40xi32, #tpu.memory_space<smem>>
    %c31 = arith.constant 31 : index
    %25 = memref.load %arg0[%c31] : memref<40xi32, #tpu.memory_space<smem>>
    %26 = arith.index_cast %25 : i32 to index
    %c0_16 = arith.constant 0 : index
    %27 = vector.load %arg1[%26, %c0_16] : memref<24x32xf32, #tpu.memory_space<vmem>>, vector<1x32xf32>
    %c3 = arith.constant 3 : index
    %c0_17 = arith.constant 0 : index
    %28 = vector.load %arg6[%c3, %c0_17] : memref<20x64xf32, #tpu.memory_space<vmem>>, vector<1x32xf32>
    tpu.vector_store %arg6[%c3, %c0_17], %27 {strides = array<i32>} : memref<20x64xf32, #tpu.memory_space<vmem>>, vector<1x32xf32>,
    %29 = arith.index_cast %24 : i32 to index
    %c0_18 = arith.constant 0 : index
    %30 = vector.load %arg2[%29, %c0_18] : memref<24x32xf32, #tpu.memory_space<vmem>>, vector<1x32xf32>
    %c3_19 = arith.constant 3 : index
    %c32_20 = arith.constant 32 : index
    %31 = vector.load %arg6[%c3_19, %c32_20] : memref<20x64xf32, #tpu.memory_space<vmem>>, vector<1x32xf32>
    tpu.vector_store %arg6[%c3_19, %c32_20], %30 {strides = array<i32>} : memref<20x64xf32, #tpu.memory_space<vmem>>, vector<1x32xf32>,
    %c2_21 = arith.constant 2 : index
    %32 = memref.load %arg0[%c2_21] : memref<40xi32, #tpu.memory_space<smem>>
    %c12 = arith.constant 12 : index
    %33 = memref.load %arg0[%c12] : memref<40xi32, #tpu.memory_space<smem>>
    %34 = arith.index_cast %33 : i32 to index
    %c0_22 = arith.constant 0 : index
    %35 = vector.load %arg1[%34, %c0_22] : memref<24x32xf32, #tpu.memory_space<vmem>>, vector<1x32xf32>
    %c4 = arith.constant 4 : index
    %c0_23 = arith.constant 0 : index
    %36 = vector.load %arg6[%c4, %c0_23] : memref<20x64xf32, #tpu.memory_space<vmem>>, vector<1x32xf32>
    tpu.vector_store %arg6[%c4, %c0_23], %35 {strides = array<i32>} : memref<20x64xf32, #tpu.memory_space<vmem>>, vector<1x32xf32>,
    %37 = arith.index_cast %32 : i32 to index
    %c0_24 = arith.constant 0 : index
    %38 = vector.load %arg2[%37, %c0_24] : memref<24x32xf32, #tpu.memory_space<vmem>>, vector<1x32xf32>
    %c4_25 = arith.constant 4 : index
    %c32_26 = arith.constant 32 : index
    %39 = vector.load %arg6[%c4_25, %c32_26] : memref<20x64xf32, #tpu.memory_space<vmem>>, vector<1x32xf32>
    tpu.vector_store %arg6[%c4_25, %c32_26], %38 {strides = array<i32>} : memref<20x64xf32, #tpu.memory_space<vmem>>, vector<1x32xf32>,
    %c22 = arith.constant 22 : index
    %40 = memref.load %arg0[%c22] : memref<40xi32, #tpu.memory_space<smem>>
    %c32_27 = arith.constant 32 : index
    %41 = memref.load %arg0[%c32_27] : memref<40xi32, #tpu.memory_space<smem>>
    %42 = arith.index_cast %41 : i32 to index
    %c0_28 = arith.constant 0 : index
    %43 = vector.load %arg1[%42, %c0_28] : memref<24x32xf32, #tpu.memory_space<vmem>>, vector<1x32xf32>
    %c5 = arith.constant 5 : index
    %c0_29 = arith.constant 0 : index
    %44 = vector.load %arg6[%c5, %c0_29] : memref<20x64xf32, #tpu.memory_space<vmem>>, vector<1x32xf32>
    tpu.vector_store %arg6[%c5, %c0_29], %43 {strides = array<i32>} : memref<20x64xf32, #tpu.memory_space<vmem>>, vector<1x32xf32>,
    %45 = arith.index_cast %40 : i32 to index
    %c0_30 = arith.constant 0 : index
    %46 = vector.load %arg2[%45, %c0_30] : memref<24x32xf32, #tpu.memory_space<vmem>>, vector<1x32xf32>
    %c5_31 = arith.constant 5 : index
    %c32_32 = arith.constant 32 : index
    %47 = vector.load %arg6[%c5_31, %c32_32] : memref<20x64xf32, #tpu.memory_space<vmem>>, vector<1x32xf32>
    tpu.vector_store %arg6[%c5_31, %c32_32], %46 {strides = array<i32>} : memref<20x64xf32, #tpu.memory_space<vmem>>, vector<1x32xf32>,
    %c3_33 = arith.constant 3 : index
    %48 = memref.load %arg0[%c3_33] : memref<40xi32, #tpu.memory_space<smem>>
    %c13 = arith.constant 13 : index
    %49 = memref.load %arg0[%c13] : memref<40xi32, #tpu.memory_space<smem>>
    %50 = arith.index_cast %49 : i32 to index
    %c0_34 = arith.constant 0 : index
    %51 = vector.load %arg1[%50, %c0_34] : memref<24x32xf32, #tpu.memory_space<vmem>>, vector<1x32xf32>
    %c6 = arith.constant 6 : index
    %c0_35 = arith.constant 0 : index
    %52 = vector.load %arg6[%c6, %c0_35] : memref<20x64xf32, #tpu.memory_space<vmem>>, vector<1x32xf32>
    tpu.vector_store %arg6[%c6, %c0_35], %51 {strides = array<i32>} : memref<20x64xf32, #tpu.memory_space<vmem>>, vector<1x32xf32>,
    %53 = arith.index_cast %48 : i32 to index
    %c0_36 = arith.constant 0 : index
    %54 = vector.load %arg2[%53, %c0_36] : memref<24x32xf32, #tpu.memory_space<vmem>>, vector<1x32xf32>
    %c6_37 = arith.constant 6 : index
    %c32_38 = arith.constant 32 : index
    %55 = vector.load %arg6[%c6_37, %c32_38] : memref<20x64xf32, #tpu.memory_space<vmem>>, vector<1x32xf32>
    tpu.vector_store %arg6[%c6_37, %c32_38], %54 {strides = array<i32>} : memref<20x64xf32, #tpu.memory_space<vmem>>, vector<1x32xf32>,
    %c23 = arith.constant 23 : index
    %56 = memref.load %arg0[%c23] : memref<40xi32, #tpu.memory_space<smem>>
    %c33 = arith.constant 33 : index
    %57 = memref.load %arg0[%c33] : memref<40xi32, #tpu.memory_space<smem>>
    %58 = arith.index_cast %57 : i32 to index
    %c0_39 = arith.constant 0 : index
    %59 = vector.load %arg1[%58, %c0_39] : memref<24x32xf32, #tpu.memory_space<vmem>>, vector<1x32xf32>
    %c7 = arith.constant 7 : index
    %c0_40 = arith.constant 0 : index
    %60 = vector.load %arg6[%c7, %c0_40] : memref<20x64xf32, #tpu.memory_space<vmem>>, vector<1x32xf32>
    tpu.vector_store %arg6[%c7, %c0_40], %59 {strides = array<i32>} : memref<20x64xf32, #tpu.memory_space<vmem>>, vector<1x32xf32>,
    %61 = arith.index_cast %56 : i32 to index
    %c0_41 = arith.constant 0 : index
    %62 = vector.load %arg2[%61, %c0_41] : memref<24x32xf32, #tpu.memory_space<vmem>>, vector<1x32xf32>
    %c7_42 = arith.constant 7 : index
    %c32_43 = arith.constant 32 : index
    %63 = vector.load %arg6[%c7_42, %c32_43] : memref<20x64xf32, #tpu.memory_space<vmem>>, vector<1x32xf32>
    tpu.vector_store %arg6[%c7_42, %c32_43], %62 {strides = array<i32>} : memref<20x64xf32, #tpu.memory_space<vmem>>, vector<1x32xf32>,
    %c4_44 = arith.constant 4 : index
    %64 = memref.load %arg0[%c4_44] : memref<40xi32, #tpu.memory_space<smem>>
    %c14 = arith.constant 14 : index
    %65 = memref.load %arg0[%c14] : memref<40xi32, #tpu.memory_space<smem>>
    %66 = arith.index_cast %65 : i32 to index
    %c0_45 = arith.constant 0 : index
    %67 = vector.load %arg1[%66, %c0_45] : memref<24x32xf32, #tpu.memory_space<vmem>>, vector<1x32xf32>
    %c8 = arith.constant 8 : index
    %c0_46 = arith.constant 0 : index
    %68 = vector.load %arg6[%c8, %c0_46] : memref<20x64xf32, #tpu.memory_space<vmem>>, vector<1x32xf32>
    tpu.vector_store %arg6[%c8, %c0_46], %67 {strides = array<i32>} : memref<20x64xf32, #tpu.memory_space<vmem>>, vector<1x32xf32>,
    %69 = arith.index_cast %64 : i32 to index
    %c0_47 = arith.constant 0 : index
    %70 = vector.load %arg2[%69, %c0_47] : memref<24x32xf32, #tpu.memory_space<vmem>>, vector<1x32xf32>
    %c8_48 = arith.constant 8 : index
    %c32_49 = arith.constant 32 : index
    %71 = vector.load %arg6[%c8_48, %c32_49] : memref<20x64xf32, #tpu.memory_space<vmem>>, vector<1x32xf32>
    tpu.vector_store %arg6[%c8_48, %c32_49], %70 {strides = array<i32>} : memref<20x64xf32, #tpu.memory_space<vmem>>, vector<1x32xf32>,
    %c24 = arith.constant 24 : index
    %72 = memref.load %arg0[%c24] : memref<40xi32, #tpu.memory_space<smem>>
    %c34 = arith.constant 34 : index
    %73 = memref.load %arg0[%c34] : memref<40xi32, #tpu.memory_space<smem>>
    %74 = arith.index_cast %73 : i32 to index
    %c0_50 = arith.constant 0 : index
    %75 = vector.load %arg1[%74, %c0_50] : memref<24x32xf32, #tpu.memory_space<vmem>>, vector<1x32xf32>
    %c9 = arith.constant 9 : index
    %c0_51 = arith.constant 0 : index
    %76 = vector.load %arg6[%c9, %c0_51] : memref<20x64xf32, #tpu.memory_space<vmem>>, vector<1x32xf32>
    tpu.vector_store %arg6[%c9, %c0_51], %75 {strides = array<i32>} : memref<20x64xf32, #tpu.memory_space<vmem>>, vector<1x32xf32>,
    %77 = arith.index_cast %72 : i32 to index
    %c0_52 = arith.constant 0 : index
    %78 = vector.load %arg2[%77, %c0_52] : memref<24x32xf32, #tpu.memory_space<vmem>>, vector<1x32xf32>
    %c9_53 = arith.constant 9 : index
    %c32_54 = arith.constant 32 : index
    %79 = vector.load %arg6[%c9_53, %c32_54] : memref<20x64xf32, #tpu.memory_space<vmem>>, vector<1x32xf32>
    tpu.vector_store %arg6[%c9_53, %c32_54], %78 {strides = array<i32>} : memref<20x64xf32, #tpu.memory_space<vmem>>, vector<1x32xf32>,
    %c5_55 = arith.constant 5 : index
    %80 = memref.load %arg0[%c5_55] : memref<40xi32, #tpu.memory_space<smem>>
    %c15 = arith.constant 15 : index
    %81 = memref.load %arg0[%c15] : memref<40xi32, #tpu.memory_space<smem>>
    %82 = arith.index_cast %81 : i32 to index
    %c0_56 = arith.constant 0 : index
    %83 = vector.load %arg1[%82, %c0_56] : memref<24x32xf32, #tpu.memory_space<vmem>>, vector<1x32xf32>
    %c10_57 = arith.constant 10 : index
    %c0_58 = arith.constant 0 : index
    %84 = vector.load %arg6[%c10_57, %c0_58] : memref<20x64xf32, #tpu.memory_space<vmem>>, vector<1x32xf32>
    tpu.vector_store %arg6[%c10_57, %c0_58], %83 {strides = array<i32>} : memref<20x64xf32, #tpu.memory_space<vmem>>, vector<1x32xf32>,
    %85 = arith.index_cast %80 : i32 to index
    %c0_59 = arith.constant 0 : index
    %86 = vector.load %arg2[%85, %c0_59] : memref<24x32xf32, #tpu.memory_space<vmem>>, vector<1x32xf32>
    %c10_60 = arith.constant 10 : index
    %c32_61 = arith.constant 32 : index
    %87 = vector.load %arg6[%c10_60, %c32_61] : memref<20x64xf32, #tpu.memory_space<vmem>>, vector<1x32xf32>
    tpu.vector_store %arg6[%c10_60, %c32_61], %86 {strides = array<i32>} : memref<20x64xf32, #tpu.memory_space<vmem>>, vector<1x32xf32>,
    %c25 = arith.constant 25 : index
    %88 = memref.load %arg0[%c25] : memref<40xi32, #tpu.memory_space<smem>>
    %c35 = arith.constant 35 : index
    %89 = memref.load %arg0[%c35] : memref<40xi32, #tpu.memory_space<smem>>
    %90 = arith.index_cast %89 : i32 to index
    %c0_62 = arith.constant 0 : index
    %91 = vector.load %arg1[%90, %c0_62] : memref<24x32xf32, #tpu.memory_space<vmem>>, vector<1x32xf32>
    %c11_63 = arith.constant 11 : index
    %c0_64 = arith.constant 0 : index
    %92 = vector.load %arg6[%c11_63, %c0_64] : memref<20x64xf32, #tpu.memory_space<vmem>>, vector<1x32xf32>
    tpu.vector_store %arg6[%c11_63, %c0_64], %91 {strides = array<i32>} : memref<20x64xf32, #tpu.memory_space<vmem>>, vector<1x32xf32>,
    %93 = arith.index_cast %88 : i32 to index
    %c0_65 = arith.constant 0 : index
    %94 = vector.load %arg2[%93, %c0_65] : memref<24x32xf32, #tpu.memory_space<vmem>>, vector<1x32xf32>
    %c11_66 = arith.constant 11 : index
    %c32_67 = arith.constant 32 : index
    %95 = vector.load %arg6[%c11_66, %c32_67] : memref<20x64xf32, #tpu.memory_space<vmem>>, vector<1x32xf32>
    tpu.vector_store %arg6[%c11_66, %c32_67], %94 {strides = array<i32>} : memref<20x64xf32, #tpu.memory_space<vmem>>, vector<1x32xf32>,
    %c6_68 = arith.constant 6 : index
    %96 = memref.load %arg0[%c6_68] : memref<40xi32, #tpu.memory_space<smem>>
    %c16 = arith.constant 16 : index
    %97 = memref.load %arg0[%c16] : memref<40xi32, #tpu.memory_space<smem>>
    %98 = arith.index_cast %97 : i32 to index
    %c0_69 = arith.constant 0 : index
    %99 = vector.load %arg1[%98, %c0_69] : memref<24x32xf32, #tpu.memory_space<vmem>>, vector<1x32xf32>
    %c12_70 = arith.constant 12 : index
    %c0_71 = arith.constant 0 : index
    %100 = vector.load %arg6[%c12_70, %c0_71] : memref<20x64xf32, #tpu.memory_space<vmem>>, vector<1x32xf32>
    tpu.vector_store %arg6[%c12_70, %c0_71], %99 {strides = array<i32>} : memref<20x64xf32, #tpu.memory_space<vmem>>, vector<1x32xf32>,
    %101 = arith.index_cast %96 : i32 to index
    %c0_72 = arith.constant 0 : index
    %102 = vector.load %arg2[%101, %c0_72] : memref<24x32xf32, #tpu.memory_space<vmem>>, vector<1x32xf32>
    %c12_73 = arith.constant 12 : index
    %c32_74 = arith.constant 32 : index
    %103 = vector.load %arg6[%c12_73, %c32_74] : memref<20x64xf32, #tpu.memory_space<vmem>>, vector<1x32xf32>
    tpu.vector_store %arg6[%c12_73, %c32_74], %102 {strides = array<i32>} : memref<20x64xf32, #tpu.memory_space<vmem>>, vector<1x32xf32>,
    %c26 = arith.constant 26 : index
    %104 = memref.load %arg0[%c26] : memref<40xi32, #tpu.memory_space<smem>>
    %c36 = arith.constant 36 : index
    %105 = memref.load %arg0[%c36] : memref<40xi32, #tpu.memory_space<smem>>
    %106 = arith.index_cast %105 : i32 to index
    %c0_75 = arith.constant 0 : index
    %107 = vector.load %arg1[%106, %c0_75] : memref<24x32xf32, #tpu.memory_space<vmem>>, vector<1x32xf32>
    %c13_76 = arith.constant 13 : index
    %c0_77 = arith.constant 0 : index
    %108 = vector.load %arg6[%c13_76, %c0_77] : memref<20x64xf32, #tpu.memory_space<vmem>>, vector<1x32xf32>
    tpu.vector_store %arg6[%c13_76, %c0_77], %107 {strides = array<i32>} : memref<20x64xf32, #tpu.memory_space<vmem>>, vector<1x32xf32>,
    %109 = arith.index_cast %104 : i32 to index
    %c0_78 = arith.constant 0 : index
    %110 = vector.load %arg2[%109, %c0_78] : memref<24x32xf32, #tpu.memory_space<vmem>>, vector<1x32xf32>
    %c13_79 = arith.constant 13 : index
    %c32_80 = arith.constant 32 : index
    %111 = vector.load %arg6[%c13_79, %c32_80] : memref<20x64xf32, #tpu.memory_space<vmem>>, vector<1x32xf32>
    tpu.vector_store %arg6[%c13_79, %c32_80], %110 {strides = array<i32>} : memref<20x64xf32, #tpu.memory_space<vmem>>, vector<1x32xf32>,
    %c7_81 = arith.constant 7 : index
    %112 = memref.load %arg0[%c7_81] : memref<40xi32, #tpu.memory_space<smem>>
    %c17 = arith.constant 17 : index
    %113 = memref.load %arg0[%c17] : memref<40xi32, #tpu.memory_space<smem>>
    %114 = arith.index_cast %113 : i32 to index
    %c0_82 = arith.constant 0 : index
    %115 = vector.load %arg1[%114, %c0_82] : memref<24x32xf32, #tpu.memory_space<vmem>>, vector<1x32xf32>
    %c14_83 = arith.constant 14 : index
    %c0_84 = arith.constant 0 : index
    %116 = vector.load %arg6[%c14_83, %c0_84] : memref<20x64xf32, #tpu.memory_space<vmem>>, vector<1x32xf32>
    tpu.vector_store %arg6[%c14_83, %c0_84], %115 {strides = array<i32>} : memref<20x64xf32, #tpu.memory_space<vmem>>, vector<1x32xf32>,
    %117 = arith.index_cast %112 : i32 to index
    %c0_85 = arith.constant 0 : index
    %118 = vector.load %arg2[%117, %c0_85] : memref<24x32xf32, #tpu.memory_space<vmem>>, vector<1x32xf32>
    %c14_86 = arith.constant 14 : index
    %c32_87 = arith.constant 32 : index
    %119 = vector.load %arg6[%c14_86, %c32_87] : memref<20x64xf32, #tpu.memory_space<vmem>>, vector<1x32xf32>
    tpu.vector_store %arg6[%c14_86, %c32_87], %118 {strides = array<i32>} : memref<20x64xf32, #tpu.memory_space<vmem>>, vector<1x32xf32>,
    %c27 = arith.constant 27 : index
    %120 = memref.load %arg0[%c27] : memref<40xi32, #tpu.memory_space<smem>>
    %c37 = arith.constant 37 : index
    %121 = memref.load %arg0[%c37] : memref<40xi32, #tpu.memory_space<smem>>
    %122 = arith.index_cast %121 : i32 to index
    %c0_88 = arith.constant 0 : index
    %123 = vector.load %arg1[%122, %c0_88] : memref<24x32xf32, #tpu.memory_space<vmem>>, vector<1x32xf32>
    %c15_89 = arith.constant 15 : index
    %c0_90 = arith.constant 0 : index
    %124 = vector.load %arg6[%c15_89, %c0_90] : memref<20x64xf32, #tpu.memory_space<vmem>>, vector<1x32xf32>
    tpu.vector_store %arg6[%c15_89, %c0_90], %123 {strides = array<i32>} : memref<20x64xf32, #tpu.memory_space<vmem>>, vector<1x32xf32>,
    %125 = arith.index_cast %120 : i32 to index
    %c0_91 = arith.constant 0 : index
    %126 = vector.load %arg2[%125, %c0_91] : memref<24x32xf32, #tpu.memory_space<vmem>>, vector<1x32xf32>
    %c15_92 = arith.constant 15 : index
    %c32_93 = arith.constant 32 : index
    %127 = vector.load %arg6[%c15_92, %c32_93] : memref<20x64xf32, #tpu.memory_space<vmem>>, vector<1x32xf32>
    tpu.vector_store %arg6[%c15_92, %c32_93], %126 {strides = array<i32>} : memref<20x64xf32, #tpu.memory_space<vmem>>, vector<1x32xf32>,
    %c8_94 = arith.constant 8 : index
    %128 = memref.load %arg0[%c8_94] : memref<40xi32, #tpu.memory_space<smem>>
    %c18 = arith.constant 18 : index
    %129 = memref.load %arg0[%c18] : memref<40xi32, #tpu.memory_space<smem>>
    %130 = arith.index_cast %129 : i32 to index
    %c0_95 = arith.constant 0 : index
    %131 = vector.load %arg1[%130, %c0_95] : memref<24x32xf32, #tpu.memory_space<vmem>>, vector<1x32xf32>
    %c16_96 = arith.constant 16 : index
    %c0_97 = arith.constant 0 : index
    %132 = vector.load %arg6[%c16_96, %c0_97] : memref<20x64xf32, #tpu.memory_space<vmem>>, vector<1x32xf32>
    tpu.vector_store %arg6[%c16_96, %c0_97], %131 {strides = array<i32>} : memref<20x64xf32, #tpu.memory_space<vmem>>, vector<1x32xf32>,
    %133 = arith.index_cast %128 : i32 to index
    %c0_98 = arith.constant 0 : index
    %134 = vector.load %arg2[%133, %c0_98] : memref<24x32xf32, #tpu.memory_space<vmem>>, vector<1x32xf32>
    %c16_99 = arith.constant 16 : index
    %c32_100 = arith.constant 32 : index
    %135 = vector.load %arg6[%c16_99, %c32_100] : memref<20x64xf32, #tpu.memory_space<vmem>>, vector<1x32xf32>
    tpu.vector_store %arg6[%c16_99, %c32_100], %134 {strides = array<i32>} : memref<20x64xf32, #tpu.memory_space<vmem>>, vector<1x32xf32>,
    %c28 = arith.constant 28 : index
    %136 = memref.load %arg0[%c28] : memref<40xi32, #tpu.memory_space<smem>>
    %c38 = arith.constant 38 : index
    %137 = memref.load %arg0[%c38] : memref<40xi32, #tpu.memory_space<smem>>
    %138 = arith.index_cast %137 : i32 to index
    %c0_101 = arith.constant 0 : index
    %139 = vector.load %arg1[%138, %c0_101] : memref<24x32xf32, #tpu.memory_space<vmem>>, vector<1x32xf32>
    %c17_102 = arith.constant 17 : index
    %c0_103 = arith.constant 0 : index
    %140 = vector.load %arg6[%c17_102, %c0_103] : memref<20x64xf32, #tpu.memory_space<vmem>>, vector<1x32xf32>
    tpu.vector_store %arg6[%c17_102, %c0_103], %139 {strides = array<i32>} : memref<20x64xf32, #tpu.memory_space<vmem>>, vector<1x32xf32>,
    %141 = arith.index_cast %136 : i32 to index
    %c0_104 = arith.constant 0 : index
    %142 = vector.load %arg2[%141, %c0_104] : memref<24x32xf32, #tpu.memory_space<vmem>>, vector<1x32xf32>
    %c17_105 = arith.constant 17 : index
    %c32_106 = arith.constant 32 : index
    %143 = vector.load %arg6[%c17_105, %c32_106] : memref<20x64xf32, #tpu.memory_space<vmem>>, vector<1x32xf32>
    tpu.vector_store %arg6[%c17_105, %c32_106], %142 {strides = array<i32>} : memref<20x64xf32, #tpu.memory_space<vmem>>, vector<1x32xf32>,
    %c9_107 = arith.constant 9 : index
    %144 = memref.load %arg0[%c9_107] : memref<40xi32, #tpu.memory_space<smem>>
    %c19 = arith.constant 19 : index
    %145 = memref.load %arg0[%c19] : memref<40xi32, #tpu.memory_space<smem>>
    %146 = arith.index_cast %145 : i32 to index
    %c0_108 = arith.constant 0 : index
    %147 = vector.load %arg1[%146, %c0_108] : memref<24x32xf32, #tpu.memory_space<vmem>>, vector<1x32xf32>
    %c18_109 = arith.constant 18 : index
    %c0_110 = arith.constant 0 : index
    %148 = vector.load %arg6[%c18_109, %c0_110] : memref<20x64xf32, #tpu.memory_space<vmem>>, vector<1x32xf32>
    tpu.vector_store %arg6[%c18_109, %c0_110], %147 {strides = array<i32>} : memref<20x64xf32, #tpu.memory_space<vmem>>, vector<1x32xf32>,
    %149 = arith.index_cast %144 : i32 to index
    %c0_111 = arith.constant 0 : index
    %150 = vector.load %arg2[%149, %c0_111] : memref<24x32xf32, #tpu.memory_space<vmem>>, vector<1x32xf32>
    %c18_112 = arith.constant 18 : index
    %c32_113 = arith.constant 32 : index
    %151 = vector.load %arg6[%c18_112, %c32_113] : memref<20x64xf32, #tpu.memory_space<vmem>>, vector<1x32xf32>
    tpu.vector_store %arg6[%c18_112, %c32_113], %150 {strides = array<i32>} : memref<20x64xf32, #tpu.memory_space<vmem>>, vector<1x32xf32>,
    %c29 = arith.constant 29 : index
    %152 = memref.load %arg0[%c29] : memref<40xi32, #tpu.memory_space<smem>>
    %c39 = arith.constant 39 : index
    %153 = memref.load %arg0[%c39] : memref<40xi32, #tpu.memory_space<smem>>
    %154 = arith.index_cast %153 : i32 to index
    %c0_114 = arith.constant 0 : index
    %155 = vector.load %arg1[%154, %c0_114] : memref<24x32xf32, #tpu.memory_space<vmem>>, vector<1x32xf32>
    %c19_115 = arith.constant 19 : index
    %c0_116 = arith.constant 0 : index
    %156 = vector.load %arg6[%c19_115, %c0_116] : memref<20x64xf32, #tpu.memory_space<vmem>>, vector<1x32xf32>
    tpu.vector_store %arg6[%c19_115, %c0_116], %155 {strides = array<i32>} : memref<20x64xf32, #tpu.memory_space<vmem>>, vector<1x32xf32>,
    %157 = arith.index_cast %152 : i32 to index
    %c0_117 = arith.constant 0 : index
    %158 = vector.load %arg2[%157, %c0_117] : memref<24x32xf32, #tpu.memory_space<vmem>>, vector<1x32xf32>
    %c19_118 = arith.constant 19 : index
    %c32_119 = arith.constant 32 : index
    %159 = vector.load %arg6[%c19_118, %c32_119] : memref<20x64xf32, #tpu.memory_space<vmem>>, vector<1x32xf32>
    tpu.vector_store %arg6[%c19_118, %c32_119], %158 {strides = array<i32>} : memref<20x64xf32, #tpu.memory_space<vmem>>, vector<1x32xf32>,
    %c0_120 = arith.constant 0 : index
    %c0_121 = arith.constant 0 : index
    %160 = vector.load %arg6[%c0_120, %c0_121] : memref<20x64xf32, #tpu.memory_space<vmem>>, vector<20x64xf32>
    %c0_122 = arith.constant 0 : index
    %c0_123 = arith.constant 0 : index
    %161 = vector.load %arg3[%c0_122, %c0_123] : memref<400x256xbf16, #tpu.memory_space<vmem>>, vector<64x256xbf16>
    %162 = arith.truncf %160 : vector<20x64xf32> to vector<20x64xbf16>
    %cst = arith.constant dense<0.000000e+00> : vector<20x256xf32>
    %163 = tpu.matmul %162, %161, %cst {dimension_numbers = #tpu.dot_dimension_numbers<[1], [0], [0], [1], [0, 0, 1, 1], [], []>} : vector<20x64xbf16>, vector<64x256xbf16>, vector<20x256xf32> -> vector<20x256xf32>
    %c0_124 = arith.constant 0 : index
    %c0_125 = arith.constant 0 : index
    %164 = vector.load %arg4[%c0_124, %c0_125] : memref<6x256xf32, #tpu.memory_space<vmem>>, vector<1x256xf32>
    %165 = vector.broadcast %164 : vector<1x256xf32> to vector<20x256xf32>
    %166 = arith.addf %163, %165 : vector<20x256xf32>
    %c64 = arith.constant 64 : index
    %c0_126 = arith.constant 0 : index
    %167 = vector.load %arg3[%c64, %c0_126] : memref<400x256xbf16, #tpu.memory_space<vmem>>, vector<64x256xbf16>
    %c128 = arith.constant 128 : index
    %c0_127 = arith.constant 0 : index
    %168 = vector.load %arg3[%c128, %c0_127] : memref<400x256xbf16, #tpu.memory_space<vmem>>, vector<32x128xbf16>
    %c160 = arith.constant 160 : index
    %c0_128 = arith.constant 0 : index
    %169 = vector.load %arg3[%c160, %c0_128] : memref<400x256xbf16, #tpu.memory_space<vmem>>, vector<32x128xbf16>
    %c1_129 = arith.constant 1 : index
    %c0_130 = arith.constant 0 : index
    %170 = vector.load %arg4[%c1_129, %c0_130] : memref<6x256xf32, #tpu.memory_space<vmem>>, vector<1x128xf32>
    %cst_131 = arith.constant 0.000000e+00 : f32
    %171 = vector.broadcast %cst_131 : f32 to vector<2x64xf32>
    %cst_132 = arith.constant 0.000000e+00 : f32
    %172 = vector.broadcast %cst_132 : f32 to vector<2x64xf32>
    %cst_133 = arith.constant 0.000000e+00 : f32
    %173 = vector.broadcast %cst_133 : f32 to vector<2x32xf32>
    %cst_134 = arith.constant 0.000000e+00 : f32
    %174 = vector.broadcast %cst_134 : f32 to vector<2x32xf32>
    %175 = vector.extract_strided_slice %166 {offsets = [0, 0], sizes = [2, 256], strides = [1, 1]} : vector<20x256xf32> to vector<2x256xf32>
    %176 = arith.truncf %171 : vector<2x64xf32> to vector<2x64xbf16>
    %cst_135 = arith.constant dense<0.000000e+00> : vector<2x256xf32>
    %177 = tpu.matmul %176, %167, %cst_135 {dimension_numbers = #tpu.dot_dimension_numbers<[1], [0], [0], [1], [0, 0, 1, 1], [], []>} : vector<2x64xbf16>, vector<64x256xbf16>, vector<2x256xf32> -> vector<2x256xf32>
    %178 = arith.addf %175, %177 : vector<2x256xf32>
    %179 = arith.negf %178 : vector<2x256xf32>
    %180 = math.exp %179 : vector<2x256xf32>
    %cst_136 = arith.constant 1.000000e+00 : f32
    %181 = vector.broadcast %cst_136 : f32 to vector<2x256xf32>
    %182 = arith.addf %181, %180 : vector<2x256xf32>
    %183 = arith.divf %181, %182 : vector<2x256xf32>
    %184 = math.tanh %178 : vector<2x256xf32>
    %185 = vector.extract_strided_slice %183 {offsets = [0, 0], sizes = [2, 64], strides = [1, 1]} : vector<2x256xf32> to vector<2x64xf32>
    %186 = vector.extract_strided_slice %183 {offsets = [0, 64], sizes = [2, 64], strides = [1, 1]} : vector<2x256xf32> to vector<2x64xf32>
    %187 = vector.extract_strided_slice %184 {offsets = [0, 128], sizes = [2, 64], strides = [1, 1]} : vector<2x256xf32> to vector<2x64xf32>
    %188 = vector.extract_strided_slice %183 {offsets = [0, 192], sizes = [2, 64], strides = [1, 1]} : vector<2x256xf32> to vector<2x64xf32>
    %189 = arith.mulf %186, %172 : vector<2x64xf32>
    %190 = arith.mulf %185, %187 : vector<2x64xf32>
    %191 = arith.addf %189, %190 : vector<2x64xf32>
    %192 = math.tanh %191 : vector<2x64xf32>
    %193 = arith.mulf %188, %192 : vector<2x64xf32>
    %194 = vector.extract_strided_slice %193 {offsets = [0, 0], sizes = [2, 32], strides = [1, 1]} : vector<2x64xf32> to vector<2x32xf32>
    %195 = arith.truncf %194 : vector<2x32xf32> to vector<2x32xbf16>
    %cst_137 = arith.constant dense<0.000000e+00> : vector<2x128xf32>
    %196 = tpu.matmul %195, %168, %cst_137 {dimension_numbers = #tpu.dot_dimension_numbers<[1], [0], [0], [1], [0, 0, 1, 1], [], []>} : vector<2x32xbf16>, vector<32x128xbf16>, vector<2x128xf32> -> vector<2x128xf32>
    %197 = arith.truncf %173 : vector<2x32xf32> to vector<2x32xbf16>
    %cst_138 = arith.constant dense<0.000000e+00> : vector<2x128xf32>
    %198 = tpu.matmul %197, %169, %cst_138 {dimension_numbers = #tpu.dot_dimension_numbers<[1], [0], [0], [1], [0, 0, 1, 1], [], []>} : vector<2x32xbf16>, vector<32x128xbf16>, vector<2x128xf32> -> vector<2x128xf32>
    %199 = arith.addf %196, %198 : vector<2x128xf32>
    %200 = vector.broadcast %170 : vector<1x128xf32> to vector<2x128xf32>
    %201 = arith.addf %199, %200 : vector<2x128xf32>
    %202 = arith.negf %201 : vector<2x128xf32>
    %203 = math.exp %202 : vector<2x128xf32>
    %cst_139 = arith.constant 1.000000e+00 : f32
    %204 = vector.broadcast %cst_139 : f32 to vector<2x128xf32>
    %205 = arith.addf %204, %203 : vector<2x128xf32>
    %206 = arith.divf %204, %205 : vector<2x128xf32>
    %207 = math.tanh %201 : vector<2x128xf32>
    %208 = vector.extract_strided_slice %206 {offsets = [0, 0], sizes = [2, 32], strides = [1, 1]} : vector<2x128xf32> to vector<2x32xf32>
    %209 = vector.extract_strided_slice %206 {offsets = [0, 32], sizes = [2, 32], strides = [1, 1]} : vector<2x128xf32> to vector<2x32xf32>
    %210 = vector.extract_strided_slice %207 {offsets = [0, 64], sizes = [2, 32], strides = [1, 1]} : vector<2x128xf32> to vector<2x32xf32>
    %211 = vector.extract_strided_slice %206 {offsets = [0, 96], sizes = [2, 32], strides = [1, 1]} : vector<2x128xf32> to vector<2x32xf32>
    %212 = arith.mulf %209, %174 : vector<2x32xf32>
    %213 = arith.mulf %208, %210 : vector<2x32xf32>
    %214 = arith.addf %212, %213 : vector<2x32xf32>
    %215 = math.tanh %214 : vector<2x32xf32>
    %216 = arith.mulf %211, %215 : vector<2x32xf32>
    %217 = vector.extract_strided_slice %166 {offsets = [2, 0], sizes = [2, 256], strides = [1, 1]} : vector<20x256xf32> to vector<2x256xf32>
    %218 = arith.truncf %193 : vector<2x64xf32> to vector<2x64xbf16>
    %cst_140 = arith.constant dense<0.000000e+00> : vector<2x256xf32>
    %219 = tpu.matmul %218, %167, %cst_140 {dimension_numbers = #tpu.dot_dimension_numbers<[1], [0], [0], [1], [0, 0, 1, 1], [], []>} : vector<2x64xbf16>, vector<64x256xbf16>, vector<2x256xf32> -> vector<2x256xf32>
    %220 = arith.addf %217, %219 : vector<2x256xf32>
    %221 = arith.negf %220 : vector<2x256xf32>
    %222 = math.exp %221 : vector<2x256xf32>
    %cst_141 = arith.constant 1.000000e+00 : f32
    %223 = vector.broadcast %cst_141 : f32 to vector<2x256xf32>
    %224 = arith.addf %223, %222 : vector<2x256xf32>
    %225 = arith.divf %223, %224 : vector<2x256xf32>
    %226 = math.tanh %220 : vector<2x256xf32>
    %227 = vector.extract_strided_slice %225 {offsets = [0, 0], sizes = [2, 64], strides = [1, 1]} : vector<2x256xf32> to vector<2x64xf32>
    %228 = vector.extract_strided_slice %225 {offsets = [0, 64], sizes = [2, 64], strides = [1, 1]} : vector<2x256xf32> to vector<2x64xf32>
    %229 = vector.extract_strided_slice %226 {offsets = [0, 128], sizes = [2, 64], strides = [1, 1]} : vector<2x256xf32> to vector<2x64xf32>
    %230 = vector.extract_strided_slice %225 {offsets = [0, 192], sizes = [2, 64], strides = [1, 1]} : vector<2x256xf32> to vector<2x64xf32>
    %231 = arith.mulf %228, %191 : vector<2x64xf32>
    %232 = arith.mulf %227, %229 : vector<2x64xf32>
    %233 = arith.addf %231, %232 : vector<2x64xf32>
    %234 = math.tanh %233 : vector<2x64xf32>
    %235 = arith.mulf %230, %234 : vector<2x64xf32>
    %236 = vector.extract_strided_slice %235 {offsets = [0, 0], sizes = [2, 32], strides = [1, 1]} : vector<2x64xf32> to vector<2x32xf32>
    %237 = arith.truncf %236 : vector<2x32xf32> to vector<2x32xbf16>
    %cst_142 = arith.constant dense<0.000000e+00> : vector<2x128xf32>
    %238 = tpu.matmul %237, %168, %cst_142 {dimension_numbers = #tpu.dot_dimension_numbers<[1], [0], [0], [1], [0, 0, 1, 1], [], []>} : vector<2x32xbf16>, vector<32x128xbf16>, vector<2x128xf32> -> vector<2x128xf32>
    %239 = arith.truncf %216 : vector<2x32xf32> to vector<2x32xbf16>
    %cst_143 = arith.constant dense<0.000000e+00> : vector<2x128xf32>
    %240 = tpu.matmul %239, %169, %cst_143 {dimension_numbers = #tpu.dot_dimension_numbers<[1], [0], [0], [1], [0, 0, 1, 1], [], []>} : vector<2x32xbf16>, vector<32x128xbf16>, vector<2x128xf32> -> vector<2x128xf32>
    %241 = arith.addf %238, %240 : vector<2x128xf32>
    %242 = vector.broadcast %170 : vector<1x128xf32> to vector<2x128xf32>
    %243 = arith.addf %241, %242 : vector<2x128xf32>
    %244 = arith.negf %243 : vector<2x128xf32>
    %245 = math.exp %244 : vector<2x128xf32>
    %cst_144 = arith.constant 1.000000e+00 : f32
    %246 = vector.broadcast %cst_144 : f32 to vector<2x128xf32>
    %247 = arith.addf %246, %245 : vector<2x128xf32>
    %248 = arith.divf %246, %247 : vector<2x128xf32>
    %249 = math.tanh %243 : vector<2x128xf32>
    %250 = vector.extract_strided_slice %248 {offsets = [0, 0], sizes = [2, 32], strides = [1, 1]} : vector<2x128xf32> to vector<2x32xf32>
    %251 = vector.extract_strided_slice %248 {offsets = [0, 32], sizes = [2, 32], strides = [1, 1]} : vector<2x128xf32> to vector<2x32xf32>
    %252 = vector.extract_strided_slice %249 {offsets = [0, 64], sizes = [2, 32], strides = [1, 1]} : vector<2x128xf32> to vector<2x32xf32>
    %253 = vector.extract_strided_slice %248 {offsets = [0, 96], sizes = [2, 32], strides = [1, 1]} : vector<2x128xf32> to vector<2x32xf32>
    %254 = arith.mulf %251, %214 : vector<2x32xf32>
    %255 = arith.mulf %250, %252 : vector<2x32xf32>
    %256 = arith.addf %254, %255 : vector<2x32xf32>
    %257 = math.tanh %256 : vector<2x32xf32>
    %258 = arith.mulf %253, %257 : vector<2x32xf32>
    %259 = vector.extract_strided_slice %166 {offsets = [4, 0], sizes = [2, 256], strides = [1, 1]} : vector<20x256xf32> to vector<2x256xf32>
    %260 = arith.truncf %235 : vector<2x64xf32> to vector<2x64xbf16>
    %cst_145 = arith.constant dense<0.000000e+00> : vector<2x256xf32>
    %261 = tpu.matmul %260, %167, %cst_145 {dimension_numbers = #tpu.dot_dimension_numbers<[1], [0], [0], [1], [0, 0, 1, 1], [], []>} : vector<2x64xbf16>, vector<64x256xbf16>, vector<2x256xf32> -> vector<2x256xf32>
    %262 = arith.addf %259, %261 : vector<2x256xf32>
    %263 = arith.negf %262 : vector<2x256xf32>
    %264 = math.exp %263 : vector<2x256xf32>
    %cst_146 = arith.constant 1.000000e+00 : f32
    %265 = vector.broadcast %cst_146 : f32 to vector<2x256xf32>
    %266 = arith.addf %265, %264 : vector<2x256xf32>
    %267 = arith.divf %265, %266 : vector<2x256xf32>
    %268 = math.tanh %262 : vector<2x256xf32>
    %269 = vector.extract_strided_slice %267 {offsets = [0, 0], sizes = [2, 64], strides = [1, 1]} : vector<2x256xf32> to vector<2x64xf32>
    %270 = vector.extract_strided_slice %267 {offsets = [0, 64], sizes = [2, 64], strides = [1, 1]} : vector<2x256xf32> to vector<2x64xf32>
    %271 = vector.extract_strided_slice %268 {offsets = [0, 128], sizes = [2, 64], strides = [1, 1]} : vector<2x256xf32> to vector<2x64xf32>
    %272 = vector.extract_strided_slice %267 {offsets = [0, 192], sizes = [2, 64], strides = [1, 1]} : vector<2x256xf32> to vector<2x64xf32>
    %273 = arith.mulf %270, %233 : vector<2x64xf32>
    %274 = arith.mulf %269, %271 : vector<2x64xf32>
    %275 = arith.addf %273, %274 : vector<2x64xf32>
    %276 = math.tanh %275 : vector<2x64xf32>
    %277 = arith.mulf %272, %276 : vector<2x64xf32>
    %278 = vector.extract_strided_slice %277 {offsets = [0, 0], sizes = [2, 32], strides = [1, 1]} : vector<2x64xf32> to vector<2x32xf32>
    %279 = arith.truncf %278 : vector<2x32xf32> to vector<2x32xbf16>
    %cst_147 = arith.constant dense<0.000000e+00> : vector<2x128xf32>
    %280 = tpu.matmul %279, %168, %cst_147 {dimension_numbers = #tpu.dot_dimension_numbers<[1], [0], [0], [1], [0, 0, 1, 1], [], []>} : vector<2x32xbf16>, vector<32x128xbf16>, vector<2x128xf32> -> vector<2x128xf32>
    %281 = arith.truncf %258 : vector<2x32xf32> to vector<2x32xbf16>
    %cst_148 = arith.constant dense<0.000000e+00> : vector<2x128xf32>
    %282 = tpu.matmul %281, %169, %cst_148 {dimension_numbers = #tpu.dot_dimension_numbers<[1], [0], [0], [1], [0, 0, 1, 1], [], []>} : vector<2x32xbf16>, vector<32x128xbf16>, vector<2x128xf32> -> vector<2x128xf32>
    %283 = arith.addf %280, %282 : vector<2x128xf32>
    %284 = vector.broadcast %170 : vector<1x128xf32> to vector<2x128xf32>
    %285 = arith.addf %283, %284 : vector<2x128xf32>
    %286 = arith.negf %285 : vector<2x128xf32>
    %287 = math.exp %286 : vector<2x128xf32>
    %cst_149 = arith.constant 1.000000e+00 : f32
    %288 = vector.broadcast %cst_149 : f32 to vector<2x128xf32>
    %289 = arith.addf %288, %287 : vector<2x128xf32>
    %290 = arith.divf %288, %289 : vector<2x128xf32>
    %291 = math.tanh %285 : vector<2x128xf32>
    %292 = vector.extract_strided_slice %290 {offsets = [0, 0], sizes = [2, 32], strides = [1, 1]} : vector<2x128xf32> to vector<2x32xf32>
    %293 = vector.extract_strided_slice %290 {offsets = [0, 32], sizes = [2, 32], strides = [1, 1]} : vector<2x128xf32> to vector<2x32xf32>
    %294 = vector.extract_strided_slice %291 {offsets = [0, 64], sizes = [2, 32], strides = [1, 1]} : vector<2x128xf32> to vector<2x32xf32>
    %295 = vector.extract_strided_slice %290 {offsets = [0, 96], sizes = [2, 32], strides = [1, 1]} : vector<2x128xf32> to vector<2x32xf32>
    %296 = arith.mulf %293, %256 : vector<2x32xf32>
    %297 = arith.mulf %292, %294 : vector<2x32xf32>
    %298 = arith.addf %296, %297 : vector<2x32xf32>
    %299 = math.tanh %298 : vector<2x32xf32>
    %300 = arith.mulf %295, %299 : vector<2x32xf32>
    %301 = vector.extract_strided_slice %166 {offsets = [6, 0], sizes = [2, 256], strides = [1, 1]} : vector<20x256xf32> to vector<2x256xf32>
    %302 = arith.truncf %277 : vector<2x64xf32> to vector<2x64xbf16>
    %cst_150 = arith.constant dense<0.000000e+00> : vector<2x256xf32>
    %303 = tpu.matmul %302, %167, %cst_150 {dimension_numbers = #tpu.dot_dimension_numbers<[1], [0], [0], [1], [0, 0, 1, 1], [], []>} : vector<2x64xbf16>, vector<64x256xbf16>, vector<2x256xf32> -> vector<2x256xf32>
    %304 = arith.addf %301, %303 : vector<2x256xf32>
    %305 = arith.negf %304 : vector<2x256xf32>
    %306 = math.exp %305 : vector<2x256xf32>
    %cst_151 = arith.constant 1.000000e+00 : f32
    %307 = vector.broadcast %cst_151 : f32 to vector<2x256xf32>
    %308 = arith.addf %307, %306 : vector<2x256xf32>
    %309 = arith.divf %307, %308 : vector<2x256xf32>
    %310 = math.tanh %304 : vector<2x256xf32>
    %311 = vector.extract_strided_slice %309 {offsets = [0, 0], sizes = [2, 64], strides = [1, 1]} : vector<2x256xf32> to vector<2x64xf32>
    %312 = vector.extract_strided_slice %309 {offsets = [0, 64], sizes = [2, 64], strides = [1, 1]} : vector<2x256xf32> to vector<2x64xf32>
    %313 = vector.extract_strided_slice %310 {offsets = [0, 128], sizes = [2, 64], strides = [1, 1]} : vector<2x256xf32> to vector<2x64xf32>
    %314 = vector.extract_strided_slice %309 {offsets = [0, 192], sizes = [2, 64], strides = [1, 1]} : vector<2x256xf32> to vector<2x64xf32>
    %315 = arith.mulf %312, %275 : vector<2x64xf32>
    %316 = arith.mulf %311, %313 : vector<2x64xf32>
    %317 = arith.addf %315, %316 : vector<2x64xf32>
    %318 = math.tanh %317 : vector<2x64xf32>
    %319 = arith.mulf %314, %318 : vector<2x64xf32>
    %320 = vector.extract_strided_slice %319 {offsets = [0, 0], sizes = [2, 32], strides = [1, 1]} : vector<2x64xf32> to vector<2x32xf32>
    %321 = arith.truncf %320 : vector<2x32xf32> to vector<2x32xbf16>
    %cst_152 = arith.constant dense<0.000000e+00> : vector<2x128xf32>
    %322 = tpu.matmul %321, %168, %cst_152 {dimension_numbers = #tpu.dot_dimension_numbers<[1], [0], [0], [1], [0, 0, 1, 1], [], []>} : vector<2x32xbf16>, vector<32x128xbf16>, vector<2x128xf32> -> vector<2x128xf32>
    %323 = arith.truncf %300 : vector<2x32xf32> to vector<2x32xbf16>
    %cst_153 = arith.constant dense<0.000000e+00> : vector<2x128xf32>
    %324 = tpu.matmul %323, %169, %cst_153 {dimension_numbers = #tpu.dot_dimension_numbers<[1], [0], [0], [1], [0, 0, 1, 1], [], []>} : vector<2x32xbf16>, vector<32x128xbf16>, vector<2x128xf32> -> vector<2x128xf32>
    %325 = arith.addf %322, %324 : vector<2x128xf32>
    %326 = vector.broadcast %170 : vector<1x128xf32> to vector<2x128xf32>
    %327 = arith.addf %325, %326 : vector<2x128xf32>
    %328 = arith.negf %327 : vector<2x128xf32>
    %329 = math.exp %328 : vector<2x128xf32>
    %cst_154 = arith.constant 1.000000e+00 : f32
    %330 = vector.broadcast %cst_154 : f32 to vector<2x128xf32>
    %331 = arith.addf %330, %329 : vector<2x128xf32>
    %332 = arith.divf %330, %331 : vector<2x128xf32>
    %333 = math.tanh %327 : vector<2x128xf32>
    %334 = vector.extract_strided_slice %332 {offsets = [0, 0], sizes = [2, 32], strides = [1, 1]} : vector<2x128xf32> to vector<2x32xf32>
    %335 = vector.extract_strided_slice %332 {offsets = [0, 32], sizes = [2, 32], strides = [1, 1]} : vector<2x128xf32> to vector<2x32xf32>
    %336 = vector.extract_strided_slice %333 {offsets = [0, 64], sizes = [2, 32], strides = [1, 1]} : vector<2x128xf32> to vector<2x32xf32>
    %337 = vector.extract_strided_slice %332 {offsets = [0, 96], sizes = [2, 32], strides = [1, 1]} : vector<2x128xf32> to vector<2x32xf32>
    %338 = arith.mulf %335, %298 : vector<2x32xf32>
    %339 = arith.mulf %334, %336 : vector<2x32xf32>
    %340 = arith.addf %338, %339 : vector<2x32xf32>
    %341 = math.tanh %340 : vector<2x32xf32>
    %342 = arith.mulf %337, %341 : vector<2x32xf32>
    %343 = vector.extract_strided_slice %166 {offsets = [8, 0], sizes = [2, 256], strides = [1, 1]} : vector<20x256xf32> to vector<2x256xf32>
    %344 = arith.truncf %319 : vector<2x64xf32> to vector<2x64xbf16>
    %cst_155 = arith.constant dense<0.000000e+00> : vector<2x256xf32>
    %345 = tpu.matmul %344, %167, %cst_155 {dimension_numbers = #tpu.dot_dimension_numbers<[1], [0], [0], [1], [0, 0, 1, 1], [], []>} : vector<2x64xbf16>, vector<64x256xbf16>, vector<2x256xf32> -> vector<2x256xf32>
    %346 = arith.addf %343, %345 : vector<2x256xf32>
    %347 = arith.negf %346 : vector<2x256xf32>
    %348 = math.exp %347 : vector<2x256xf32>
    %cst_156 = arith.constant 1.000000e+00 : f32
    %349 = vector.broadcast %cst_156 : f32 to vector<2x256xf32>
    %350 = arith.addf %349, %348 : vector<2x256xf32>
    %351 = arith.divf %349, %350 : vector<2x256xf32>
    %352 = math.tanh %346 : vector<2x256xf32>
    %353 = vector.extract_strided_slice %351 {offsets = [0, 0], sizes = [2, 64], strides = [1, 1]} : vector<2x256xf32> to vector<2x64xf32>
    %354 = vector.extract_strided_slice %351 {offsets = [0, 64], sizes = [2, 64], strides = [1, 1]} : vector<2x256xf32> to vector<2x64xf32>
    %355 = vector.extract_strided_slice %352 {offsets = [0, 128], sizes = [2, 64], strides = [1, 1]} : vector<2x256xf32> to vector<2x64xf32>
    %356 = vector.extract_strided_slice %351 {offsets = [0, 192], sizes = [2, 64], strides = [1, 1]} : vector<2x256xf32> to vector<2x64xf32>
    %357 = arith.mulf %354, %317 : vector<2x64xf32>
    %358 = arith.mulf %353, %355 : vector<2x64xf32>
    %359 = arith.addf %357, %358 : vector<2x64xf32>
    %360 = math.tanh %359 : vector<2x64xf32>
    %361 = arith.mulf %356, %360 : vector<2x64xf32>
    %362 = vector.extract_strided_slice %361 {offsets = [0, 0], sizes = [2, 32], strides = [1, 1]} : vector<2x64xf32> to vector<2x32xf32>
    %363 = arith.truncf %362 : vector<2x32xf32> to vector<2x32xbf16>
    %cst_157 = arith.constant dense<0.000000e+00> : vector<2x128xf32>
    %364 = tpu.matmul %363, %168, %cst_157 {dimension_numbers = #tpu.dot_dimension_numbers<[1], [0], [0], [1], [0, 0, 1, 1], [], []>} : vector<2x32xbf16>, vector<32x128xbf16>, vector<2x128xf32> -> vector<2x128xf32>
    %365 = arith.truncf %342 : vector<2x32xf32> to vector<2x32xbf16>
    %cst_158 = arith.constant dense<0.000000e+00> : vector<2x128xf32>
    %366 = tpu.matmul %365, %169, %cst_158 {dimension_numbers = #tpu.dot_dimension_numbers<[1], [0], [0], [1], [0, 0, 1, 1], [], []>} : vector<2x32xbf16>, vector<32x128xbf16>, vector<2x128xf32> -> vector<2x128xf32>
    %367 = arith.addf %364, %366 : vector<2x128xf32>
    %368 = vector.broadcast %170 : vector<1x128xf32> to vector<2x128xf32>
    %369 = arith.addf %367, %368 : vector<2x128xf32>
    %370 = arith.negf %369 : vector<2x128xf32>
    %371 = math.exp %370 : vector<2x128xf32>
    %cst_159 = arith.constant 1.000000e+00 : f32
    %372 = vector.broadcast %cst_159 : f32 to vector<2x128xf32>
    %373 = arith.addf %372, %371 : vector<2x128xf32>
    %374 = arith.divf %372, %373 : vector<2x128xf32>
    %375 = math.tanh %369 : vector<2x128xf32>
    %376 = vector.extract_strided_slice %374 {offsets = [0, 0], sizes = [2, 32], strides = [1, 1]} : vector<2x128xf32> to vector<2x32xf32>
    %377 = vector.extract_strided_slice %374 {offsets = [0, 32], sizes = [2, 32], strides = [1, 1]} : vector<2x128xf32> to vector<2x32xf32>
    %378 = vector.extract_strided_slice %375 {offsets = [0, 64], sizes = [2, 32], strides = [1, 1]} : vector<2x128xf32> to vector<2x32xf32>
    %379 = vector.extract_strided_slice %374 {offsets = [0, 96], sizes = [2, 32], strides = [1, 1]} : vector<2x128xf32> to vector<2x32xf32>
    %380 = arith.mulf %377, %340 : vector<2x32xf32>
    %381 = arith.mulf %376, %378 : vector<2x32xf32>
    %382 = arith.addf %380, %381 : vector<2x32xf32>
    %383 = math.tanh %382 : vector<2x32xf32>
    %384 = arith.mulf %379, %383 : vector<2x32xf32>
    %385 = vector.extract_strided_slice %166 {offsets = [10, 0], sizes = [2, 256], strides = [1, 1]} : vector<20x256xf32> to vector<2x256xf32>
    %386 = arith.truncf %361 : vector<2x64xf32> to vector<2x64xbf16>
    %cst_160 = arith.constant dense<0.000000e+00> : vector<2x256xf32>
    %387 = tpu.matmul %386, %167, %cst_160 {dimension_numbers = #tpu.dot_dimension_numbers<[1], [0], [0], [1], [0, 0, 1, 1], [], []>} : vector<2x64xbf16>, vector<64x256xbf16>, vector<2x256xf32> -> vector<2x256xf32>
    %388 = arith.addf %385, %387 : vector<2x256xf32>
    %389 = arith.negf %388 : vector<2x256xf32>
    %390 = math.exp %389 : vector<2x256xf32>
    %cst_161 = arith.constant 1.000000e+00 : f32
    %391 = vector.broadcast %cst_161 : f32 to vector<2x256xf32>
    %392 = arith.addf %391, %390 : vector<2x256xf32>
    %393 = arith.divf %391, %392 : vector<2x256xf32>
    %394 = math.tanh %388 : vector<2x256xf32>
    %395 = vector.extract_strided_slice %393 {offsets = [0, 0], sizes = [2, 64], strides = [1, 1]} : vector<2x256xf32> to vector<2x64xf32>
    %396 = vector.extract_strided_slice %393 {offsets = [0, 64], sizes = [2, 64], strides = [1, 1]} : vector<2x256xf32> to vector<2x64xf32>
    %397 = vector.extract_strided_slice %394 {offsets = [0, 128], sizes = [2, 64], strides = [1, 1]} : vector<2x256xf32> to vector<2x64xf32>
    %398 = vector.extract_strided_slice %393 {offsets = [0, 192], sizes = [2, 64], strides = [1, 1]} : vector<2x256xf32> to vector<2x64xf32>
    %399 = arith.mulf %396, %359 : vector<2x64xf32>
    %400 = arith.mulf %395, %397 : vector<2x64xf32>
    %401 = arith.addf %399, %400 : vector<2x64xf32>
    %402 = math.tanh %401 : vector<2x64xf32>
    %403 = arith.mulf %398, %402 : vector<2x64xf32>
    %404 = vector.extract_strided_slice %403 {offsets = [0, 0], sizes = [2, 32], strides = [1, 1]} : vector<2x64xf32> to vector<2x32xf32>
    %405 = arith.truncf %404 : vector<2x32xf32> to vector<2x32xbf16>
    %cst_162 = arith.constant dense<0.000000e+00> : vector<2x128xf32>
    %406 = tpu.matmul %405, %168, %cst_162 {dimension_numbers = #tpu.dot_dimension_numbers<[1], [0], [0], [1], [0, 0, 1, 1], [], []>} : vector<2x32xbf16>, vector<32x128xbf16>, vector<2x128xf32> -> vector<2x128xf32>
    %407 = arith.truncf %384 : vector<2x32xf32> to vector<2x32xbf16>
    %cst_163 = arith.constant dense<0.000000e+00> : vector<2x128xf32>
    %408 = tpu.matmul %407, %169, %cst_163 {dimension_numbers = #tpu.dot_dimension_numbers<[1], [0], [0], [1], [0, 0, 1, 1], [], []>} : vector<2x32xbf16>, vector<32x128xbf16>, vector<2x128xf32> -> vector<2x128xf32>
    %409 = arith.addf %406, %408 : vector<2x128xf32>
    %410 = vector.broadcast %170 : vector<1x128xf32> to vector<2x128xf32>
    %411 = arith.addf %409, %410 : vector<2x128xf32>
    %412 = arith.negf %411 : vector<2x128xf32>
    %413 = math.exp %412 : vector<2x128xf32>
    %cst_164 = arith.constant 1.000000e+00 : f32
    %414 = vector.broadcast %cst_164 : f32 to vector<2x128xf32>
    %415 = arith.addf %414, %413 : vector<2x128xf32>
    %416 = arith.divf %414, %415 : vector<2x128xf32>
    %417 = math.tanh %411 : vector<2x128xf32>
    %418 = vector.extract_strided_slice %416 {offsets = [0, 0], sizes = [2, 32], strides = [1, 1]} : vector<2x128xf32> to vector<2x32xf32>
    %419 = vector.extract_strided_slice %416 {offsets = [0, 32], sizes = [2, 32], strides = [1, 1]} : vector<2x128xf32> to vector<2x32xf32>
    %420 = vector.extract_strided_slice %417 {offsets = [0, 64], sizes = [2, 32], strides = [1, 1]} : vector<2x128xf32> to vector<2x32xf32>
    %421 = vector.extract_strided_slice %416 {offsets = [0, 96], sizes = [2, 32], strides = [1, 1]} : vector<2x128xf32> to vector<2x32xf32>
    %422 = arith.mulf %419, %382 : vector<2x32xf32>
    %423 = arith.mulf %418, %420 : vector<2x32xf32>
    %424 = arith.addf %422, %423 : vector<2x32xf32>
    %425 = math.tanh %424 : vector<2x32xf32>
    %426 = arith.mulf %421, %425 : vector<2x32xf32>
    %427 = vector.extract_strided_slice %166 {offsets = [12, 0], sizes = [2, 256], strides = [1, 1]} : vector<20x256xf32> to vector<2x256xf32>
    %428 = arith.truncf %403 : vector<2x64xf32> to vector<2x64xbf16>
    %cst_165 = arith.constant dense<0.000000e+00> : vector<2x256xf32>
    %429 = tpu.matmul %428, %167, %cst_165 {dimension_numbers = #tpu.dot_dimension_numbers<[1], [0], [0], [1], [0, 0, 1, 1], [], []>} : vector<2x64xbf16>, vector<64x256xbf16>, vector<2x256xf32> -> vector<2x256xf32>
    %430 = arith.addf %427, %429 : vector<2x256xf32>
    %431 = arith.negf %430 : vector<2x256xf32>
    %432 = math.exp %431 : vector<2x256xf32>
    %cst_166 = arith.constant 1.000000e+00 : f32
    %433 = vector.broadcast %cst_166 : f32 to vector<2x256xf32>
    %434 = arith.addf %433, %432 : vector<2x256xf32>
    %435 = arith.divf %433, %434 : vector<2x256xf32>
    %436 = math.tanh %430 : vector<2x256xf32>
    %437 = vector.extract_strided_slice %435 {offsets = [0, 0], sizes = [2, 64], strides = [1, 1]} : vector<2x256xf32> to vector<2x64xf32>
    %438 = vector.extract_strided_slice %435 {offsets = [0, 64], sizes = [2, 64], strides = [1, 1]} : vector<2x256xf32> to vector<2x64xf32>
    %439 = vector.extract_strided_slice %436 {offsets = [0, 128], sizes = [2, 64], strides = [1, 1]} : vector<2x256xf32> to vector<2x64xf32>
    %440 = vector.extract_strided_slice %435 {offsets = [0, 192], sizes = [2, 64], strides = [1, 1]} : vector<2x256xf32> to vector<2x64xf32>
    %441 = arith.mulf %438, %401 : vector<2x64xf32>
    %442 = arith.mulf %437, %439 : vector<2x64xf32>
    %443 = arith.addf %441, %442 : vector<2x64xf32>
    %444 = math.tanh %443 : vector<2x64xf32>
    %445 = arith.mulf %440, %444 : vector<2x64xf32>
    %446 = vector.extract_strided_slice %445 {offsets = [0, 0], sizes = [2, 32], strides = [1, 1]} : vector<2x64xf32> to vector<2x32xf32>
    %447 = arith.truncf %446 : vector<2x32xf32> to vector<2x32xbf16>
    %cst_167 = arith.constant dense<0.000000e+00> : vector<2x128xf32>
    %448 = tpu.matmul %447, %168, %cst_167 {dimension_numbers = #tpu.dot_dimension_numbers<[1], [0], [0], [1], [0, 0, 1, 1], [], []>} : vector<2x32xbf16>, vector<32x128xbf16>, vector<2x128xf32> -> vector<2x128xf32>
    %449 = arith.truncf %426 : vector<2x32xf32> to vector<2x32xbf16>
    %cst_168 = arith.constant dense<0.000000e+00> : vector<2x128xf32>
    %450 = tpu.matmul %449, %169, %cst_168 {dimension_numbers = #tpu.dot_dimension_numbers<[1], [0], [0], [1], [0, 0, 1, 1], [], []>} : vector<2x32xbf16>, vector<32x128xbf16>, vector<2x128xf32> -> vector<2x128xf32>
    %451 = arith.addf %448, %450 : vector<2x128xf32>
    %452 = vector.broadcast %170 : vector<1x128xf32> to vector<2x128xf32>
    %453 = arith.addf %451, %452 : vector<2x128xf32>
    %454 = arith.negf %453 : vector<2x128xf32>
    %455 = math.exp %454 : vector<2x128xf32>
    %cst_169 = arith.constant 1.000000e+00 : f32
    %456 = vector.broadcast %cst_169 : f32 to vector<2x128xf32>
    %457 = arith.addf %456, %455 : vector<2x128xf32>
    %458 = arith.divf %456, %457 : vector<2x128xf32>
    %459 = math.tanh %453 : vector<2x128xf32>
    %460 = vector.extract_strided_slice %458 {offsets = [0, 0], sizes = [2, 32], strides = [1, 1]} : vector<2x128xf32> to vector<2x32xf32>
    %461 = vector.extract_strided_slice %458 {offsets = [0, 32], sizes = [2, 32], strides = [1, 1]} : vector<2x128xf32> to vector<2x32xf32>
    %462 = vector.extract_strided_slice %459 {offsets = [0, 64], sizes = [2, 32], strides = [1, 1]} : vector<2x128xf32> to vector<2x32xf32>
    %463 = vector.extract_strided_slice %458 {offsets = [0, 96], sizes = [2, 32], strides = [1, 1]} : vector<2x128xf32> to vector<2x32xf32>
    %464 = arith.mulf %461, %424 : vector<2x32xf32>
    %465 = arith.mulf %460, %462 : vector<2x32xf32>
    %466 = arith.addf %464, %465 : vector<2x32xf32>
    %467 = math.tanh %466 : vector<2x32xf32>
    %468 = arith.mulf %463, %467 : vector<2x32xf32>
    %469 = vector.extract_strided_slice %166 {offsets = [14, 0], sizes = [2, 256], strides = [1, 1]} : vector<20x256xf32> to vector<2x256xf32>
    %470 = arith.truncf %445 : vector<2x64xf32> to vector<2x64xbf16>
    %cst_170 = arith.constant dense<0.000000e+00> : vector<2x256xf32>
    %471 = tpu.matmul %470, %167, %cst_170 {dimension_numbers = #tpu.dot_dimension_numbers<[1], [0], [0], [1], [0, 0, 1, 1], [], []>} : vector<2x64xbf16>, vector<64x256xbf16>, vector<2x256xf32> -> vector<2x256xf32>
    %472 = arith.addf %469, %471 : vector<2x256xf32>
    %473 = arith.negf %472 : vector<2x256xf32>
    %474 = math.exp %473 : vector<2x256xf32>
    %cst_171 = arith.constant 1.000000e+00 : f32
    %475 = vector.broadcast %cst_171 : f32 to vector<2x256xf32>
    %476 = arith.addf %475, %474 : vector<2x256xf32>
    %477 = arith.divf %475, %476 : vector<2x256xf32>
    %478 = math.tanh %472 : vector<2x256xf32>
    %479 = vector.extract_strided_slice %477 {offsets = [0, 0], sizes = [2, 64], strides = [1, 1]} : vector<2x256xf32> to vector<2x64xf32>
    %480 = vector.extract_strided_slice %477 {offsets = [0, 64], sizes = [2, 64], strides = [1, 1]} : vector<2x256xf32> to vector<2x64xf32>
    %481 = vector.extract_strided_slice %478 {offsets = [0, 128], sizes = [2, 64], strides = [1, 1]} : vector<2x256xf32> to vector<2x64xf32>
    %482 = vector.extract_strided_slice %477 {offsets = [0, 192], sizes = [2, 64], strides = [1, 1]} : vector<2x256xf32> to vector<2x64xf32>
    %483 = arith.mulf %480, %443 : vector<2x64xf32>
    %484 = arith.mulf %479, %481 : vector<2x64xf32>
    %485 = arith.addf %483, %484 : vector<2x64xf32>
    %486 = math.tanh %485 : vector<2x64xf32>
    %487 = arith.mulf %482, %486 : vector<2x64xf32>
    %488 = vector.extract_strided_slice %487 {offsets = [0, 0], sizes = [2, 32], strides = [1, 1]} : vector<2x64xf32> to vector<2x32xf32>
    %489 = arith.truncf %488 : vector<2x32xf32> to vector<2x32xbf16>
    %cst_172 = arith.constant dense<0.000000e+00> : vector<2x128xf32>
    %490 = tpu.matmul %489, %168, %cst_172 {dimension_numbers = #tpu.dot_dimension_numbers<[1], [0], [0], [1], [0, 0, 1, 1], [], []>} : vector<2x32xbf16>, vector<32x128xbf16>, vector<2x128xf32> -> vector<2x128xf32>
    %491 = arith.truncf %468 : vector<2x32xf32> to vector<2x32xbf16>
    %cst_173 = arith.constant dense<0.000000e+00> : vector<2x128xf32>
    %492 = tpu.matmul %491, %169, %cst_173 {dimension_numbers = #tpu.dot_dimension_numbers<[1], [0], [0], [1], [0, 0, 1, 1], [], []>} : vector<2x32xbf16>, vector<32x128xbf16>, vector<2x128xf32> -> vector<2x128xf32>
    %493 = arith.addf %490, %492 : vector<2x128xf32>
    %494 = vector.broadcast %170 : vector<1x128xf32> to vector<2x128xf32>
    %495 = arith.addf %493, %494 : vector<2x128xf32>
    %496 = arith.negf %495 : vector<2x128xf32>
    %497 = math.exp %496 : vector<2x128xf32>
    %cst_174 = arith.constant 1.000000e+00 : f32
    %498 = vector.broadcast %cst_174 : f32 to vector<2x128xf32>
    %499 = arith.addf %498, %497 : vector<2x128xf32>
    %500 = arith.divf %498, %499 : vector<2x128xf32>
    %501 = math.tanh %495 : vector<2x128xf32>
    %502 = vector.extract_strided_slice %500 {offsets = [0, 0], sizes = [2, 32], strides = [1, 1]} : vector<2x128xf32> to vector<2x32xf32>
    %503 = vector.extract_strided_slice %500 {offsets = [0, 32], sizes = [2, 32], strides = [1, 1]} : vector<2x128xf32> to vector<2x32xf32>
    %504 = vector.extract_strided_slice %501 {offsets = [0, 64], sizes = [2, 32], strides = [1, 1]} : vector<2x128xf32> to vector<2x32xf32>
    %505 = vector.extract_strided_slice %500 {offsets = [0, 96], sizes = [2, 32], strides = [1, 1]} : vector<2x128xf32> to vector<2x32xf32>
    %506 = arith.mulf %503, %466 : vector<2x32xf32>
    %507 = arith.mulf %502, %504 : vector<2x32xf32>
    %508 = arith.addf %506, %507 : vector<2x32xf32>
    %509 = math.tanh %508 : vector<2x32xf32>
    %510 = arith.mulf %505, %509 : vector<2x32xf32>
    %511 = vector.extract_strided_slice %166 {offsets = [16, 0], sizes = [2, 256], strides = [1, 1]} : vector<20x256xf32> to vector<2x256xf32>
    %512 = arith.truncf %487 : vector<2x64xf32> to vector<2x64xbf16>
    %cst_175 = arith.constant dense<0.000000e+00> : vector<2x256xf32>
    %513 = tpu.matmul %512, %167, %cst_175 {dimension_numbers = #tpu.dot_dimension_numbers<[1], [0], [0], [1], [0, 0, 1, 1], [], []>} : vector<2x64xbf16>, vector<64x256xbf16>, vector<2x256xf32> -> vector<2x256xf32>
    %514 = arith.addf %511, %513 : vector<2x256xf32>
    %515 = arith.negf %514 : vector<2x256xf32>
    %516 = math.exp %515 : vector<2x256xf32>
    %cst_176 = arith.constant 1.000000e+00 : f32
    %517 = vector.broadcast %cst_176 : f32 to vector<2x256xf32>
    %518 = arith.addf %517, %516 : vector<2x256xf32>
    %519 = arith.divf %517, %518 : vector<2x256xf32>
    %520 = math.tanh %514 : vector<2x256xf32>
    %521 = vector.extract_strided_slice %519 {offsets = [0, 0], sizes = [2, 64], strides = [1, 1]} : vector<2x256xf32> to vector<2x64xf32>
    %522 = vector.extract_strided_slice %519 {offsets = [0, 64], sizes = [2, 64], strides = [1, 1]} : vector<2x256xf32> to vector<2x64xf32>
    %523 = vector.extract_strided_slice %520 {offsets = [0, 128], sizes = [2, 64], strides = [1, 1]} : vector<2x256xf32> to vector<2x64xf32>
    %524 = vector.extract_strided_slice %519 {offsets = [0, 192], sizes = [2, 64], strides = [1, 1]} : vector<2x256xf32> to vector<2x64xf32>
    %525 = arith.mulf %522, %485 : vector<2x64xf32>
    %526 = arith.mulf %521, %523 : vector<2x64xf32>
    %527 = arith.addf %525, %526 : vector<2x64xf32>
    %528 = math.tanh %527 : vector<2x64xf32>
    %529 = arith.mulf %524, %528 : vector<2x64xf32>
    %530 = vector.extract_strided_slice %529 {offsets = [0, 0], sizes = [2, 32], strides = [1, 1]} : vector<2x64xf32> to vector<2x32xf32>
    %531 = arith.truncf %530 : vector<2x32xf32> to vector<2x32xbf16>
    %cst_177 = arith.constant dense<0.000000e+00> : vector<2x128xf32>
    %532 = tpu.matmul %531, %168, %cst_177 {dimension_numbers = #tpu.dot_dimension_numbers<[1], [0], [0], [1], [0, 0, 1, 1], [], []>} : vector<2x32xbf16>, vector<32x128xbf16>, vector<2x128xf32> -> vector<2x128xf32>
    %533 = arith.truncf %510 : vector<2x32xf32> to vector<2x32xbf16>
    %cst_178 = arith.constant dense<0.000000e+00> : vector<2x128xf32>
    %534 = tpu.matmul %533, %169, %cst_178 {dimension_numbers = #tpu.dot_dimension_numbers<[1], [0], [0], [1], [0, 0, 1, 1], [], []>} : vector<2x32xbf16>, vector<32x128xbf16>, vector<2x128xf32> -> vector<2x128xf32>
    %535 = arith.addf %532, %534 : vector<2x128xf32>
    %536 = vector.broadcast %170 : vector<1x128xf32> to vector<2x128xf32>
    %537 = arith.addf %535, %536 : vector<2x128xf32>
    %538 = arith.negf %537 : vector<2x128xf32>
    %539 = math.exp %538 : vector<2x128xf32>
    %cst_179 = arith.constant 1.000000e+00 : f32
    %540 = vector.broadcast %cst_179 : f32 to vector<2x128xf32>
    %541 = arith.addf %540, %539 : vector<2x128xf32>
    %542 = arith.divf %540, %541 : vector<2x128xf32>
    %543 = math.tanh %537 : vector<2x128xf32>
    %544 = vector.extract_strided_slice %542 {offsets = [0, 0], sizes = [2, 32], strides = [1, 1]} : vector<2x128xf32> to vector<2x32xf32>
    %545 = vector.extract_strided_slice %542 {offsets = [0, 32], sizes = [2, 32], strides = [1, 1]} : vector<2x128xf32> to vector<2x32xf32>
    %546 = vector.extract_strided_slice %543 {offsets = [0, 64], sizes = [2, 32], strides = [1, 1]} : vector<2x128xf32> to vector<2x32xf32>
    %547 = vector.extract_strided_slice %542 {offsets = [0, 96], sizes = [2, 32], strides = [1, 1]} : vector<2x128xf32> to vector<2x32xf32>
    %548 = arith.mulf %545, %508 : vector<2x32xf32>
    %549 = arith.mulf %544, %546 : vector<2x32xf32>
    %550 = arith.addf %548, %549 : vector<2x32xf32>
    %551 = math.tanh %550 : vector<2x32xf32>
    %552 = arith.mulf %547, %551 : vector<2x32xf32>
    %553 = vector.extract_strided_slice %166 {offsets = [18, 0], sizes = [2, 256], strides = [1, 1]} : vector<20x256xf32> to vector<2x256xf32>
    %554 = arith.truncf %529 : vector<2x64xf32> to vector<2x64xbf16>
    %cst_180 = arith.constant dense<0.000000e+00> : vector<2x256xf32>
    %555 = tpu.matmul %554, %167, %cst_180 {dimension_numbers = #tpu.dot_dimension_numbers<[1], [0], [0], [1], [0, 0, 1, 1], [], []>} : vector<2x64xbf16>, vector<64x256xbf16>, vector<2x256xf32> -> vector<2x256xf32>
    %556 = arith.addf %553, %555 : vector<2x256xf32>
    %557 = arith.negf %556 : vector<2x256xf32>
    %558 = math.exp %557 : vector<2x256xf32>
    %cst_181 = arith.constant 1.000000e+00 : f32
    %559 = vector.broadcast %cst_181 : f32 to vector<2x256xf32>
    %560 = arith.addf %559, %558 : vector<2x256xf32>
    %561 = arith.divf %559, %560 : vector<2x256xf32>
    %562 = math.tanh %556 : vector<2x256xf32>
    %563 = vector.extract_strided_slice %561 {offsets = [0, 0], sizes = [2, 64], strides = [1, 1]} : vector<2x256xf32> to vector<2x64xf32>
    %564 = vector.extract_strided_slice %561 {offsets = [0, 64], sizes = [2, 64], strides = [1, 1]} : vector<2x256xf32> to vector<2x64xf32>
    %565 = vector.extract_strided_slice %562 {offsets = [0, 128], sizes = [2, 64], strides = [1, 1]} : vector<2x256xf32> to vector<2x64xf32>
    %566 = vector.extract_strided_slice %561 {offsets = [0, 192], sizes = [2, 64], strides = [1, 1]} : vector<2x256xf32> to vector<2x64xf32>
    %567 = arith.mulf %564, %527 : vector<2x64xf32>
    %568 = arith.mulf %563, %565 : vector<2x64xf32>
    %569 = arith.addf %567, %568 : vector<2x64xf32>
    %570 = math.tanh %569 : vector<2x64xf32>
    %571 = arith.mulf %566, %570 : vector<2x64xf32>
    %572 = vector.extract_strided_slice %571 {offsets = [0, 0], sizes = [2, 32], strides = [1, 1]} : vector<2x64xf32> to vector<2x32xf32>
    %573 = arith.truncf %572 : vector<2x32xf32> to vector<2x32xbf16>
    %cst_182 = arith.constant dense<0.000000e+00> : vector<2x128xf32>
    %574 = tpu.matmul %573, %168, %cst_182 {dimension_numbers = #tpu.dot_dimension_numbers<[1], [0], [0], [1], [0, 0, 1, 1], [], []>} : vector<2x32xbf16>, vector<32x128xbf16>, vector<2x128xf32> -> vector<2x128xf32>
    %575 = arith.truncf %552 : vector<2x32xf32> to vector<2x32xbf16>
    %cst_183 = arith.constant dense<0.000000e+00> : vector<2x128xf32>
    %576 = tpu.matmul %575, %169, %cst_183 {dimension_numbers = #tpu.dot_dimension_numbers<[1], [0], [0], [1], [0, 0, 1, 1], [], []>} : vector<2x32xbf16>, vector<32x128xbf16>, vector<2x128xf32> -> vector<2x128xf32>
    %577 = arith.addf %574, %576 : vector<2x128xf32>
    %578 = vector.broadcast %170 : vector<1x128xf32> to vector<2x128xf32>
    %579 = arith.addf %577, %578 : vector<2x128xf32>
    %580 = arith.negf %579 : vector<2x128xf32>
    %581 = math.exp %580 : vector<2x128xf32>
    %cst_184 = arith.constant 1.000000e+00 : f32
    %582 = vector.broadcast %cst_184 : f32 to vector<2x128xf32>
    %583 = arith.addf %582, %581 : vector<2x128xf32>
    %584 = arith.divf %582, %583 : vector<2x128xf32>
    %585 = math.tanh %579 : vector<2x128xf32>
    %586 = vector.extract_strided_slice %584 {offsets = [0, 0], sizes = [2, 32], strides = [1, 1]} : vector<2x128xf32> to vector<2x32xf32>
    %587 = vector.extract_strided_slice %584 {offsets = [0, 32], sizes = [2, 32], strides = [1, 1]} : vector<2x128xf32> to vector<2x32xf32>
    %588 = vector.extract_strided_slice %585 {offsets = [0, 64], sizes = [2, 32], strides = [1, 1]} : vector<2x128xf32> to vector<2x32xf32>
    %589 = vector.extract_strided_slice %584 {offsets = [0, 96], sizes = [2, 32], strides = [1, 1]} : vector<2x128xf32> to vector<2x32xf32>
    %590 = arith.mulf %587, %550 : vector<2x32xf32>
    %591 = arith.mulf %586, %588 : vector<2x32xf32>
    %592 = arith.addf %590, %591 : vector<2x32xf32>
    %593 = math.tanh %592 : vector<2x32xf32>
    %594 = arith.mulf %589, %593 : vector<2x32xf32>
    %595 = vector.extract_strided_slice %571 {offsets = [0, 32], sizes = [2, 32], strides = [1, 1]} : vector<2x64xf32> to vector<2x32xf32>
    %596 = vector.extract_strided_slice %569 {offsets = [0, 32], sizes = [2, 32], strides = [1, 1]} : vector<2x64xf32> to vector<2x32xf32>
    %c192 = arith.constant 192 : index
    %c0_185 = arith.constant 0 : index
    %597 = vector.load %arg3[%c192, %c0_185] : memref<400x256xbf16, #tpu.memory_space<vmem>>, vector<32x32xbf16>
    %598 = arith.truncf %594 : vector<2x32xf32> to vector<2x32xbf16>
    %cst_186 = arith.constant dense<0.000000e+00> : vector<2x32xf32>
    %599 = tpu.matmul %598, %597, %cst_186 {dimension_numbers = #tpu.dot_dimension_numbers<[1], [0], [0], [1], [0, 0, 1, 1], [], []>} : vector<2x32xbf16>, vector<32x32xbf16>, vector<2x32xf32> -> vector<2x32xf32>
    %c224 = arith.constant 224 : index
    %c0_187 = arith.constant 0 : index
    %600 = vector.load %arg3[%c224, %c0_187] : memref<400x256xbf16, #tpu.memory_space<vmem>>, vector<32x32xbf16>
    %601 = arith.truncf %592 : vector<2x32xf32> to vector<2x32xbf16>
    %cst_188 = arith.constant dense<0.000000e+00> : vector<2x32xf32>
    %602 = tpu.matmul %601, %600, %cst_188 {dimension_numbers = #tpu.dot_dimension_numbers<[1], [0], [0], [1], [0, 0, 1, 1], [], []>} : vector<2x32xbf16>, vector<32x32xbf16>, vector<2x32xf32> -> vector<2x32xf32>
    %603 = arith.addf %599, %602 : vector<2x32xf32>
    %c2_189 = arith.constant 2 : index
    %c0_190 = arith.constant 0 : index
    %604 = vector.load %arg4[%c2_189, %c0_190] : memref<6x256xf32, #tpu.memory_space<vmem>>, vector<1x32xf32>
    %605 = vector.broadcast %604 : vector<1x32xf32> to vector<2x32xf32>
    %606 = arith.addf %603, %605 : vector<2x32xf32>
    %cst_191 = arith.constant 0.000000e+00 : f32
    %607 = vector.broadcast %cst_191 : f32 to vector<2x32xf32>
    %608 = arith.maximumf %606, %607 : vector<2x32xf32>
    %c256 = arith.constant 256 : index
    %c0_192 = arith.constant 0 : index
    %609 = vector.load %arg3[%c256, %c0_192] : memref<400x256xbf16, #tpu.memory_space<vmem>>, vector<32x32xbf16>
    %610 = arith.truncf %595 : vector<2x32xf32> to vector<2x32xbf16>
    %cst_193 = arith.constant dense<0.000000e+00> : vector<2x32xf32>
    %611 = tpu.matmul %610, %609, %cst_193 {dimension_numbers = #tpu.dot_dimension_numbers<[1], [0], [0], [1], [0, 0, 1, 1], [], []>} : vector<2x32xbf16>, vector<32x32xbf16>, vector<2x32xf32> -> vector<2x32xf32>
    %c288 = arith.constant 288 : index
    %c0_194 = arith.constant 0 : index
    %612 = vector.load %arg3[%c288, %c0_194] : memref<400x256xbf16, #tpu.memory_space<vmem>>, vector<32x32xbf16>
    %613 = arith.truncf %596 : vector<2x32xf32> to vector<2x32xbf16>
    %cst_195 = arith.constant dense<0.000000e+00> : vector<2x32xf32>
    %614 = tpu.matmul %613, %612, %cst_195 {dimension_numbers = #tpu.dot_dimension_numbers<[1], [0], [0], [1], [0, 0, 1, 1], [], []>} : vector<2x32xbf16>, vector<32x32xbf16>, vector<2x32xf32> -> vector<2x32xf32>
    %615 = arith.addf %611, %614 : vector<2x32xf32>
    %c3_196 = arith.constant 3 : index
    %c0_197 = arith.constant 0 : index
    %616 = vector.load %arg4[%c3_196, %c0_197] : memref<6x256xf32, #tpu.memory_space<vmem>>, vector<1x32xf32>
    %617 = vector.broadcast %616 : vector<1x32xf32> to vector<2x32xf32>
    %618 = arith.addf %615, %617 : vector<2x32xf32>
    %cst_198 = arith.constant 0.000000e+00 : f32
    %619 = vector.broadcast %cst_198 : f32 to vector<2x32xf32>
    %620 = arith.maximumf %618, %619 : vector<2x32xf32>
    %c320 = arith.constant 320 : index
    %c0_199 = arith.constant 0 : index
    %621 = vector.load %arg3[%c320, %c0_199] : memref<400x256xbf16, #tpu.memory_space<vmem>>, vector<32x32xbf16>
    %622 = arith.truncf %608 : vector<2x32xf32> to vector<2x32xbf16>
    %cst_200 = arith.constant dense<0.000000e+00> : vector<2x32xf32>
    %623 = tpu.matmul %622, %621, %cst_200 {dimension_numbers = #tpu.dot_dimension_numbers<[1], [0], [0], [1], [0, 0, 1, 1], [], []>} : vector<2x32xbf16>, vector<32x32xbf16>, vector<2x32xf32> -> vector<2x32xf32>
    %c352 = arith.constant 352 : index
    %c0_201 = arith.constant 0 : index
    %624 = vector.load %arg3[%c352, %c0_201] : memref<400x256xbf16, #tpu.memory_space<vmem>>, vector<32x32xbf16>
    %625 = arith.truncf %620 : vector<2x32xf32> to vector<2x32xbf16>
    %cst_202 = arith.constant dense<0.000000e+00> : vector<2x32xf32>
    %626 = tpu.matmul %625, %624, %cst_202 {dimension_numbers = #tpu.dot_dimension_numbers<[1], [0], [0], [1], [0, 0, 1, 1], [], []>} : vector<2x32xbf16>, vector<32x32xbf16>, vector<2x32xf32> -> vector<2x32xf32>
    %627 = arith.addf %623, %626 : vector<2x32xf32>
    %c4_203 = arith.constant 4 : index
    %c0_204 = arith.constant 0 : index
    %628 = vector.load %arg4[%c4_203, %c0_204] : memref<6x256xf32, #tpu.memory_space<vmem>>, vector<1x32xf32>
    %629 = vector.broadcast %628 : vector<1x32xf32> to vector<2x32xf32>
    %630 = arith.addf %627, %629 : vector<2x32xf32>
    %c384 = arith.constant 384 : index
    %c0_205 = arith.constant 0 : index
    %631 = vector.load %arg3[%c384, %c0_205] : memref<400x256xbf16, #tpu.memory_space<vmem>>, vector<1x32xbf16>
    %632 = arith.extf %631 : vector<1x32xbf16> to vector<1x32xf32>
    %633 = vector.broadcast %632 : vector<1x32xf32> to vector<2x32xf32>
    %634 = arith.mulf %630, %633 : vector<2x32xf32>
    %cst_206 = arith.constant dense<0.000000e+00> : vector<2xf32>
    %635 = vector.multi_reduction <add>, %634, %cst_206 [1] : vector<2x32xf32> to vector<2xf32>
    %636 = vector.shape_cast %635 : vector<2xf32> to vector<2x1xf32>
    %c5_207 = arith.constant 5 : index
    %c0_208 = arith.constant 0 : index
    %637 = vector.load %arg4[%c5_207, %c0_208] : memref<6x256xf32, #tpu.memory_space<vmem>>, vector<1x1xf32>
    %638 = vector.broadcast %637 : vector<1x1xf32> to vector<2x1xf32>
    %639 = arith.addf %636, %638 : vector<2x1xf32>
    %640 = arith.negf %639 : vector<2x1xf32>
    %641 = math.exp %640 : vector<2x1xf32>
    %cst_209 = arith.constant 1.000000e+00 : f32
    %642 = vector.broadcast %cst_209 : f32 to vector<2x1xf32>
    %643 = arith.addf %642, %641 : vector<2x1xf32>
    %644 = arith.divf %642, %643 : vector<2x1xf32>
    %c0_210 = arith.constant 0 : index
    %c0_211 = arith.constant 0 : index
    %645 = vector.load %arg5[%c0_210, %c0_211] : memref<2x1xf32, #tpu.memory_space<vmem>>, vector<2x1xf32>
    tpu.vector_store %arg5[%c0_210, %c0_211], %644 {strides = array<i32>} : memref<2x1xf32, #tpu.memory_space<vmem>>, vector<2x1xf32>,
    return
  }
}

</mosaic_0001>

<llo_original>
// kernel: forward.1
$region0: #{forward.1}
  #allocation0 [shape = 'u32[]', space=smem, size = 0x4, offset = 0x4, fixed_abs, tag = 'smem constant byte address 0x4 - core index']
  #allocation1 [shape = 'u32[72,128]{1,0:T(1,128)}', space=vmem, size = 0x9000, scoped, tag = 'internal scratch']
  #allocation2 [shape = 'f32[20,64]{1,0:T(8,128)}', space=vmem, size = 0x3000, scoped, tag = 'scratch operand']
  %s0 = inlined_call_operand.vmem [shape: s32[40], index: 0, kind: input, shape index: {}]
  %s1 = inlined_call_operand.hbm [shape: f32[24,32], index: 1, kind: input, shape index: {}]
  %s2 = inlined_call_operand.hbm [shape: f32[24,32], index: 2, kind: input, shape index: {}]
  %s3 = inlined_call_operand.hbm [shape: bf16[400,256], index: 3, kind: input, shape index: {}]
  %s4 = inlined_call_operand.hbm [shape: f32[6,256], index: 4, kind: input, shape index: {}]
  %s5 = inlined_call_operand.vmem [shape: f32[2,1], index: 5, kind: output, shape index: {}]
  %s6 = sld [smem:[#allocation0]]
  $region50: #{forward.1} parent=0
    _
  %s8 = ssub.s32 1, %s6
  %s9 = scalar_select 0, %s8, %s6
  $region1: #{forward.1} parent=0
    #allocation3 [shape = 'u8[512]{0}', space=smem, size = 0x200, scoped, tag = 'input window, operand 0, single buffered']
    #allocation4 [shape = 's32[1]{0}', space=sflag, size = 0x4, scoped, tag = 'scoped memory for forward.1']
    #allocation5 [shape = 's32[1]{0}', space=sflag, size = 0x4, scoped, tag = 'scoped memory for forward.1']
    #allocation6 [shape = 'u8[12288]{0}', space=vmem, size = 0x3000, scoped, tag = 'input window, operand 1, single buffered']
    #allocation7 [shape = 'u8[12288]{0}', space=vmem, size = 0x3000, scoped, tag = 'input window, operand 2, single buffered']
    #allocation8 [shape = 's32[1]{0}', space=sflag, size = 0x4, scoped, tag = 'scoped memory for forward.1']
    #allocation9 [shape = 'u8[204800]{0}', space=vmem, size = 0x32000, scoped, tag = 'input window, operand 3, single buffered']
    #allocation10 [shape = 'u8[8192]{0}', space=vmem, size = 0x2000, scoped, tag = 'input window, operand 4, single buffered']
    #allocation11 [shape = 's32[1]{0}', space=sflag, size = 0x4, scoped, tag = 'scoped memory for forward.1']
    %10 = vsyncpa [#allocation5], 0
    %11 = vsyncpa [#allocation4], 0
    %12 = vsyncpa [#allocation8], 0
    %13 = vsyncpa [#allocation11], 0
    // Predicated region
    $region2: #{forward.1} parent=1 // pred_check
      _
    $region3: #{forward.1} parent=1 // pred_check_branch
      %15 = sbr.rel (0) target = $region5
    $region4: #{forward.1} parent=1 // pred_region
      %17 = vsyncadd [#allocation5], 0
      %s19 = sshll.u32 %s0, 4
      %s20 = int_to_ptr.vmem [resolvable:$true] %s19
      %22 = dma.vmem_to_smem %s20, 16, [#allocation3], [#allocation5]
    $region5: #{forward.1} parent=1 // pred_fallthru
      _
    // Predicated region
    $region6: #{forward.1} parent=1 // pred_check
      _
    $region7: #{forward.1} parent=1 // pred_check_branch
      %24 = sbr.rel (0) target = $region9
    $region8: #{forward.1} parent=1 // pred_region
      %26 = vsyncadd [#allocation4], 0
      %s27 = sshll.u32 %s1, 4
      %s28 = int_to_ptr.hbm [resolvable:$true] %s27
      %s29 = sshll.u32 [#allocation6], 4
      %s30 = int_to_ptr.vmem [resolvable:$true] %s29
      %35 = dma.hbm_to_vmem [thread:$0]  %s28, 384, %s30, [#allocation4], 128, 128, 8
    $region9: #{forward.1} parent=1 // pred_fallthru
      _
    // Predicated region
    $region10: #{forward.1} parent=1 // pred_check
      _
    $region11: #{forward.1} parent=1 // pred_check_branch
      %37 = sbr.rel (0) target = $region13
    $region12: #{forward.1} parent=1 // pred_region
      %39 = vsyncadd [#allocation8], 0
      %s40 = sshll.u32 %s2, 4
      %s41 = int_to_ptr.hbm [resolvable:$true] %s40
      %s42 = sshll.u32 [#allocation7], 4
      %s43 = int_to_ptr.vmem [resolvable:$true] %s42
      %48 = dma.hbm_to_vmem [thread:$0]  %s41, 384, %s43, [#allocation8], 128, 128, 8
    $region13: #{forward.1} parent=1 // pred_fallthru
      _
    // Predicated region
    $region14: #{forward.1} parent=1 // pred_check
      _
    $region15: #{forward.1} parent=1 // pred_check_branch
      %50 = sbr.rel (0) target = $region17
    $region16: #{forward.1} parent=1 // pred_region
      %52 = vsyncadd [#allocation8], 0
      %s53 = sshll.u32 %s3, 4
      %s54 = int_to_ptr.hbm [resolvable:$true] %s53
      %s55 = sshll.u32 [#allocation9], 4
      %s56 = int_to_ptr.vmem [resolvable:$true] %s55
      %61 = dma.hbm_to_vmem [thread:$0]  %s54, 6400, %s56, [#allocation8], 128, 128, 8
    $region17: #{forward.1} parent=1 // pred_fallthru
      _
    // Predicated region
    $region18: #{forward.1} parent=1 // pred_check
      _
    $region19: #{forward.1} parent=1 // pred_check_branch
      %63 = sbr.rel (0) target = $region21
    $region20: #{forward.1} parent=1 // pred_region
      %65 = vsyncadd [#allocation11], 0
      %s67 = sshll.u32 %s4, 4
      %s68 = int_to_ptr.hbm [resolvable:$true] %s67
      %s69 = sshll.u32 [#allocation10], 4
      %s70 = int_to_ptr.vmem [resolvable:$true] %s69
      %72 = dma.hbm_to_vmem [thread:$0]  %s68, 256, %s70, [#allocation11]
    $region21: #{forward.1} parent=1 // pred_fallthru
      _
    // Predicated region
    $region22: #{forward.1} parent=1 // pred_check
      _
    $region23: #{forward.1} parent=1 // pred_check_branch
      %74 = sbr.rel (0) target = $region25
    $region24: #{forward.1} parent=1 // pred_region
      %76 = dma.done [#allocation5], 16
    $region25: #{forward.1} parent=1 // pred_fallthru
      _
    // Predicated region
    $region26: #{forward.1} parent=1 // pred_check
      _
    $region27: #{forward.1} parent=1 // pred_check_branch
      %78 = sbr.rel (0) target = $region29
    $region28: #{forward.1} parent=1 // pred_region
      %80 = dma.done [#allocation4], 384
    $region29: #{forward.1} parent=1 // pred_fallthru
      _
    // Predicated region
    $region30: #{forward.1} parent=1 // pred_check
      _
    $region31: #{forward.1} parent=1 // pred_check_branch
      %82 = sbr.rel (0) target = $region33
    $region32: #{forward.1} parent=1 // pred_region
      %84 = dma.done [#allocation8], 384
    $region33: #{forward.1} parent=1 // pred_fallthru
      _
    // Predicated region
    $region34: #{forward.1} parent=1 // pred_check
      _
    $region35: #{forward.1} parent=1 // pred_check_branch
      %86 = sbr.rel (0) target = $region37
    $region36: #{forward.1} parent=1 // pred_region
      %88 = dma.done [#allocation8], 6400
    $region37: #{forward.1} parent=1 // pred_fallthru
      _
    // Predicated region
    $region38: #{forward.1} parent=1 // pred_check
      _
    $region39: #{forward.1} parent=1 // pred_check_branch
      %90 = sbr.rel (0) target = $region41
    $region40: #{forward.1} parent=1 // pred_region
      %92 = dma.done [#allocation11], 256
    $region41: #{forward.1} parent=1 // pred_fallthru
      _
    %93 = sfence
    %s95 = sld [smem:[#allocation3]]
    %s96 = sld [smem:[#allocation3 + $0xa]]
    %s97 = scalar_lea.vmem [#allocation6], %s96
    %v98 = vld [vmem:[%s97] sm:$0x1]
    %vm99 = vcmask 253952
    %100 = vst.msk [vmem:[#allocation2] sm:$0x1] %vm99, %v98
    %s101 = scalar_lea.vmem [#allocation7], %s95
    %v102 = vld [vmem:[%s101] sm:$0x1]
    %104 = vrot.lane.b32.xlu0 %v102, 32
    %v105 = vpop.permute.xlu0 %104
    %vm107 = vcmask 516352
    %108 = vst.msk [vmem:[#allocation2] sm:$0x1] %vm107, %v105
    %s109 = sld [smem:[#allocation3 + $0x14]]
    %s110 = sld [smem:[#allocation3 + $0x1e]]
    %s111 = scalar_lea.vmem [#allocation6], %s110
    %v112 = vld [vmem:[%s111] sm:$0x1]
    %113 = vst.msk [vmem:[#allocation2 + $0x1] sm:$0x1] %vm99, %v112
    %s114 = scalar_lea.vmem [#allocation7], %s109
    %v115 = vld [vmem:[%s114] sm:$0x1]
    %117 = vrot.lane.b32.xlu0 %v115, 32
    %v118 = vpop.permute.xlu0 %117
    %120 = vst.msk [vmem:[#allocation2 + $0x1] sm:$0x1] %vm107, %v118
    %s121 = sld [smem:[#allocation3 + $0x1]]
    %s122 = sld [smem:[#allocation3 + $0xb]]
    %s123 = scalar_lea.vmem [#allocation6], %s122
    %v124 = vld [vmem:[%s123] sm:$0x1]
    %125 = vst.msk [vmem:[#allocation2 + $0x2] sm:$0x1] %vm99, %v124
    %s126 = scalar_lea.vmem [#allocation7], %s121
    %v127 = vld [vmem:[%s126] sm:$0x1]
    %129 = vrot.lane.b32.xlu0 %v127, 32
    %v130 = vpop.permute.xlu0 %129
    %132 = vst.msk [vmem:[#allocation2 + $0x2] sm:$0x1] %vm107, %v130
    %s133 = sld [smem:[#allocation3 + $0x15]]
    %s134 = sld [smem:[#allocation3 + $0x1f]]
    %s135 = scalar_lea.vmem [#allocation6], %s134
    %v136 = vld [vmem:[%s135] sm:$0x1]
    %137 = vst.msk [vmem:[#allocation2 + $0x3] sm:$0x1] %vm99, %v136
    %s138 = scalar_lea.vmem [#allocation7], %s133
    %v139 = vld [vmem:[%s138] sm:$0x1]
    %141 = vrot.lane.b32.xlu0 %v139, 32
    %v142 = vpop.permute.xlu0 %141
    %144 = vst.msk [vmem:[#allocation2 + $0x3] sm:$0x1] %vm107, %v142
    %s145 = sld [smem:[#allocation3 + $0x2]]
    %s146 = sld [smem:[#allocation3 + $0xc]]
    %s147 = scalar_lea.vmem [#allocation6], %s146
    %v148 = vld [vmem:[%s147] sm:$0x1]
    %149 = vst.msk [vmem:[#allocation2 + $0x4] sm:$0x1] %vm99, %v148
    %s150 = scalar_lea.vmem [#allocation7], %s145
    %v151 = vld [vmem:[%s150] sm:$0x1]
    %153 = vrot.lane.b32.xlu0 %v151, 32
    %v154 = vpop.permute.xlu0 %153
    %156 = vst.msk [vmem:[#allocation2 + $0x4] sm:$0x1] %vm107, %v154
    %s157 = sld [smem:[#allocation3 + $0x16]]
    %s158 = sld [smem:[#allocation3 + $0x20]]
    %s159 = scalar_lea.vmem [#allocation6], %s158
    %v160 = vld [vmem:[%s159] sm:$0x1]
    %161 = vst.msk [vmem:[#allocation2 + $0x5] sm:$0x1] %vm99, %v160
    %s162 = scalar_lea.vmem [#allocation7], %s157
    %v163 = vld [vmem:[%s162] sm:$0x1]
    %165 = vrot.lane.b32.xlu0 %v163, 32
    %v166 = vpop.permute.xlu0 %165
    %168 = vst.msk [vmem:[#allocation2 + $0x5] sm:$0x1] %vm107, %v166
    %s169 = sld [smem:[#allocation3 + $0x3]]
    %s170 = sld [smem:[#allocation3 + $0xd]]
    %s171 = scalar_lea.vmem [#allocation6], %s170
    %v172 = vld [vmem:[%s171] sm:$0x1]
    %173 = vst.msk [vmem:[#allocation2 + $0x6] sm:$0x1] %vm99, %v172
    %s174 = scalar_lea.vmem [#allocation7], %s169
    %v175 = vld [vmem:[%s174] sm:$0x1]
    %177 = vrot.lane.b32.xlu0 %v175, 32
    %v178 = vpop.permute.xlu0 %177
    %180 = vst.msk [vmem:[#allocation2 + $0x6] sm:$0x1] %vm107, %v178
    %s181 = sld [smem:[#allocation3 + $0x17]]
    %s182 = sld [smem:[#allocation3 + $0x21]]
    %s183 = scalar_lea.vmem [#allocation6], %s182
    %v184 = vld [vmem:[%s183] sm:$0x1]
    %185 = vst.msk [vmem:[#allocation2 + $0x7] sm:$0x1] %vm99, %v184
    %s186 = scalar_lea.vmem [#allocation7], %s181
    %v187 = vld [vmem:[%s186] sm:$0x1]
    %189 = vrot.lane.b32.xlu0 %v187, 32
    %v190 = vpop.permute.xlu0 %189
    %192 = vst.msk [vmem:[#allocation2 + $0x7] sm:$0x1] %vm107, %v190
    %s193 = sld [smem:[#allocation3 + $0x4]]
    %s194 = sld [smem:[#allocation3 + $0xe]]
    %s195 = scalar_lea.vmem [#allocation6], %s194
    %v196 = vld [vmem:[%s195] sm:$0x1]
    %197 = vst.msk [vmem:[#allocation2 + $0x8] sm:$0x1] %vm99, %v196
    %s198 = scalar_lea.vmem [#allocation7], %s193
    %v199 = vld [vmem:[%s198] sm:$0x1]
    %201 = vrot.lane.b32.xlu0 %v199, 32
    %v202 = vpop.permute.xlu0 %201
    %204 = vst.msk [vmem:[#allocation2 + $0x8] sm:$0x1] %vm107, %v202
    %s205 = sld [smem:[#allocation3 + $0x18]]
    %s206 = sld [smem:[#allocation3 + $0x22]]
    %s207 = scalar_lea.vmem [#allocation6], %s206
    %v208 = vld [vmem:[%s207] sm:$0x1]
    %209 = vst.msk [vmem:[#allocation2 + $0x9] sm:$0x1] %vm99, %v208
    %s210 = scalar_lea.vmem [#allocation7], %s205
    %v211 = vld [vmem:[%s210] sm:$0x1]
    %213 = vrot.lane.b32.xlu0 %v211, 32
    %v214 = vpop.permute.xlu0 %213
    %216 = vst.msk [vmem:[#allocation2 + $0x9] sm:$0x1] %vm107, %v214
    %s217 = sld [smem:[#allocation3 + $0x5]]
    %s218 = sld [smem:[#allocation3 + $0xf]]
    %s219 = scalar_lea.vmem [#allocation6], %s218
    %v220 = vld [vmem:[%s219] sm:$0x1]
    %221 = vst.msk [vmem:[#allocation2 + $0xa] sm:$0x1] %vm99, %v220
    %s222 = scalar_lea.vmem [#allocation7], %s217
    %v223 = vld [vmem:[%s222] sm:$0x1]
    %225 = vrot.lane.b32.xlu0 %v223, 32
    %v226 = vpop.permute.xlu0 %225
    %228 = vst.msk [vmem:[#allocation2 + $0xa] sm:$0x1] %vm107, %v226
    %s229 = sld [smem:[#allocation3 + $0x19]]
    %s230 = sld [smem:[#allocation3 + $0x23]]
    %s231 = scalar_lea.vmem [#allocation6], %s230
    %v232 = vld [vmem:[%s231] sm:$0x1]
    %233 = vst.msk [vmem:[#allocation2 + $0xb] sm:$0x1] %vm99, %v232
    %s234 = scalar_lea.vmem [#allocation7], %s229
    %v235 = vld [vmem:[%s234] sm:$0x1]
    %237 = vrot.lane.b32.xlu0 %v235, 32
    %v238 = vpop.permute.xlu0 %237
    %240 = vst.msk [vmem:[#allocation2 + $0xb] sm:$0x1] %vm107, %v238
    %s241 = sld [smem:[#allocation3 + $0x6]]
    %s242 = sld [smem:[#allocation3 + $0x10]]
    %s243 = scalar_lea.vmem [#allocation6], %s242
    %v244 = vld [vmem:[%s243] sm:$0x1]
    %245 = vst.msk [vmem:[#allocation2 + $0xc] sm:$0x1] %vm99, %v244
    %s246 = scalar_lea.vmem [#allocation7], %s241
    %v247 = vld [vmem:[%s246] sm:$0x1]
    %249 = vrot.lane.b32.xlu0 %v247, 32
    %v250 = vpop.permute.xlu0 %249
    %252 = vst.msk [vmem:[#allocation2 + $0xc] sm:$0x1] %vm107, %v250
    %s253 = sld [smem:[#allocation3 + $0x1a]]
    %s254 = sld [smem:[#allocation3 + $0x24]]
    %s255 = scalar_lea.vmem [#allocation6], %s254
    %v256 = vld [vmem:[%s255] sm:$0x1]
    %257 = vst.msk [vmem:[#allocation2 + $0xd] sm:$0x1] %vm99, %v256
    %s258 = scalar_lea.vmem [#allocation7], %s253
    %v259 = vld [vmem:[%s258] sm:$0x1]
    %261 = vrot.lane.b32.xlu0 %v259, 32
    %v262 = vpop.permute.xlu0 %261
    %264 = vst.msk [vmem:[#allocation2 + $0xd] sm:$0x1] %vm107, %v262
    %s265 = sld [smem:[#allocation3 + $0x7]]
    %s266 = sld [smem:[#allocation3 + $0x11]]
    %s267 = scalar_lea.vmem [#allocation6], %s266
    %v268 = vld [vmem:[%s267] sm:$0x1]
    %269 = vst.msk [vmem:[#allocation2 + $0xe] sm:$0x1] %vm99, %v268
    %s270 = scalar_lea.vmem [#allocation7], %s265
    %v271 = vld [vmem:[%s270] sm:$0x1]
    %273 = vrot.lane.b32.xlu0 %v271, 32
    %v274 = vpop.permute.xlu0 %273
    %276 = vst.msk [vmem:[#allocation2 + $0xe] sm:$0x1] %vm107, %v274
    %s277 = sld [smem:[#allocation3 + $0x1b]]
    %s278 = sld [smem:[#allocation3 + $0x25]]
    %s279 = scalar_lea.vmem [#allocation6], %s278
    %v280 = vld [vmem:[%s279] sm:$0x1]
    %281 = vst.msk [vmem:[#allocation2 + $0xf] sm:$0x1] %vm99, %v280
    %s282 = scalar_lea.vmem [#allocation7], %s277
    %v283 = vld [vmem:[%s282] sm:$0x1]
    %285 = vrot.lane.b32.xlu0 %v283, 32
    %v286 = vpop.permute.xlu0 %285
    %288 = vst.msk [vmem:[#allocation2 + $0xf] sm:$0x1] %vm107, %v286
    %s289 = sld [smem:[#allocation3 + $0x8]]
    %s290 = sld [smem:[#allocation3 + $0x12]]
    %s291 = scalar_lea.vmem [#allocation6], %s290
    %v292 = vld [vmem:[%s291] sm:$0x1]
    %293 = vst.msk [vmem:[#allocation2 + $0x10] sm:$0x1] %vm99, %v292
    %s294 = scalar_lea.vmem [#allocation7], %s289
    %v295 = vld [vmem:[%s294] sm:$0x1]
    %297 = vrot.lane.b32.xlu0 %v295, 32
    %v298 = vpop.permute.xlu0 %297
    %300 = vst.msk [vmem:[#allocation2 + $0x10] sm:$0x1] %vm107, %v298
    %s301 = sld [smem:[#allocation3 + $0x1c]]
    %s302 = sld [smem:[#allocation3 + $0x26]]
    %s303 = scalar_lea.vmem [#allocation6], %s302
    %v304 = vld [vmem:[%s303] sm:$0x1]
    %305 = vst.msk [vmem:[#allocation2 + $0x11] sm:$0x1] %vm99, %v304
    %s306 = scalar_lea.vmem [#allocation7], %s301
    %v307 = vld [vmem:[%s306] sm:$0x1]
    %309 = vrot.lane.b32.xlu0 %v307, 32
    %v310 = vpop.permute.xlu0 %309
    %312 = vst.msk [vmem:[#allocation2 + $0x11] sm:$0x1] %vm107, %v310
    %s313 = sld [smem:[#allocation3 + $0x9]]
    %s314 = sld [smem:[#allocation3 + $0x13]]
    %s315 = scalar_lea.vmem [#allocation6], %s314
    %v316 = vld [vmem:[%s315] sm:$0x1]
    %317 = vst.msk [vmem:[#allocation2 + $0x12] sm:$0x1] %vm99, %v316
    %s318 = scalar_lea.vmem [#allocation7], %s313
    %v319 = vld [vmem:[%s318] sm:$0x1]
    %321 = vrot.lane.b32.xlu0 %v319, 32
    %v322 = vpop.permute.xlu0 %321
    %324 = vst.msk [vmem:[#allocation2 + $0x12] sm:$0x1] %vm107, %v322
    %s325 = sld [smem:[#allocation3 + $0x1d]]
    %s326 = sld [smem:[#allocation3 + $0x27]]
    %s327 = scalar_lea.vmem [#allocation6], %s326
    %v328 = vld [vmem:[%s327] sm:$0x1]
    %329 = vst.msk [vmem:[#allocation2 + $0x13] sm:$0x1] %vm99, %v328
    %s330 = scalar_lea.vmem [#allocation7], %s325
    %v331 = vld [vmem:[%s330] sm:$0x1]
    %333 = vrot.lane.b32.xlu0 %v331, 32
    %v334 = vpop.permute.xlu0 %333
    %336 = vst.msk [vmem:[#allocation2 + $0x13] sm:$0x1] %vm107, %v334
    %v337 = vld [vmem:[#allocation2] sm:$0xff]
    %v338 = vld [vmem:[#allocation2 + $0x8] sm:$0xff]
    %v339 = vld [vmem:[#allocation2 + $0x10] sm:$0xf]
    %v340 = vld [vmem:[#allocation9] sm:$0xff]
    %v341 = vld [vmem:[#allocation9 + $0x8] sm:$0xff]
    %v342 = vld [vmem:[#allocation9 + $0x10] sm:$0xff]
    %v343 = vld [vmem:[#allocation9 + $0x18] sm:$0xff]
    %v344 = vld [vmem:[#allocation9 + $0x20] sm:$0xff]
    %v345 = vld [vmem:[#allocation9 + $0x28] sm:$0xff]
    %v346 = vld [vmem:[#allocation9 + $0x30] sm:$0xff]
    %v347 = vld [vmem:[#allocation9 + $0x38] sm:$0xff]
    %v348 = vpack.c.bf16 %v338, %v337
    %v349 = vpack.c.bf16 %v339, %v339
    %v350 = vld [vmem:[#allocation10] ss:$8 sm:$0x3]
    %v352 = vperm.slane %v350, 0
    %v353 = vperm.slane %v350, 1
    %v364 = vunpack.c.l.b16 %v340
    %v365 = vunpack.c.h.b16 %v340
    %v366 = vunpack.c.l.b16 %v341
    %v367 = vunpack.c.h.b16 %v341
    %v368 = vunpack.c.l.b16 %v342
    %v369 = vunpack.c.h.b16 %v342
    %v370 = vunpack.c.l.b16 %v343
    %v371 = vunpack.c.h.b16 %v343
    %v372 = vunpack.c.l.b16 %v344
    %v373 = vunpack.c.h.b16 %v344
    %v374 = vunpack.c.l.b16 %v345
    %v375 = vunpack.c.h.b16 %v345
    %v376 = vunpack.c.l.b16 %v346
    %v377 = vunpack.c.h.b16 %v346
    %v378 = vunpack.c.l.b16 %v347
    %v379 = vunpack.c.h.b16 %v347
    %v380 = vpack.c.b16 %v366, %v364
    %v381 = vpack.c.b16 %v367, %v365
    %v382 = vpack.c.b16 %v370, %v368
    %v383 = vpack.c.b16 %v371, %v369
    %v384 = vpack.c.b16 %v374, %v372
    %v385 = vpack.c.b16 %v375, %v373
    %v386 = vpack.c.b16 %v378, %v376
    %v387 = vpack.c.b16 %v379, %v377
    %vm396 = vcmask 523264
    %v398 = vsel %vm396, %v348, 0
    %v401 = vsel %vm396, %v349, 0
    %403 = vmatpush.bf16.msra.mxu0 0
    %404 = vmatpush.bf16.msra.mxu0 0
    %405 = vmatpush.bf16.msra.mxu0 0
    %406 = vmatpush.bf16.msra.mxu0 0
    %407 = vmatpush.bf16.msra.mxu0 %v386
    %408 = vmatpush.bf16.msra.mxu0 %v384
    %409 = vmatpush.bf16.msra.mxu0 %v382
    %410 = vmatpush.bf16.msra.mxu0 %v380
    %411 = vmatmul.bf16.gmra.mxu0 %v398
    %v412 = vpop.f32.mrf.mxu0
    %v413 = vadd.f32 %v352, %v412
    %v414 = vpop.f32.mrf.mxu0
    %v415 = vadd.f32 %v352, %v414
    %416 = vmatmul.bf16.gmra.mxu0 %v401
    %v417 = vpop.f32.mrf.mxu0
    %v418 = vadd.f32 %v352, %v417
    %v419 = vpop.f32.mrf.mxu0
    %420 = vdwg.mxu0
    %421 = vmatpush.bf16.msra.mxu0 0
    %422 = vmatpush.bf16.msra.mxu0 0
    %423 = vmatpush.bf16.msra.mxu0 0
    %424 = vmatpush.bf16.msra.mxu0 0
    %425 = vmatpush.bf16.msra.mxu0 %v387
    %426 = vmatpush.bf16.msra.mxu0 %v385
    %427 = vmatpush.bf16.msra.mxu0 %v383
    %428 = vmatpush.bf16.msra.mxu0 %v381
    %429 = vmatmul.bf16.gmra.mxu0 %v398
    %v430 = vpop.f32.mrf.mxu0
    %v431 = vadd.f32 %v353, %v430
    %v432 = vpop.f32.mrf.mxu0
    %v433 = vadd.f32 %v353, %v432
    %434 = vmatmul.bf16.gmra.mxu0 %v401
    %v435 = vpop.f32.mrf.mxu0
    %v436 = vadd.f32 %v353, %v435
    %v437 = vpop.f32.mrf.mxu0
    %438 = vdwg.mxu0
    %v439 = vld [vmem:[#allocation9 + $0x40] sm:$0xff]
    %v440 = vld [vmem:[#allocation9 + $0x48] sm:$0xff]
    %v441 = vld [vmem:[#allocation9 + $0x50] sm:$0xff]
    %v442 = vld [vmem:[#allocation9 + $0x58] sm:$0xff]
    %v443 = vld [vmem:[#allocation9 + $0x60] sm:$0xff]
    %v444 = vld [vmem:[#allocation9 + $0x68] sm:$0xff]
    %v445 = vld [vmem:[#allocation9 + $0x70] sm:$0xff]
    %v446 = vld [vmem:[#allocation9 + $0x78] sm:$0xff]
    %v447 = vld [vmem:[#allocation9 + $0x80] sm:$0xf]
    %v448 = vld [vmem:[#allocation9 + $0x88] sm:$0xf]
    %v449 = vld [vmem:[#allocation9 + $0x90] sm:$0xf]
    %v450 = vld [vmem:[#allocation9 + $0x98] sm:$0xf]
    %v451 = vld [vmem:[#allocation9 + $0xa0] sm:$0xf]
    %v452 = vld [vmem:[#allocation9 + $0xa8] sm:$0xf]
    %v453 = vld [vmem:[#allocation9 + $0xb0] sm:$0xf]
    %v454 = vld [vmem:[#allocation9 + $0xb8] sm:$0xf]
    %v455 = vld [vmem:[#allocation10 + $0x1] ss:$0 sm:$0xff]
    %v464 = vunpack.c.l.b16 %v439
    %v465 = vunpack.c.h.b16 %v439
    %v466 = vunpack.c.l.b16 %v440
    %v467 = vunpack.c.h.b16 %v440
    %v468 = vunpack.c.l.b16 %v441
    %v469 = vunpack.c.h.b16 %v441
    %v470 = vunpack.c.l.b16 %v442
    %v471 = vunpack.c.h.b16 %v442
    %v472 = vunpack.c.l.b16 %v443
    %v473 = vunpack.c.h.b16 %v443
    %v474 = vunpack.c.l.b16 %v444
    %v475 = vunpack.c.h.b16 %v444
    %v476 = vunpack.c.l.b16 %v445
    %v477 = vunpack.c.h.b16 %v445
    %v478 = vunpack.c.l.b16 %v446
    %v479 = vunpack.c.h.b16 %v446
    %v480 = vpack.c.b16 %v466, %v464
    %v481 = vpack.c.b16 %v467, %v465
    %v482 = vpack.c.b16 %v470, %v468
    %v483 = vpack.c.b16 %v471, %v469
    %v484 = vpack.c.b16 %v474, %v472
    %v485 = vpack.c.b16 %v475, %v473
    %v486 = vpack.c.b16 %v478, %v476
    %v487 = vpack.c.b16 %v479, %v477
    %v497 = vsel %vm396, 0, 0
    %499 = vmatpush.bf16.msra.mxu0 0
    %500 = vmatpush.bf16.msra.mxu0 0
    %501 = vmatpush.bf16.msra.mxu0 0
    %502 = vmatpush.bf16.msra.mxu0 0
    %503 = vmatpush.bf16.msra.mxu0 %v486
    %504 = vmatpush.bf16.msra.mxu0 %v484
    %505 = vmatpush.bf16.msra.mxu0 %v482
    %506 = vmatpush.bf16.msra.mxu0 %v480
    %507 = vmatmul.bf16.gmra.mxu0 %v497
    %v508 = vpop.f32.mrf.mxu0
    %v509 = vadd.f32 0.0, %v508
    %v510 = vpop.f32.mrf.mxu0
    %511 = vdwg.mxu0
    %512 = vmatpush.bf16.msra.mxu0 0
    %513 = vmatpush.bf16.msra.mxu0 0
    %514 = vmatpush.bf16.msra.mxu0 0
    %515 = vmatpush.bf16.msra.mxu0 0
    %516 = vmatpush.bf16.msra.mxu0 %v487
    %517 = vmatpush.bf16.msra.mxu0 %v485
    %518 = vmatpush.bf16.msra.mxu0 %v483
    %519 = vmatpush.bf16.msra.mxu0 %v481
    %520 = vmatmul.bf16.gmra.mxu0 %v497
    %v521 = vpop.f32.mrf.mxu0
    %v522 = vadd.f32 0.0, %v521
    %v523 = vpop.f32.mrf.mxu0
    %524 = vdwg.mxu0
    %v525 = vadd.f32 %v413, %v509
    %v526 = vadd.f32 %v431, %v522
    %v527 = vxor.u32 %v525, 2147483648
    %v528 = vxor.u32 %v526, 2147483648
    %v529 = vmul.f32 %v527, 1.442695
    %v530 = vpow.pop %v529
    %v531 = vmul.f32 %v528, 1.442695
    %v532 = vpow.pop %v531
    %v533 = vadd.f32 %v530, 1.0
    %v534 = vadd.f32 %v532, 1.0
    %v535 = vrcp.pop %v533
    %v536 = vmul.f32 %v533, %v535
    %v537 = vsub.f32 1.0, %v536
    %v538 = vmul.f32 %v535, %v537
    %v539 = vadd.f32 %v535, %v538
    %vm540 = vweird.f32 %v533
    %vm541 = vweird.f32 %v535
    %vm542 = vmor %vm540, %vm541
    %v543 = vsel %vm542, %v535, %v539
    %v544 = vand.u32 2147483647, %v533
    %vm545 = vcmp.eq.f32.partialorder %v544, 8.507059e+37
    %v546 = vand.u32 %v533, 2147483648
    %v547 = vor.u32 1.1754944e-38, %v546
    %v548 = vsel %vm545, %v547, %v543
    %v549 = vmul.f32 1.0, %v548
    %v550 = vrcp.pop %v534
    %v551 = vmul.f32 %v534, %v550
    %v552 = vsub.f32 1.0, %v551
    %v553 = vmul.f32 %v550, %v552
    %v554 = vadd.f32 %v550, %v553
    %vm555 = vweird.f32 %v534
    %vm556 = vweird.f32 %v550
    %vm557 = vmor %vm555, %vm556
    %v558 = vsel %vm557, %v550, %v554
    %v559 = vand.u32 2147483647, %v534
    %vm560 = vcmp.eq.f32.partialorder %v559, 8.507059e+37
    %v561 = vand.u32 %v534, 2147483648
    %v562 = vor.u32 1.1754944e-38, %v561
    %v563 = vsel %vm560, %v562, %v558
    %v564 = vmul.f32 1.0, %v563
    %v565 = vtanh.pop %v526
    %v566 = vmul.f32 %v549, 0.0
    %v567 = vmul.f32 %v549, %v565
    %569 = vrot.lane.b32.xlu0 %v567, 64
    %v570 = vpop.permute.xlu0 %569
    %v572 = vadd.f32 %v566, %v570
    %v573 = vtanh.pop %v572
    %v574 = vmul.f32 %v564, %v573
    %v575 = vpack.c.bf16 %v574, %v574
    %v580 = vunpack.c.l.b16 %v451
    %v581 = vunpack.c.l.b16 %v452
    %v582 = vunpack.c.l.b16 %v453
    %v583 = vunpack.c.l.b16 %v454
    %v584 = vpack.c.b16 %v581, %v580
    %v585 = vpack.c.b16 %v583, %v582
    %vm588 = vcmask 261120
    %v589 = vsel %vm588, 0, 0
    %591 = vmatpush.bf16.msra.mxu0 0
    %592 = vmatpush.bf16.msra.mxu0 0
    %593 = vmatpush.bf16.msra.mxu0 0
    %594 = vmatpush.bf16.msra.mxu0 0
    %595 = vmatpush.bf16.msra.mxu0 0
    %596 = vmatpush.bf16.msra.mxu0 0
    %597 = vmatpush.bf16.msra.mxu0 %v585
    %598 = vmatpush.bf16.msra.mxu0 %v584
    %599 = vmatmul.bf16.gmra.mxu0 %v589
    %v600 = vpop.f32.mrf.mxu0
    %v601 = vadd.f32 0.0, %v600
    %v602 = vpop.f32.mrf.mxu0
    %603 = vdwg.mxu0
    %605 = vrot.lane.b32.xlu0 %v575, 64
    %v606 = vpop.permute.xlu0 %605
    %v611 = vunpack.c.l.b16 %v447
    %v612 = vunpack.c.l.b16 %v448
    %v613 = vunpack.c.l.b16 %v449
    %v614 = vunpack.c.l.b16 %v450
    %v615 = vpack.c.b16 %v612, %v611
    %v616 = vpack.c.b16 %v614, %v613
    %v620 = vsel %vm588, %v606, 0
    %622 = vmatpush.bf16.msra.mxu0 0
    %623 = vmatpush.bf16.msra.mxu0 0
    %624 = vmatpush.bf16.msra.mxu0 0
    %625 = vmatpush.bf16.msra.mxu0 0
    %626 = vmatpush.bf16.msra.mxu0 0
    %627 = vmatpush.bf16.msra.mxu0 0
    %628 = vmatpush.bf16.msra.mxu0 %v616
    %629 = vmatpush.bf16.msra.mxu0 %v615
    %630 = vmatmul.bf16.gmra.mxu0 %v620
    %v631 = vpop.f32.mrf.mxu0
    %v632 = vadd.f32 %v601, %v631
    %v633 = vpop.f32.mrf.mxu0
    %634 = vdwg.mxu0
    %v635 = vadd.f32 %v632, %v455
    %v636 = vxor.u32 %v635, 2147483648
    %v637 = vmul.f32 %v636, 1.442695
    %v638 = vpow.pop %v637
    %v639 = vadd.f32 %v638, 1.0
    %v640 = vrcp.pop %v639
    %v641 = vmul.f32 %v639, %v640
    %v642 = vsub.f32 1.0, %v641
    %v643 = vmul.f32 %v640, %v642
    %v644 = vadd.f32 %v640, %v643
    %vm645 = vweird.f32 %v639
    %vm646 = vweird.f32 %v640
    %vm647 = vmor %vm645, %vm646
    %v648 = vsel %vm647, %v640, %v644
    %v649 = vand.u32 2147483647, %v639
    %vm650 = vcmp.eq.f32.partialorder %v649, 8.507059e+37
    %v651 = vand.u32 %v639, 2147483648
    %v652 = vor.u32 1.1754944e-38, %v651
    %v653 = vsel %vm650, %v652, %v648
    %v654 = vmul.f32 1.0, %v653
    %v655 = vtanh.pop %v635
    %v656 = vmul.f32 %v654, 0.0
    %658 = vrot.lane.b32.xlu0 %v655, 64
    %v659 = vpop.permute.xlu0 %658
    %v661 = vmul.f32 %v654, %v659
    %663 = vrot.lane.b32.xlu0 %v661, 32
    %v664 = vpop.permute.xlu0 %663
    %v666 = vadd.f32 %v656, %v664
    %v667 = vtanh.pop %v666
    %669 = vrot.lane.b32.xlu0 %v667, 64
    %v670 = vpop.permute.xlu0 %669
    %v672 = vmul.f32 %v654, %v670
    %v673 = vsel %vm396, %v606, 0
    %675 = vmatpush.bf16.msra.mxu0 0
    %676 = vmatpush.bf16.msra.mxu0 0
    %677 = vmatpush.bf16.msra.mxu0 0
    %678 = vmatpush.bf16.msra.mxu0 0
    %679 = vmatpush.bf16.msra.mxu0 %v486
    %680 = vmatpush.bf16.msra.mxu0 %v484
    %681 = vmatpush.bf16.msra.mxu0 %v482
    %682 = vmatpush.bf16.msra.mxu0 %v480
    %683 = vmatmul.bf16.gmra.mxu0 %v673
    %v684 = vpop.f32.mrf.mxu0
    %v685 = vadd.f32 0.0, %v684
    %v686 = vpop.f32.mrf.mxu0
    %687 = vdwg.mxu0
    %688 = vmatpush.bf16.msra.mxu0 0
    %689 = vmatpush.bf16.msra.mxu0 0
    %690 = vmatpush.bf16.msra.mxu0 0
    %691 = vmatpush.bf16.msra.mxu0 0
    %692 = vmatpush.bf16.msra.mxu0 %v487
    %693 = vmatpush.bf16.msra.mxu0 %v485
    %694 = vmatpush.bf16.msra.mxu0 %v483
    %695 = vmatpush.bf16.msra.mxu0 %v481
    %696 = vmatmul.bf16.gmra.mxu0 %v673
    %v697 = vpop.f32.mrf.mxu0
    %v698 = vadd.f32 0.0, %v697
    %v699 = vpop.f32.mrf.mxu0
    %700 = vdwg.mxu0
    %v703 = vrot.slane %v685, 6
    %v704 = vrot.slane %v698, 6
    %v707 = vadd.f32 %v413, %v703
    %v708 = vadd.f32 %v431, %v704
    %v709 = vxor.u32 %v707, 2147483648
    %v710 = vxor.u32 %v708, 2147483648
    %v711 = vmul.f32 %v709, 1.442695
    %v712 = vpow.pop %v711
    %v713 = vmul.f32 %v710, 1.442695
    %v714 = vpow.pop %v713
    %v715 = vadd.f32 %v712, 1.0
    %v716 = vadd.f32 %v714, 1.0
    %v717 = vrcp.pop %v715
    %v718 = vmul.f32 %v715, %v717
    %v719 = vsub.f32 1.0, %v718
    %v720 = vmul.f32 %v717, %v719
    %v721 = vadd.f32 %v717, %v720
    %vm722 = vweird.f32 %v715
    %vm723 = vweird.f32 %v717
    %vm724 = vmor %vm722, %vm723
    %v725 = vsel %vm724, %v717, %v721
    %v726 = vand.u32 2147483647, %v715
    %vm727 = vcmp.eq.f32.partialorder %v726, 8.507059e+37
    %v728 = vand.u32 %v715, 2147483648
    %v729 = vor.u32 1.1754944e-38, %v728
    %v730 = vsel %vm727, %v729, %v725
    %v731 = vmul.f32 1.0, %v730
    %v732 = vrcp.pop %v716
    %v733 = vmul.f32 %v716, %v732
    %v734 = vsub.f32 1.0, %v733
    %v735 = vmul.f32 %v732, %v734
    %v736 = vadd.f32 %v732, %v735
    %vm737 = vweird.f32 %v716
    %vm738 = vweird.f32 %v732
    %vm739 = vmor %vm737, %vm738
    %v740 = vsel %vm739, %v732, %v736
    %v741 = vand.u32 2147483647, %v716
    %vm742 = vcmp.eq.f32.partialorder %v741, 8.507059e+37
    %v743 = vand.u32 %v716, 2147483648
    %v744 = vor.u32 1.1754944e-38, %v743
    %v745 = vsel %vm742, %v744, %v740
    %v746 = vmul.f32 1.0, %v745
    %v747 = vtanh.pop %v708
    %v749 = vrot.slane %v572, 6
    %v751 = vmul.f32 %v731, %v749
    %v752 = vmul.f32 %v731, %v747
    %754 = vrot.lane.b32.xlu0 %v752, 64
    %v755 = vpop.permute.xlu0 %754
    %v757 = vadd.f32 %v751, %v755
    %v758 = vtanh.pop %v757
    %v759 = vmul.f32 %v746, %v758
    %v760 = vpack.c.bf16 %v759, %v759
    %v761 = vpack.c.bf16 %v672, %v672
    %763 = vrot.lane.b32.xlu0 %v761, 32
    %v764 = vpop.permute.xlu0 %763
    %v766 = vsel %vm588, %v764, 0
    %768 = vmatpush.bf16.msra.mxu0 0
    %769 = vmatpush.bf16.msra.mxu0 0
    %770 = vmatpush.bf16.msra.mxu0 0
    %771 = vmatpush.bf16.msra.mxu0 0
    %772 = vmatpush.bf16.msra.mxu0 0
    %773 = vmatpush.bf16.msra.mxu0 0
    %774 = vmatpush.bf16.msra.mxu0 %v585
    %775 = vmatpush.bf16.msra.mxu0 %v584
    %776 = vmatmul.bf16.gmra.mxu0 %v766
    %v777 = vpop.f32.mrf.mxu0
    %v778 = vadd.f32 0.0, %v777
    %v779 = vpop.f32.mrf.mxu0
    %780 = vdwg.mxu0
    %v782 = vrot.slane %v760, 1
    %783 = vrot.lane.b32.xlu0 %v782, 64
    %v784 = vpop.permute.xlu0 %783
    %v786 = vsel %vm588, %v784, 0
    %788 = vmatpush.bf16.msra.mxu0 0
    %789 = vmatpush.bf16.msra.mxu0 0
    %790 = vmatpush.bf16.msra.mxu0 0
    %791 = vmatpush.bf16.msra.mxu0 0
    %792 = vmatpush.bf16.msra.mxu0 0
    %793 = vmatpush.bf16.msra.mxu0 0
    %794 = vmatpush.bf16.msra.mxu0 %v616
    %795 = vmatpush.bf16.msra.mxu0 %v615
    %796 = vmatmul.bf16.gmra.mxu0 %v786
    %v797 = vpop.f32.mrf.mxu0
    %v798 = vadd.f32 %v778, %v797
    %v799 = vpop.f32.mrf.mxu0
    %800 = vdwg.mxu0
    %v801 = vadd.f32 %v798, %v455
    %v802 = vxor.u32 %v801, 2147483648
    %v803 = vmul.f32 %v802, 1.442695
    %v804 = vpow.pop %v803
    %v805 = vadd.f32 %v804, 1.0
    %v806 = vrcp.pop %v805
    %v807 = vmul.f32 %v805, %v806
    %v808 = vsub.f32 1.0, %v807
    %v809 = vmul.f32 %v806, %v808
    %v810 = vadd.f32 %v806, %v809
    %vm811 = vweird.f32 %v805
    %vm812 = vweird.f32 %v806
    %vm813 = vmor %vm811, %vm812
    %v814 = vsel %vm813, %v806, %v810
    %v815 = vand.u32 2147483647, %v805
    %vm816 = vcmp.eq.f32.partialorder %v815, 8.507059e+37
    %v817 = vand.u32 %v805, 2147483648
    %v818 = vor.u32 1.1754944e-38, %v817
    %v819 = vsel %vm816, %v818, %v814
    %v820 = vmul.f32 1.0, %v819
    %v821 = vtanh.pop %v801
    %v822 = vmul.f32 %v820, %v666
    %824 = vrot.lane.b32.xlu0 %v821, 64
    %v825 = vpop.permute.xlu0 %824
    %v827 = vmul.f32 %v820, %v825
    %829 = vrot.lane.b32.xlu0 %v827, 32
    %v830 = vpop.permute.xlu0 %829
    %v832 = vadd.f32 %v822, %v830
    %v833 = vtanh.pop %v832
    %835 = vrot.lane.b32.xlu0 %v833, 64
    %v836 = vpop.permute.xlu0 %835
    %v838 = vmul.f32 %v820, %v836
    %v839 = vsel %vm396, %v784, 0
    %841 = vmatpush.bf16.msra.mxu0 0
    %842 = vmatpush.bf16.msra.mxu0 0
    %843 = vmatpush.bf16.msra.mxu0 0
    %844 = vmatpush.bf16.msra.mxu0 0
    %845 = vmatpush.bf16.msra.mxu0 %v486
    %846 = vmatpush.bf16.msra.mxu0 %v484
    %847 = vmatpush.bf16.msra.mxu0 %v482
    %848 = vmatpush.bf16.msra.mxu0 %v480
    %849 = vmatmul.bf16.gmra.mxu0 %v839
    %v850 = vpop.f32.mrf.mxu0
    %v851 = vadd.f32 0.0, %v850
    %v852 = vpop.f32.mrf.mxu0
    %853 = vdwg.mxu0
    %854 = vmatpush.bf16.msra.mxu0 0
    %855 = vmatpush.bf16.msra.mxu0 0
    %856 = vmatpush.bf16.msra.mxu0 0
    %857 = vmatpush.bf16.msra.mxu0 0
    %858 = vmatpush.bf16.msra.mxu0 %v487
    %859 = vmatpush.bf16.msra.mxu0 %v485
    %860 = vmatpush.bf16.msra.mxu0 %v483
    %861 = vmatpush.bf16.msra.mxu0 %v481
    %862 = vmatmul.bf16.gmra.mxu0 %v839
    %v863 = vpop.f32.mrf.mxu0
    %v864 = vadd.f32 0.0, %v863
    %v865 = vpop.f32.mrf.mxu0
    %866 = vdwg.mxu0
    %v869 = vrot.slane %v851, 4
    %v870 = vrot.slane %v864, 4
    %v873 = vadd.f32 %v413, %v869
    %v874 = vadd.f32 %v431, %v870
    %v875 = vxor.u32 %v873, 2147483648
    %v876 = vxor.u32 %v874, 2147483648
    %v877 = vmul.f32 %v875, 1.442695
    %v878 = vpow.pop %v877
    %v879 = vmul.f32 %v876, 1.442695
    %v880 = vpow.pop %v879
    %v881 = vadd.f32 %v878, 1.0
    %v882 = vadd.f32 %v880, 1.0
    %v883 = vrcp.pop %v881
    %v884 = vmul.f32 %v881, %v883
    %v885 = vsub.f32 1.0, %v884
    %v886 = vmul.f32 %v883, %v885
    %v887 = vadd.f32 %v883, %v886
    %vm888 = vweird.f32 %v881
    %vm889 = vweird.f32 %v883
    %vm890 = vmor %vm888, %vm889
    %v891 = vsel %vm890, %v883, %v887
    %v892 = vand.u32 2147483647, %v881
    %vm893 = vcmp.eq.f32.partialorder %v892, 8.507059e+37
    %v894 = vand.u32 %v881, 2147483648
    %v895 = vor.u32 1.1754944e-38, %v894
    %v896 = vsel %vm893, %v895, %v891
    %v897 = vmul.f32 1.0, %v896
    %v898 = vrcp.pop %v882
    %v899 = vmul.f32 %v882, %v898
    %v900 = vsub.f32 1.0, %v899
    %v901 = vmul.f32 %v898, %v900
    %v902 = vadd.f32 %v898, %v901
    %vm903 = vweird.f32 %v882
    %vm904 = vweird.f32 %v898
    %vm905 = vmor %vm903, %vm904
    %v906 = vsel %vm905, %v898, %v902
    %v907 = vand.u32 2147483647, %v882
    %vm908 = vcmp.eq.f32.partialorder %v907, 8.507059e+37
    %v909 = vand.u32 %v882, 2147483648
    %v910 = vor.u32 1.1754944e-38, %v909
    %v911 = vsel %vm908, %v910, %v906
    %v912 = vmul.f32 1.0, %v911
    %v913 = vtanh.pop %v874
    %v915 = vrot.slane %v757, 6
    %v917 = vmul.f32 %v897, %v915
    %v918 = vmul.f32 %v897, %v913
    %920 = vrot.lane.b32.xlu0 %v918, 64
    %v921 = vpop.permute.xlu0 %920
    %v923 = vadd.f32 %v917, %v921
    %v924 = vtanh.pop %v923
    %v925 = vmul.f32 %v912, %v924
    %v926 = vpack.c.bf16 %v925, %v925
    %v927 = vpack.c.bf16 %v838, %v838
    %929 = vrot.lane.b32.xlu0 %v927, 32
    %v930 = vpop.permute.xlu0 %929
    %v932 = vsel %vm588, %v930, 0
    %934 = vmatpush.bf16.msra.mxu0 0
    %935 = vmatpush.bf16.msra.mxu0 0
    %936 = vmatpush.bf16.msra.mxu0 0
    %937 = vmatpush.bf16.msra.mxu0 0
    %938 = vmatpush.bf16.msra.mxu0 0
    %939 = vmatpush.bf16.msra.mxu0 0
    %940 = vmatpush.bf16.msra.mxu0 %v585
    %941 = vmatpush.bf16.msra.mxu0 %v584
    %942 = vmatmul.bf16.gmra.mxu0 %v932
    %v943 = vpop.f32.mrf.mxu0
    %v944 = vadd.f32 0.0, %v943
    %v945 = vpop.f32.mrf.mxu0
    %946 = vdwg.mxu0
    %v948 = vrot.slane %v926, 2
    %949 = vrot.lane.b32.xlu0 %v948, 64
    %v950 = vpop.permute.xlu0 %949
    %v952 = vsel %vm588, %v950, 0
    %954 = vmatpush.bf16.msra.mxu0 0
    %955 = vmatpush.bf16.msra.mxu0 0
    %956 = vmatpush.bf16.msra.mxu0 0
    %957 = vmatpush.bf16.msra.mxu0 0
    %958 = vmatpush.bf16.msra.mxu0 0
    %959 = vmatpush.bf16.msra.mxu0 0
    %960 = vmatpush.bf16.msra.mxu0 %v616
    %961 = vmatpush.bf16.msra.mxu0 %v615
    %962 = vmatmul.bf16.gmra.mxu0 %v952
    %v963 = vpop.f32.mrf.mxu0
    %v964 = vadd.f32 %v944, %v963
    %v965 = vpop.f32.mrf.mxu0
    %966 = vdwg.mxu0
    %v967 = vadd.f32 %v964, %v455
    %v968 = vxor.u32 %v967, 2147483648
    %v969 = vmul.f32 %v968, 1.442695
    %v970 = vpow.pop %v969
    %v971 = vadd.f32 %v970, 1.0
    %v972 = vrcp.pop %v971
    %v973 = vmul.f32 %v971, %v972
    %v974 = vsub.f32 1.0, %v973
    %v975 = vmul.f32 %v972, %v974
    %v976 = vadd.f32 %v972, %v975
    %vm977 = vweird.f32 %v971
    %vm978 = vweird.f32 %v972
    %vm979 = vmor %vm977, %vm978
    %v980 = vsel %vm979, %v972, %v976
    %v981 = vand.u32 2147483647, %v971
    %vm982 = vcmp.eq.f32.partialorder %v981, 8.507059e+37
    %v983 = vand.u32 %v971, 2147483648
    %v984 = vor.u32 1.1754944e-38, %v983
    %v985 = vsel %vm982, %v984, %v980
    %v986 = vmul.f32 1.0, %v985
    %v987 = vtanh.pop %v967
    %v988 = vmul.f32 %v986, %v832
    %990 = vrot.lane.b32.xlu0 %v987, 64
    %v991 = vpop.permute.xlu0 %990
    %v993 = vmul.f32 %v986, %v991
    %995 = vrot.lane.b32.xlu0 %v993, 32
    %v996 = vpop.permute.xlu0 %995
    %v998 = vadd.f32 %v988, %v996
    %v999 = vtanh.pop %v998
    %1001 = vrot.lane.b32.xlu0 %v999, 64
    %v1002 = vpop.permute.xlu0 %1001
    %v1004 = vmul.f32 %v986, %v1002
    %v1005 = vsel %vm396, %v950, 0
    %1007 = vmatpush.bf16.msra.mxu0 0
    %1008 = vmatpush.bf16.msra.mxu0 0
    %1009 = vmatpush.bf16.msra.mxu0 0
    %1010 = vmatpush.bf16.msra.mxu0 0
    %1011 = vmatpush.bf16.msra.mxu0 %v486
    %1012 = vmatpush.bf16.msra.mxu0 %v484
    %1013 = vmatpush.bf16.msra.mxu0 %v482
    %1014 = vmatpush.bf16.msra.mxu0 %v480
    %1015 = vmatmul.bf16.gmra.mxu0 %v1005
    %v1016 = vpop.f32.mrf.mxu0
    %v1017 = vadd.f32 0.0, %v1016
    %v1018 = vpop.f32.mrf.mxu0
    %1019 = vdwg.mxu0
    %1020 = vmatpush.bf16.msra.mxu0 0
    %1021 = vmatpush.bf16.msra.mxu0 0
    %1022 = vmatpush.bf16.msra.mxu0 0
    %1023 = vmatpush.bf16.msra.mxu0 0
    %1024 = vmatpush.bf16.msra.mxu0 %v487
    %1025 = vmatpush.bf16.msra.mxu0 %v485
    %1026 = vmatpush.bf16.msra.mxu0 %v483
    %1027 = vmatpush.bf16.msra.mxu0 %v481
    %1028 = vmatmul.bf16.gmra.mxu0 %v1005
    %v1029 = vpop.f32.mrf.mxu0
    %v1030 = vadd.f32 0.0, %v1029
    %v1031 = vpop.f32.mrf.mxu0
    %1032 = vdwg.mxu0
    %v1035 = vrot.slane %v1017, 2
    %v1036 = vrot.slane %v1030, 2
    %v1039 = vadd.f32 %v413, %v1035
    %v1040 = vadd.f32 %v431, %v1036
    %v1041 = vxor.u32 %v1039, 2147483648
    %v1042 = vxor.u32 %v1040, 2147483648
    %v1043 = vmul.f32 %v1041, 1.442695
    %v1044 = vpow.pop %v1043
    %v1045 = vmul.f32 %v1042, 1.442695
    %v1046 = vpow.pop %v1045
    %v1047 = vadd.f32 %v1044, 1.0
    %v1048 = vadd.f32 %v1046, 1.0
    %v1049 = vrcp.pop %v1047
    %v1050 = vmul.f32 %v1047, %v1049
    %v1051 = vsub.f32 1.0, %v1050
    %v1052 = vmul.f32 %v1049, %v1051
    %v1053 = vadd.f32 %v1049, %v1052
    %vm1054 = vweird.f32 %v1047
    %vm1055 = vweird.f32 %v1049
    %vm1056 = vmor %vm1054, %vm1055
    %v1057 = vsel %vm1056, %v1049, %v1053
    %v1058 = vand.u32 2147483647, %v1047
    %vm1059 = vcmp.eq.f32.partialorder %v1058, 8.507059e+37
    %v1060 = vand.u32 %v1047, 2147483648
    %v1061 = vor.u32 1.1754944e-38, %v1060
    %v1062 = vsel %vm1059, %v1061, %v1057
    %v1063 = vmul.f32 1.0, %v1062
    %v1064 = vrcp.pop %v1048
    %v1065 = vmul.f32 %v1048, %v1064
    %v1066 = vsub.f32 1.0, %v1065
    %v1067 = vmul.f32 %v1064, %v1066
    %v1068 = vadd.f32 %v1064, %v1067
    %vm1069 = vweird.f32 %v1048
    %vm1070 = vweird.f32 %v1064
    %vm1071 = vmor %vm1069, %vm1070
    %v1072 = vsel %vm1071, %v1064, %v1068
    %v1073 = vand.u32 2147483647, %v1048
    %vm1074 = vcmp.eq.f32.partialorder %v1073, 8.507059e+37
    %v1075 = vand.u32 %v1048, 2147483648
    %v1076 = vor.u32 1.1754944e-38, %v1075
    %v1077 = vsel %vm1074, %v1076, %v1072
    %v1078 = vmul.f32 1.0, %v1077
    %v1079 = vtanh.pop %v1040
    %v1081 = vrot.slane %v923, 6
    %v1083 = vmul.f32 %v1063, %v1081
    %v1084 = vmul.f32 %v1063, %v1079
    %1086 = vrot.lane.b32.xlu0 %v1084, 64
    %v1087 = vpop.permute.xlu0 %1086
    %v1089 = vadd.f32 %v1083, %v1087
    %v1090 = vtanh.pop %v1089
    %v1091 = vmul.f32 %v1078, %v1090
    %v1092 = vpack.c.bf16 %v1091, %v1091
    %v1093 = vpack.c.bf16 %v1004, %v1004
    %1095 = vrot.lane.b32.xlu0 %v1093, 32
    %v1096 = vpop.permute.xlu0 %1095
    %v1098 = vsel %vm588, %v1096, 0
    %1100 = vmatpush.bf16.msra.mxu0 0
    %1101 = vmatpush.bf16.msra.mxu0 0
    %1102 = vmatpush.bf16.msra.mxu0 0
    %1103 = vmatpush.bf16.msra.mxu0 0
    %1104 = vmatpush.bf16.msra.mxu0 0
    %1105 = vmatpush.bf16.msra.mxu0 0
    %1106 = vmatpush.bf16.msra.mxu0 %v585
    %1107 = vmatpush.bf16.msra.mxu0 %v584
    %1108 = vmatmul.bf16.gmra.mxu0 %v1098
    %v1109 = vpop.f32.mrf.mxu0
    %v1110 = vadd.f32 0.0, %v1109
    %v1111 = vpop.f32.mrf.mxu0
    %1112 = vdwg.mxu0
    %v1114 = vrot.slane %v1092, 3
    %1115 = vrot.lane.b32.xlu0 %v1114, 64
    %v1116 = vpop.permute.xlu0 %1115
    %v1118 = vsel %vm588, %v1116, 0
    %1120 = vmatpush.bf16.msra.mxu0 0
    %1121 = vmatpush.bf16.msra.mxu0 0
    %1122 = vmatpush.bf16.msra.mxu0 0
    %1123 = vmatpush.bf16.msra.mxu0 0
    %1124 = vmatpush.bf16.msra.mxu0 0
    %1125 = vmatpush.bf16.msra.mxu0 0
    %1126 = vmatpush.bf16.msra.mxu0 %v616
    %1127 = vmatpush.bf16.msra.mxu0 %v615
    %1128 = vmatmul.bf16.gmra.mxu0 %v1118
    %v1129 = vpop.f32.mrf.mxu0
    %v1130 = vadd.f32 %v1110, %v1129
    %v1131 = vpop.f32.mrf.mxu0
    %1132 = vdwg.mxu0
    %v1133 = vadd.f32 %v1130, %v455
    %v1134 = vxor.u32 %v1133, 2147483648
    %v1135 = vmul.f32 %v1134, 1.442695
    %v1136 = vpow.pop %v1135
    %v1137 = vadd.f32 %v1136, 1.0
    %v1138 = vrcp.pop %v1137
    %v1139 = vmul.f32 %v1137, %v1138
    %v1140 = vsub.f32 1.0, %v1139
    %v1141 = vmul.f32 %v1138, %v1140
    %v1142 = vadd.f32 %v1138, %v1141
    %vm1143 = vweird.f32 %v1137
    %vm1144 = vweird.f32 %v1138
    %vm1145 = vmor %vm1143, %vm1144
    %v1146 = vsel %vm1145, %v1138, %v1142
    %v1147 = vand.u32 2147483647, %v1137
    %vm1148 = vcmp.eq.f32.partialorder %v1147, 8.507059e+37
    %v1149 = vand.u32 %v1137, 2147483648
    %v1150 = vor.u32 1.1754944e-38, %v1149
    %v1151 = vsel %vm1148, %v1150, %v1146
    %v1152 = vmul.f32 1.0, %v1151
    %v1153 = vtanh.pop %v1133
    %v1154 = vmul.f32 %v1152, %v998
    %1156 = vrot.lane.b32.xlu0 %v1153, 64
    %v1157 = vpop.permute.xlu0 %1156
    %v1159 = vmul.f32 %v1152, %v1157
    %1161 = vrot.lane.b32.xlu0 %v1159, 32
    %v1162 = vpop.permute.xlu0 %1161
    %v1164 = vadd.f32 %v1154, %v1162
    %v1165 = vtanh.pop %v1164
    %1167 = vrot.lane.b32.xlu0 %v1165, 64
    %v1168 = vpop.permute.xlu0 %1167
    %v1170 = vmul.f32 %v1152, %v1168
    %v1171 = vsel %vm396, %v1116, 0
    %1173 = vmatpush.bf16.msra.mxu0 0
    %1174 = vmatpush.bf16.msra.mxu0 0
    %1175 = vmatpush.bf16.msra.mxu0 0
    %1176 = vmatpush.bf16.msra.mxu0 0
    %1177 = vmatpush.bf16.msra.mxu0 %v486
    %1178 = vmatpush.bf16.msra.mxu0 %v484
    %1179 = vmatpush.bf16.msra.mxu0 %v482
    %1180 = vmatpush.bf16.msra.mxu0 %v480
    %1181 = vmatmul.bf16.gmra.mxu0 %v1171
    %v1182 = vpop.f32.mrf.mxu0
    %v1183 = vadd.f32 0.0, %v1182
    %v1184 = vpop.f32.mrf.mxu0
    %1185 = vdwg.mxu0
    %1186 = vmatpush.bf16.msra.mxu0 0
    %1187 = vmatpush.bf16.msra.mxu0 0
    %1188 = vmatpush.bf16.msra.mxu0 0
    %1189 = vmatpush.bf16.msra.mxu0 0
    %1190 = vmatpush.bf16.msra.mxu0 %v487
    %1191 = vmatpush.bf16.msra.mxu0 %v485
    %1192 = vmatpush.bf16.msra.mxu0 %v483
    %1193 = vmatpush.bf16.msra.mxu0 %v481
    %1194 = vmatmul.bf16.gmra.mxu0 %v1171
    %v1195 = vpop.f32.mrf.mxu0
    %v1196 = vadd.f32 0.0, %v1195
    %v1197 = vpop.f32.mrf.mxu0
    %1198 = vdwg.mxu0
    %v1199 = vadd.f32 %v415, %v1183
    %v1200 = vadd.f32 %v433, %v1196
    %v1201 = vxor.u32 %v1199, 2147483648
    %v1202 = vxor.u32 %v1200, 2147483648
    %v1203 = vmul.f32 %v1201, 1.442695
    %v1204 = vpow.pop %v1203
    %v1205 = vmul.f32 %v1202, 1.442695
    %v1206 = vpow.pop %v1205
    %v1207 = vadd.f32 %v1204, 1.0
    %v1208 = vadd.f32 %v1206, 1.0
    %v1209 = vrcp.pop %v1207
    %v1210 = vmul.f32 %v1207, %v1209
    %v1211 = vsub.f32 1.0, %v1210
    %v1212 = vmul.f32 %v1209, %v1211
    %v1213 = vadd.f32 %v1209, %v1212
    %vm1214 = vweird.f32 %v1207
    %vm1215 = vweird.f32 %v1209
    %vm1216 = vmor %vm1214, %vm1215
    %v1217 = vsel %vm1216, %v1209, %v1213
    %v1218 = vand.u32 2147483647, %v1207
    %vm1219 = vcmp.eq.f32.partialorder %v1218, 8.507059e+37
    %v1220 = vand.u32 %v1207, 2147483648
    %v1221 = vor.u32 1.1754944e-38, %v1220
    %v1222 = vsel %vm1219, %v1221, %v1217
    %v1223 = vmul.f32 1.0, %v1222
    %v1224 = vrcp.pop %v1208
    %v1225 = vmul.f32 %v1208, %v1224
    %v1226 = vsub.f32 1.0, %v1225
    %v1227 = vmul.f32 %v1224, %v1226
    %v1228 = vadd.f32 %v1224, %v1227
    %vm1229 = vweird.f32 %v1208
    %vm1230 = vweird.f32 %v1224
    %vm1231 = vmor %vm1229, %vm1230
    %v1232 = vsel %vm1231, %v1224, %v1228
    %v1233 = vand.u32 2147483647, %v1208
    %vm1234 = vcmp.eq.f32.partialorder %v1233, 8.507059e+37
    %v1235 = vand.u32 %v1208, 2147483648
    %v1236 = vor.u32 1.1754944e-38, %v1235
    %v1237 = vsel %vm1234, %v1236, %v1232
    %v1238 = vmul.f32 1.0, %v1237
    %v1239 = vtanh.pop %v1200
    %v1241 = vrot.slane %v1089, 6
    %v1243 = vmul.f32 %v1223, %v1241
    %v1244 = vmul.f32 %v1223, %v1239
    %1246 = vrot.lane.b32.xlu0 %v1244, 64
    %v1247 = vpop.permute.xlu0 %1246
    %v1249 = vadd.f32 %v1243, %v1247
    %v1250 = vtanh.pop %v1249
    %v1251 = vmul.f32 %v1238, %v1250
    %v1252 = vpack.c.bf16 %v1251, %v1251
    %v1253 = vpack.c.bf16 %v1170, %v1170
    %1255 = vrot.lane.b32.xlu0 %v1253, 32
    %v1256 = vpop.permute.xlu0 %1255
    %v1258 = vsel %vm588, %v1256, 0
    %1260 = vmatpush.bf16.msra.mxu0 0
    %1261 = vmatpush.bf16.msra.mxu0 0
    %1262 = vmatpush.bf16.msra.mxu0 0
    %1263 = vmatpush.bf16.msra.mxu0 0
    %1264 = vmatpush.bf16.msra.mxu0 0
    %1265 = vmatpush.bf16.msra.mxu0 0
    %1266 = vmatpush.bf16.msra.mxu0 %v585
    %1267 = vmatpush.bf16.msra.mxu0 %v584
    %1268 = vmatmul.bf16.gmra.mxu0 %v1258
    %v1269 = vpop.f32.mrf.mxu0
    %v1270 = vadd.f32 0.0, %v1269
    %v1271 = vpop.f32.mrf.mxu0
    %1272 = vdwg.mxu0
    %1274 = vrot.lane.b32.xlu0 %v1252, 64
    %v1275 = vpop.permute.xlu0 %1274
    %v1277 = vsel %vm588, %v1275, 0
    %1279 = vmatpush.bf16.msra.mxu0 0
    %1280 = vmatpush.bf16.msra.mxu0 0
    %1281 = vmatpush.bf16.msra.mxu0 0
    %1282 = vmatpush.bf16.msra.mxu0 0
    %1283 = vmatpush.bf16.msra.mxu0 0
    %1284 = vmatpush.bf16.msra.mxu0 0
    %1285 = vmatpush.bf16.msra.mxu0 %v616
    %1286 = vmatpush.bf16.msra.mxu0 %v615
    %1287 = vmatmul.bf16.gmra.mxu0 %v1277
    %v1288 = vpop.f32.mrf.mxu0
    %v1289 = vadd.f32 %v1270, %v1288
    %v1290 = vpop.f32.mrf.mxu0
    %1291 = vdwg.mxu0
    %v1292 = vadd.f32 %v1289, %v455
    %v1293 = vxor.u32 %v1292, 2147483648
    %v1294 = vmul.f32 %v1293, 1.442695
    %v1295 = vpow.pop %v1294
    %v1296 = vadd.f32 %v1295, 1.0
    %v1297 = vrcp.pop %v1296
    %v1298 = vmul.f32 %v1296, %v1297
    %v1299 = vsub.f32 1.0, %v1298
    %v1300 = vmul.f32 %v1297, %v1299
    %v1301 = vadd.f32 %v1297, %v1300
    %vm1302 = vweird.f32 %v1296
    %vm1303 = vweird.f32 %v1297
    %vm1304 = vmor %vm1302, %vm1303
    %v1305 = vsel %vm1304, %v1297, %v1301
    %v1306 = vand.u32 2147483647, %v1296
    %vm1307 = vcmp.eq.f32.partialorder %v1306, 8.507059e+37
    %v1308 = vand.u32 %v1296, 2147483648
    %v1309 = vor.u32 1.1754944e-38, %v1308
    %v1310 = vsel %vm1307, %v1309, %v1305
    %v1311 = vmul.f32 1.0, %v1310
    %v1312 = vtanh.pop %v1292
    %v1313 = vmul.f32 %v1311, %v1164
    %1315 = vrot.lane.b32.xlu0 %v1312, 64
    %v1316 = vpop.permute.xlu0 %1315
    %v1318 = vmul.f32 %v1311, %v1316
    %1320 = vrot.lane.b32.xlu0 %v1318, 32
    %v1321 = vpop.permute.xlu0 %1320
    %v1323 = vadd.f32 %v1313, %v1321
    %v1324 = vtanh.pop %v1323
    %1326 = vrot.lane.b32.xlu0 %v1324, 64
    %v1327 = vpop.permute.xlu0 %1326
    %v1329 = vmul.f32 %v1311, %v1327
    %v1330 = vsel %vm396, %v1275, 0
    %1332 = vmatpush.bf16.msra.mxu0 0
    %1333 = vmatpush.bf16.msra.mxu0 0
    %1334 = vmatpush.bf16.msra.mxu0 0
    %1335 = vmatpush.bf16.msra.mxu0 0
    %1336 = vmatpush.bf16.msra.mxu0 %v486
    %1337 = vmatpush.bf16.msra.mxu0 %v484
    %1338 = vmatpush.bf16.msra.mxu0 %v482
    %1339 = vmatpush.bf16.msra.mxu0 %v480
    %1340 = vmatmul.bf16.gmra.mxu0 %v1330
    %v1341 = vpop.f32.mrf.mxu0
    %v1342 = vadd.f32 0.0, %v1341
    %v1343 = vpop.f32.mrf.mxu0
    %1344 = vdwg.mxu0
    %1345 = vmatpush.bf16.msra.mxu0 0
    %1346 = vmatpush.bf16.msra.mxu0 0
    %1347 = vmatpush.bf16.msra.mxu0 0
    %1348 = vmatpush.bf16.msra.mxu0 0
    %1349 = vmatpush.bf16.msra.mxu0 %v487
    %1350 = vmatpush.bf16.msra.mxu0 %v485
    %1351 = vmatpush.bf16.msra.mxu0 %v483
    %1352 = vmatpush.bf16.msra.mxu0 %v481
    %1353 = vmatmul.bf16.gmra.mxu0 %v1330
    %v1354 = vpop.f32.mrf.mxu0
    %v1355 = vadd.f32 0.0, %v1354
    %v1356 = vpop.f32.mrf.mxu0
    %1357 = vdwg.mxu0
    %v1360 = vrot.slane %v1342, 6
    %v1361 = vrot.slane %v1355, 6
    %v1364 = vadd.f32 %v415, %v1360
    %v1365 = vadd.f32 %v433, %v1361
    %v1366 = vxor.u32 %v1364, 2147483648
    %v1367 = vxor.u32 %v1365, 2147483648
    %v1368 = vmul.f32 %v1366, 1.442695
    %v1369 = vpow.pop %v1368
    %v1370 = vmul.f32 %v1367, 1.442695
    %v1371 = vpow.pop %v1370
    %v1372 = vadd.f32 %v1369, 1.0
    %v1373 = vadd.f32 %v1371, 1.0
    %v1374 = vrcp.pop %v1372
    %v1375 = vmul.f32 %v1372, %v1374
    %v1376 = vsub.f32 1.0, %v1375
    %v1377 = vmul.f32 %v1374, %v1376
    %v1378 = vadd.f32 %v1374, %v1377
    %vm1379 = vweird.f32 %v1372
    %vm1380 = vweird.f32 %v1374
    %vm1381 = vmor %vm1379, %vm1380
    %v1382 = vsel %vm1381, %v1374, %v1378
    %v1383 = vand.u32 2147483647, %v1372
    %vm1384 = vcmp.eq.f32.partialorder %v1383, 8.507059e+37
    %v1385 = vand.u32 %v1372, 2147483648
    %v1386 = vor.u32 1.1754944e-38, %v1385
    %v1387 = vsel %vm1384, %v1386, %v1382
    %v1388 = vmul.f32 1.0, %v1387
    %v1389 = vrcp.pop %v1373
    %v1390 = vmul.f32 %v1373, %v1389
    %v1391 = vsub.f32 1.0, %v1390
    %v1392 = vmul.f32 %v1389, %v1391
    %v1393 = vadd.f32 %v1389, %v1392
    %vm1394 = vweird.f32 %v1373
    %vm1395 = vweird.f32 %v1389
    %vm1396 = vmor %vm1394, %vm1395
    %v1397 = vsel %vm1396, %v1389, %v1393
    %v1398 = vand.u32 2147483647, %v1373
    %vm1399 = vcmp.eq.f32.partialorder %v1398, 8.507059e+37
    %v1400 = vand.u32 %v1373, 2147483648
    %v1401 = vor.u32 1.1754944e-38, %v1400
    %v1402 = vsel %vm1399, %v1401, %v1397
    %v1403 = vmul.f32 1.0, %v1402
    %v1404 = vtanh.pop %v1365
    %v1406 = vrot.slane %v1249, 6
    %v1408 = vmul.f32 %v1388, %v1406
    %v1409 = vmul.f32 %v1388, %v1404
    %1411 = vrot.lane.b32.xlu0 %v1409, 64
    %v1412 = vpop.permute.xlu0 %1411
    %v1414 = vadd.f32 %v1408, %v1412
    %v1415 = vtanh.pop %v1414
    %v1416 = vmul.f32 %v1403, %v1415
    %v1417 = vpack.c.bf16 %v1416, %v1416
    %v1418 = vpack.c.bf16 %v1329, %v1329
    %1420 = vrot.lane.b32.xlu0 %v1418, 32
    %v1421 = vpop.permute.xlu0 %1420
    %v1423 = vsel %vm588, %v1421, 0
    %1425 = vmatpush.bf16.msra.mxu0 0
    %1426 = vmatpush.bf16.msra.mxu0 0
    %1427 = vmatpush.bf16.msra.mxu0 0
    %1428 = vmatpush.bf16.msra.mxu0 0
    %1429 = vmatpush.bf16.msra.mxu0 0
    %1430 = vmatpush.bf16.msra.mxu0 0
    %1431 = vmatpush.bf16.msra.mxu0 %v585
    %1432 = vmatpush.bf16.msra.mxu0 %v584
    %1433 = vmatmul.bf16.gmra.mxu0 %v1423
    %v1434 = vpop.f32.mrf.mxu0
    %v1435 = vadd.f32 0.0, %v1434
    %v1436 = vpop.f32.mrf.mxu0
    %1437 = vdwg.mxu0
    %v1439 = vrot.slane %v1417, 1
    %1440 = vrot.lane.b32.xlu0 %v1439, 64
    %v1441 = vpop.permute.xlu0 %1440
    %v1443 = vsel %vm588, %v1441, 0
    %1445 = vmatpush.bf16.msra.mxu0 0
    %1446 = vmatpush.bf16.msra.mxu0 0
    %1447 = vmatpush.bf16.msra.mxu0 0
    %1448 = vmatpush.bf16.msra.mxu0 0
    %1449 = vmatpush.bf16.msra.mxu0 0
    %1450 = vmatpush.bf16.msra.mxu0 0
    %1451 = vmatpush.bf16.msra.mxu0 %v616
    %1452 = vmatpush.bf16.msra.mxu0 %v615
    %1453 = vmatmul.bf16.gmra.mxu0 %v1443
    %v1454 = vpop.f32.mrf.mxu0
    %v1455 = vadd.f32 %v1435, %v1454
    %v1456 = vpop.f32.mrf.mxu0
    %1457 = vdwg.mxu0
    %v1458 = vadd.f32 %v1455, %v455
    %v1459 = vxor.u32 %v1458, 2147483648
    %v1460 = vmul.f32 %v1459, 1.442695
    %v1461 = vpow.pop %v1460
    %v1462 = vadd.f32 %v1461, 1.0
    %v1463 = vrcp.pop %v1462
    %v1464 = vmul.f32 %v1462, %v1463
    %v1465 = vsub.f32 1.0, %v1464
    %v1466 = vmul.f32 %v1463, %v1465
    %v1467 = vadd.f32 %v1463, %v1466
    %vm1468 = vweird.f32 %v1462
    %vm1469 = vweird.f32 %v1463
    %vm1470 = vmor %vm1468, %vm1469
    %v1471 = vsel %vm1470, %v1463, %v1467
    %v1472 = vand.u32 2147483647, %v1462
    %vm1473 = vcmp.eq.f32.partialorder %v1472, 8.507059e+37
    %v1474 = vand.u32 %v1462, 2147483648
    %v1475 = vor.u32 1.1754944e-38, %v1474
    %v1476 = vsel %vm1473, %v1475, %v1471
    %v1477 = vmul.f32 1.0, %v1476
    %v1478 = vtanh.pop %v1458
    %v1479 = vmul.f32 %v1477, %v1323
    %1481 = vrot.lane.b32.xlu0 %v1478, 64
    %v1482 = vpop.permute.xlu0 %1481
    %v1484 = vmul.f32 %v1477, %v1482
    %1486 = vrot.lane.b32.xlu0 %v1484, 32
    %v1487 = vpop.permute.xlu0 %1486
    %v1489 = vadd.f32 %v1479, %v1487
    %v1490 = vtanh.pop %v1489
    %1492 = vrot.lane.b32.xlu0 %v1490, 64
    %v1493 = vpop.permute.xlu0 %1492
    %v1495 = vmul.f32 %v1477, %v1493
    %v1496 = vsel %vm396, %v1441, 0
    %1498 = vmatpush.bf16.msra.mxu0 0
    %1499 = vmatpush.bf16.msra.mxu0 0
    %1500 = vmatpush.bf16.msra.mxu0 0
    %1501 = vmatpush.bf16.msra.mxu0 0
    %1502 = vmatpush.bf16.msra.mxu0 %v486
    %1503 = vmatpush.bf16.msra.mxu0 %v484
    %1504 = vmatpush.bf16.msra.mxu0 %v482
    %1505 = vmatpush.bf16.msra.mxu0 %v480
    %1506 = vmatmul.bf16.gmra.mxu0 %v1496
    %v1507 = vpop.f32.mrf.mxu0
    %v1508 = vadd.f32 0.0, %v1507
    %v1509 = vpop.f32.mrf.mxu0
    %1510 = vdwg.mxu0
    %1511 = vmatpush.bf16.msra.mxu0 0
    %1512 = vmatpush.bf16.msra.mxu0 0
    %1513 = vmatpush.bf16.msra.mxu0 0
    %1514 = vmatpush.bf16.msra.mxu0 0
    %1515 = vmatpush.bf16.msra.mxu0 %v487
    %1516 = vmatpush.bf16.msra.mxu0 %v485
    %1517 = vmatpush.bf16.msra.mxu0 %v483
    %1518 = vmatpush.bf16.msra.mxu0 %v481
    %1519 = vmatmul.bf16.gmra.mxu0 %v1496
    %v1520 = vpop.f32.mrf.mxu0
    %v1521 = vadd.f32 0.0, %v1520
    %v1522 = vpop.f32.mrf.mxu0
    %1523 = vdwg.mxu0
    %v1526 = vrot.slane %v1508, 4
    %v1527 = vrot.slane %v1521, 4
    %v1530 = vadd.f32 %v415, %v1526
    %v1531 = vadd.f32 %v433, %v1527
    %v1532 = vxor.u32 %v1530, 2147483648
    %v1533 = vxor.u32 %v1531, 2147483648
    %v1534 = vmul.f32 %v1532, 1.442695
    %v1535 = vpow.pop %v1534
    %v1536 = vmul.f32 %v1533, 1.442695
    %v1537 = vpow.pop %v1536
    %v1538 = vadd.f32 %v1535, 1.0
    %v1539 = vadd.f32 %v1537, 1.0
    %v1540 = vrcp.pop %v1538
    %v1541 = vmul.f32 %v1538, %v1540
    %v1542 = vsub.f32 1.0, %v1541
    %v1543 = vmul.f32 %v1540, %v1542
    %v1544 = vadd.f32 %v1540, %v1543
    %vm1545 = vweird.f32 %v1538
    %vm1546 = vweird.f32 %v1540
    %vm1547 = vmor %vm1545, %vm1546
    %v1548 = vsel %vm1547, %v1540, %v1544
    %v1549 = vand.u32 2147483647, %v1538
    %vm1550 = vcmp.eq.f32.partialorder %v1549, 8.507059e+37
    %v1551 = vand.u32 %v1538, 2147483648
    %v1552 = vor.u32 1.1754944e-38, %v1551
    %v1553 = vsel %vm1550, %v1552, %v1548
    %v1554 = vmul.f32 1.0, %v1553
    %v1555 = vrcp.pop %v1539
    %v1556 = vmul.f32 %v1539, %v1555
    %v1557 = vsub.f32 1.0, %v1556
    %v1558 = vmul.f32 %v1555, %v1557
    %v1559 = vadd.f32 %v1555, %v1558
    %vm1560 = vweird.f32 %v1539
    %vm1561 = vweird.f32 %v1555
    %vm1562 = vmor %vm1560, %vm1561
    %v1563 = vsel %vm1562, %v1555, %v1559
    %v1564 = vand.u32 2147483647, %v1539
    %vm1565 = vcmp.eq.f32.partialorder %v1564, 8.507059e+37
    %v1566 = vand.u32 %v1539, 2147483648
    %v1567 = vor.u32 1.1754944e-38, %v1566
    %v1568 = vsel %vm1565, %v1567, %v1563
    %v1569 = vmul.f32 1.0, %v1568
    %v1570 = vtanh.pop %v1531
    %v1572 = vrot.slane %v1414, 6
    %v1574 = vmul.f32 %v1554, %v1572
    %v1575 = vmul.f32 %v1554, %v1570
    %1577 = vrot.lane.b32.xlu0 %v1575, 64
    %v1578 = vpop.permute.xlu0 %1577
    %v1580 = vadd.f32 %v1574, %v1578
    %v1581 = vtanh.pop %v1580
    %v1582 = vmul.f32 %v1569, %v1581
    %v1583 = vpack.c.bf16 %v1582, %v1582
    %v1584 = vpack.c.bf16 %v1495, %v1495
    %1586 = vrot.lane.b32.xlu0 %v1584, 32
    %v1587 = vpop.permute.xlu0 %1586
    %v1589 = vsel %vm588, %v1587, 0
    %1591 = vmatpush.bf16.msra.mxu0 0
    %1592 = vmatpush.bf16.msra.mxu0 0
    %1593 = vmatpush.bf16.msra.mxu0 0
    %1594 = vmatpush.bf16.msra.mxu0 0
    %1595 = vmatpush.bf16.msra.mxu0 0
    %1596 = vmatpush.bf16.msra.mxu0 0
    %1597 = vmatpush.bf16.msra.mxu0 %v585
    %1598 = vmatpush.bf16.msra.mxu0 %v584
    %1599 = vmatmul.bf16.gmra.mxu0 %v1589
    %v1600 = vpop.f32.mrf.mxu0
    %v1601 = vadd.f32 0.0, %v1600
    %v1602 = vpop.f32.mrf.mxu0
    %1603 = vdwg.mxu0
    %v1605 = vrot.slane %v1583, 2
    %1606 = vrot.lane.b32.xlu0 %v1605, 64
    %v1607 = vpop.permute.xlu0 %1606
    %v1609 = vsel %vm588, %v1607, 0
    %1611 = vmatpush.bf16.msra.mxu0 0
    %1612 = vmatpush.bf16.msra.mxu0 0
    %1613 = vmatpush.bf16.msra.mxu0 0
    %1614 = vmatpush.bf16.msra.mxu0 0
    %1615 = vmatpush.bf16.msra.mxu0 0
    %1616 = vmatpush.bf16.msra.mxu0 0
    %1617 = vmatpush.bf16.msra.mxu0 %v616
    %1618 = vmatpush.bf16.msra.mxu0 %v615
    %1619 = vmatmul.bf16.gmra.mxu0 %v1609
    %v1620 = vpop.f32.mrf.mxu0
    %v1621 = vadd.f32 %v1601, %v1620
    %v1622 = vpop.f32.mrf.mxu0
    %1623 = vdwg.mxu0
    %v1624 = vadd.f32 %v1621, %v455
    %v1625 = vxor.u32 %v1624, 2147483648
    %v1626 = vmul.f32 %v1625, 1.442695
    %v1627 = vpow.pop %v1626
    %v1628 = vadd.f32 %v1627, 1.0
    %v1629 = vrcp.pop %v1628
    %v1630 = vmul.f32 %v1628, %v1629
    %v1631 = vsub.f32 1.0, %v1630
    %v1632 = vmul.f32 %v1629, %v1631
    %v1633 = vadd.f32 %v1629, %v1632
    %vm1634 = vweird.f32 %v1628
    %vm1635 = vweird.f32 %v1629
    %vm1636 = vmor %vm1634, %vm1635
    %v1637 = vsel %vm1636, %v1629, %v1633
    %v1638 = vand.u32 2147483647, %v1628
    %vm1639 = vcmp.eq.f32.partialorder %v1638, 8.507059e+37
    %v1640 = vand.u32 %v1628, 2147483648
    %v1641 = vor.u32 1.1754944e-38, %v1640
    %v1642 = vsel %vm1639, %v1641, %v1637
    %v1643 = vmul.f32 1.0, %v1642
    %v1644 = vtanh.pop %v1624
    %v1645 = vmul.f32 %v1643, %v1489
    %1647 = vrot.lane.b32.xlu0 %v1644, 64
    %v1648 = vpop.permute.xlu0 %1647
    %v1650 = vmul.f32 %v1643, %v1648
    %1652 = vrot.lane.b32.xlu0 %v1650, 32
    %v1653 = vpop.permute.xlu0 %1652
    %v1655 = vadd.f32 %v1645, %v1653
    %v1656 = vtanh.pop %v1655
    %1658 = vrot.lane.b32.xlu0 %v1656, 64
    %v1659 = vpop.permute.xlu0 %1658
    %v1661 = vmul.f32 %v1643, %v1659
    %v1662 = vsel %vm396, %v1607, 0
    %1664 = vmatpush.bf16.msra.mxu0 0
    %1665 = vmatpush.bf16.msra.mxu0 0
    %1666 = vmatpush.bf16.msra.mxu0 0
    %1667 = vmatpush.bf16.msra.mxu0 0
    %1668 = vmatpush.bf16.msra.mxu0 %v486
    %1669 = vmatpush.bf16.msra.mxu0 %v484
    %1670 = vmatpush.bf16.msra.mxu0 %v482
    %1671 = vmatpush.bf16.msra.mxu0 %v480
    %1672 = vmatmul.bf16.gmra.mxu0 %v1662
    %v1673 = vpop.f32.mrf.mxu0
    %v1674 = vadd.f32 0.0, %v1673
    %v1675 = vpop.f32.mrf.mxu0
    %1676 = vdwg.mxu0
    %1677 = vmatpush.bf16.msra.mxu0 0
    %1678 = vmatpush.bf16.msra.mxu0 0
    %1679 = vmatpush.bf16.msra.mxu0 0
    %1680 = vmatpush.bf16.msra.mxu0 0
    %1681 = vmatpush.bf16.msra.mxu0 %v487
    %1682 = vmatpush.bf16.msra.mxu0 %v485
    %1683 = vmatpush.bf16.msra.mxu0 %v483
    %1684 = vmatpush.bf16.msra.mxu0 %v481
    %1685 = vmatmul.bf16.gmra.mxu0 %v1662
    %v1686 = vpop.f32.mrf.mxu0
    %v1687 = vadd.f32 0.0, %v1686
    %v1688 = vpop.f32.mrf.mxu0
    %1689 = vdwg.mxu0
    %v1692 = vrot.slane %v1674, 2
    %v1693 = vrot.slane %v1687, 2
    %v1696 = vadd.f32 %v415, %v1692
    %v1697 = vadd.f32 %v433, %v1693
    %v1698 = vxor.u32 %v1696, 2147483648
    %v1699 = vxor.u32 %v1697, 2147483648
    %v1700 = vmul.f32 %v1698, 1.442695
    %v1701 = vpow.pop %v1700
    %v1702 = vmul.f32 %v1699, 1.442695
    %v1703 = vpow.pop %v1702
    %v1704 = vadd.f32 %v1701, 1.0
    %v1705 = vadd.f32 %v1703, 1.0
    %v1706 = vrcp.pop %v1704
    %v1707 = vmul.f32 %v1704, %v1706
    %v1708 = vsub.f32 1.0, %v1707
    %v1709 = vmul.f32 %v1706, %v1708
    %v1710 = vadd.f32 %v1706, %v1709
    %vm1711 = vweird.f32 %v1704
    %vm1712 = vweird.f32 %v1706
    %vm1713 = vmor %vm1711, %vm1712
    %v1714 = vsel %vm1713, %v1706, %v1710
    %v1715 = vand.u32 2147483647, %v1704
    %vm1716 = vcmp.eq.f32.partialorder %v1715, 8.507059e+37
    %v1717 = vand.u32 %v1704, 2147483648
    %v1718 = vor.u32 1.1754944e-38, %v1717
    %v1719 = vsel %vm1716, %v1718, %v1714
    %v1720 = vmul.f32 1.0, %v1719
    %v1721 = vrcp.pop %v1705
    %v1722 = vmul.f32 %v1705, %v1721
    %v1723 = vsub.f32 1.0, %v1722
    %v1724 = vmul.f32 %v1721, %v1723
    %v1725 = vadd.f32 %v1721, %v1724
    %vm1726 = vweird.f32 %v1705
    %vm1727 = vweird.f32 %v1721
    %vm1728 = vmor %vm1726, %vm1727
    %v1729 = vsel %vm1728, %v1721, %v1725
    %v1730 = vand.u32 2147483647, %v1705
    %vm1731 = vcmp.eq.f32.partialorder %v1730, 8.507059e+37
    %v1732 = vand.u32 %v1705, 2147483648
    %v1733 = vor.u32 1.1754944e-38, %v1732
    %v1734 = vsel %vm1731, %v1733, %v1729
    %v1735 = vmul.f32 1.0, %v1734
    %v1736 = vtanh.pop %v1697
    %v1738 = vrot.slane %v1580, 6
    %v1740 = vmul.f32 %v1720, %v1738
    %v1741 = vmul.f32 %v1720, %v1736
    %1743 = vrot.lane.b32.xlu0 %v1741, 64
    %v1744 = vpop.permute.xlu0 %1743
    %v1746 = vadd.f32 %v1740, %v1744
    %v1747 = vtanh.pop %v1746
    %v1748 = vmul.f32 %v1735, %v1747
    %v1749 = vpack.c.bf16 %v1748, %v1748
    %v1750 = vpack.c.bf16 %v1661, %v1661
    %1752 = vrot.lane.b32.xlu0 %v1750, 32
    %v1753 = vpop.permute.xlu0 %1752
    %v1755 = vsel %vm588, %v1753, 0
    %1757 = vmatpush.bf16.msra.mxu0 0
    %1758 = vmatpush.bf16.msra.mxu0 0
    %1759 = vmatpush.bf16.msra.mxu0 0
    %1760 = vmatpush.bf16.msra.mxu0 0
    %1761 = vmatpush.bf16.msra.mxu0 0
    %1762 = vmatpush.bf16.msra.mxu0 0
    %1763 = vmatpush.bf16.msra.mxu0 %v585
    %1764 = vmatpush.bf16.msra.mxu0 %v584
    %1765 = vmatmul.bf16.gmra.mxu0 %v1755
    %v1766 = vpop.f32.mrf.mxu0
    %v1767 = vadd.f32 0.0, %v1766
    %v1768 = vpop.f32.mrf.mxu0
    %1769 = vdwg.mxu0
    %v1771 = vrot.slane %v1749, 3
    %1772 = vrot.lane.b32.xlu0 %v1771, 64
    %v1773 = vpop.permute.xlu0 %1772
    %v1775 = vsel %vm588, %v1773, 0
    %1777 = vmatpush.bf16.msra.mxu0 0
    %1778 = vmatpush.bf16.msra.mxu0 0
    %1779 = vmatpush.bf16.msra.mxu0 0
    %1780 = vmatpush.bf16.msra.mxu0 0
    %1781 = vmatpush.bf16.msra.mxu0 0
    %1782 = vmatpush.bf16.msra.mxu0 0
    %1783 = vmatpush.bf16.msra.mxu0 %v616
    %1784 = vmatpush.bf16.msra.mxu0 %v615
    %1785 = vmatmul.bf16.gmra.mxu0 %v1775
    %v1786 = vpop.f32.mrf.mxu0
    %v1787 = vadd.f32 %v1767, %v1786
    %v1788 = vpop.f32.mrf.mxu0
    %1789 = vdwg.mxu0
    %v1790 = vadd.f32 %v1787, %v455
    %v1791 = vxor.u32 %v1790, 2147483648
    %v1792 = vmul.f32 %v1791, 1.442695
    %v1793 = vpow.pop %v1792
    %v1794 = vadd.f32 %v1793, 1.0
    %v1795 = vrcp.pop %v1794
    %v1796 = vmul.f32 %v1794, %v1795
    %v1797 = vsub.f32 1.0, %v1796
    %v1798 = vmul.f32 %v1795, %v1797
    %v1799 = vadd.f32 %v1795, %v1798
    %vm1800 = vweird.f32 %v1794
    %vm1801 = vweird.f32 %v1795
    %vm1802 = vmor %vm1800, %vm1801
    %v1803 = vsel %vm1802, %v1795, %v1799
    %v1804 = vand.u32 2147483647, %v1794
    %vm1805 = vcmp.eq.f32.partialorder %v1804, 8.507059e+37
    %v1806 = vand.u32 %v1794, 2147483648
    %v1807 = vor.u32 1.1754944e-38, %v1806
    %v1808 = vsel %vm1805, %v1807, %v1803
    %v1809 = vmul.f32 1.0, %v1808
    %v1810 = vtanh.pop %v1790
    %v1811 = vmul.f32 %v1809, %v1655
    %1813 = vrot.lane.b32.xlu0 %v1810, 64
    %v1814 = vpop.permute.xlu0 %1813
    %v1816 = vmul.f32 %v1809, %v1814
    %1818 = vrot.lane.b32.xlu0 %v1816, 32
    %v1819 = vpop.permute.xlu0 %1818
    %v1821 = vadd.f32 %v1811, %v1819
    %v1822 = vtanh.pop %v1821
    %1824 = vrot.lane.b32.xlu0 %v1822, 64
    %v1825 = vpop.permute.xlu0 %1824
    %v1827 = vmul.f32 %v1809, %v1825
    %v1828 = vsel %vm396, %v1773, 0
    %1830 = vmatpush.bf16.msra.mxu0 0
    %1831 = vmatpush.bf16.msra.mxu0 0
    %1832 = vmatpush.bf16.msra.mxu0 0
    %1833 = vmatpush.bf16.msra.mxu0 0
    %1834 = vmatpush.bf16.msra.mxu0 %v486
    %1835 = vmatpush.bf16.msra.mxu0 %v484
    %1836 = vmatpush.bf16.msra.mxu0 %v482
    %1837 = vmatpush.bf16.msra.mxu0 %v480
    %1838 = vmatmul.bf16.gmra.mxu0 %v1828
    %v1839 = vpop.f32.mrf.mxu0
    %v1840 = vadd.f32 0.0, %v1839
    %v1841 = vpop.f32.mrf.mxu0
    %1842 = vdwg.mxu0
    %1843 = vmatpush.bf16.msra.mxu0 0
    %1844 = vmatpush.bf16.msra.mxu0 0
    %1845 = vmatpush.bf16.msra.mxu0 0
    %1846 = vmatpush.bf16.msra.mxu0 0
    %1847 = vmatpush.bf16.msra.mxu0 %v487
    %1848 = vmatpush.bf16.msra.mxu0 %v485
    %1849 = vmatpush.bf16.msra.mxu0 %v483
    %1850 = vmatpush.bf16.msra.mxu0 %v481
    %1851 = vmatmul.bf16.gmra.mxu0 %v1828
    %v1852 = vpop.f32.mrf.mxu0
    %v1853 = vadd.f32 0.0, %v1852
    %v1854 = vpop.f32.mrf.mxu0
    %1855 = vdwg.mxu0
    %v1856 = vadd.f32 %v418, %v1840
    %v1857 = vadd.f32 %v436, %v1853
    %v1858 = vxor.u32 %v1856, 2147483648
    %v1859 = vxor.u32 %v1857, 2147483648
    %v1860 = vmul.f32 %v1858, 1.442695
    %v1861 = vpow.pop %v1860
    %v1862 = vmul.f32 %v1859, 1.442695
    %v1863 = vpow.pop %v1862
    %v1864 = vadd.f32 %v1861, 1.0
    %v1865 = vadd.f32 %v1863, 1.0
    %v1866 = vrcp.pop %v1864
    %v1867 = vmul.f32 %v1864, %v1866
    %v1868 = vsub.f32 1.0, %v1867
    %v1869 = vmul.f32 %v1866, %v1868
    %v1870 = vadd.f32 %v1866, %v1869
    %vm1871 = vweird.f32 %v1864
    %vm1872 = vweird.f32 %v1866
    %vm1873 = vmor %vm1871, %vm1872
    %v1874 = vsel %vm1873, %v1866, %v1870
    %v1875 = vand.u32 2147483647, %v1864
    %vm1876 = vcmp.eq.f32.partialorder %v1875, 8.507059e+37
    %v1877 = vand.u32 %v1864, 2147483648
    %v1878 = vor.u32 1.1754944e-38, %v1877
    %v1879 = vsel %vm1876, %v1878, %v1874
    %v1880 = vmul.f32 1.0, %v1879
    %v1881 = vrcp.pop %v1865
    %v1882 = vmul.f32 %v1865, %v1881
    %v1883 = vsub.f32 1.0, %v1882
    %v1884 = vmul.f32 %v1881, %v1883
    %v1885 = vadd.f32 %v1881, %v1884
    %vm1886 = vweird.f32 %v1865
    %vm1887 = vweird.f32 %v1881
    %vm1888 = vmor %vm1886, %vm1887
    %v1889 = vsel %vm1888, %v1881, %v1885
    %v1890 = vand.u32 2147483647, %v1865
    %vm1891 = vcmp.eq.f32.partialorder %v1890, 8.507059e+37
    %v1892 = vand.u32 %v1865, 2147483648
    %v1893 = vor.u32 1.1754944e-38, %v1892
    %v1894 = vsel %vm1891, %v1893, %v1889
    %v1895 = vmul.f32 1.0, %v1894
    %v1896 = vtanh.pop %v1857
    %v1898 = vrot.slane %v1746, 6
    %v1900 = vmul.f32 %v1880, %v1898
    %v1901 = vmul.f32 %v1880, %v1896
    %1903 = vrot.lane.b32.xlu0 %v1901, 64
    %v1904 = vpop.permute.xlu0 %1903
    %v1906 = vadd.f32 %v1900, %v1904
    %v1907 = vtanh.pop %v1906
    %v1908 = vmul.f32 %v1895, %v1907
    %v1909 = vpack.c.bf16 %v1908, %v1908
    %v1910 = vpack.c.bf16 %v1827, %v1827
    %1912 = vrot.lane.b32.xlu0 %v1910, 32
    %v1913 = vpop.permute.xlu0 %1912
    %v1915 = vsel %vm588, %v1913, 0
    %1917 = vmatpush.bf16.msra.mxu0 0
    %1918 = vmatpush.bf16.msra.mxu0 0
    %1919 = vmatpush.bf16.msra.mxu0 0
    %1920 = vmatpush.bf16.msra.mxu0 0
    %1921 = vmatpush.bf16.msra.mxu0 0
    %1922 = vmatpush.bf16.msra.mxu0 0
    %1923 = vmatpush.bf16.msra.mxu0 %v585
    %1924 = vmatpush.bf16.msra.mxu0 %v584
    %1925 = vmatmul.bf16.gmra.mxu0 %v1915
    %v1926 = vpop.f32.mrf.mxu0
    %v1927 = vadd.f32 0.0, %v1926
    %v1928 = vpop.f32.mrf.mxu0
    %1929 = vdwg.mxu0
    %1931 = vrot.lane.b32.xlu0 %v1909, 64
    %v1932 = vpop.permute.xlu0 %1931
    %v1934 = vsel %vm588, %v1932, 0
    %1936 = vmatpush.bf16.msra.mxu0 0
    %1937 = vmatpush.bf16.msra.mxu0 0
    %1938 = vmatpush.bf16.msra.mxu0 0
    %1939 = vmatpush.bf16.msra.mxu0 0
    %1940 = vmatpush.bf16.msra.mxu0 0
    %1941 = vmatpush.bf16.msra.mxu0 0
    %1942 = vmatpush.bf16.msra.mxu0 %v616
    %1943 = vmatpush.bf16.msra.mxu0 %v615
    %1944 = vmatmul.bf16.gmra.mxu0 %v1934
    %v1945 = vpop.f32.mrf.mxu0
    %v1946 = vadd.f32 %v1927, %v1945
    %v1947 = vpop.f32.mrf.mxu0
    %1948 = vdwg.mxu0
    %v1949 = vadd.f32 %v1946, %v455
    %v1950 = vxor.u32 %v1949, 2147483648
    %v1951 = vmul.f32 %v1950, 1.442695
    %v1952 = vpow.pop %v1951
    %v1953 = vadd.f32 %v1952, 1.0
    %v1954 = vrcp.pop %v1953
    %v1955 = vmul.f32 %v1953, %v1954
    %v1956 = vsub.f32 1.0, %v1955
    %v1957 = vmul.f32 %v1954, %v1956
    %v1958 = vadd.f32 %v1954, %v1957
    %vm1959 = vweird.f32 %v1953
    %vm1960 = vweird.f32 %v1954
    %vm1961 = vmor %vm1959, %vm1960
    %v1962 = vsel %vm1961, %v1954, %v1958
    %v1963 = vand.u32 2147483647, %v1953
    %vm1964 = vcmp.eq.f32.partialorder %v1963, 8.507059e+37
    %v1965 = vand.u32 %v1953, 2147483648
    %v1966 = vor.u32 1.1754944e-38, %v1965
    %v1967 = vsel %vm1964, %v1966, %v1962
    %v1968 = vmul.f32 1.0, %v1967
    %v1969 = vtanh.pop %v1949
    %v1970 = vmul.f32 %v1968, %v1821
    %1972 = vrot.lane.b32.xlu0 %v1969, 64
    %v1973 = vpop.permute.xlu0 %1972
    %v1975 = vmul.f32 %v1968, %v1973
    %1977 = vrot.lane.b32.xlu0 %v1975, 32
    %v1978 = vpop.permute.xlu0 %1977
    %v1980 = vadd.f32 %v1970, %v1978
    %v1981 = vtanh.pop %v1980
    %1983 = vrot.lane.b32.xlu0 %v1981, 64
    %v1984 = vpop.permute.xlu0 %1983
    %v1986 = vmul.f32 %v1968, %v1984
    %v1987 = vsel %vm396, %v1932, 0
    %1989 = vmatpush.bf16.msra.mxu0 0
    %1990 = vmatpush.bf16.msra.mxu0 0
    %1991 = vmatpush.bf16.msra.mxu0 0
    %1992 = vmatpush.bf16.msra.mxu0 0
    %1993 = vmatpush.bf16.msra.mxu0 %v486
    %1994 = vmatpush.bf16.msra.mxu0 %v484
    %1995 = vmatpush.bf16.msra.mxu0 %v482
    %1996 = vmatpush.bf16.msra.mxu0 %v480
    %1997 = vmatmul.bf16.gmra.mxu0 %v1987
    %v1998 = vpop.f32.mrf.mxu0
    %v1999 = vadd.f32 0.0, %v1998
    %v2000 = vpop.f32.mrf.mxu0
    %2001 = vdwg.mxu0
    %2002 = vmatpush.bf16.msra.mxu0 0
    %2003 = vmatpush.bf16.msra.mxu0 0
    %2004 = vmatpush.bf16.msra.mxu0 0
    %2005 = vmatpush.bf16.msra.mxu0 0
    %2006 = vmatpush.bf16.msra.mxu0 %v487
    %2007 = vmatpush.bf16.msra.mxu0 %v485
    %2008 = vmatpush.bf16.msra.mxu0 %v483
    %2009 = vmatpush.bf16.msra.mxu0 %v481
    %2010 = vmatmul.bf16.gmra.mxu0 %v1987
    %v2011 = vpop.f32.mrf.mxu0
    %v2012 = vadd.f32 0.0, %v2011
    %v2013 = vpop.f32.mrf.mxu0
    %2014 = vdwg.mxu0
    %v2017 = vrot.slane %v1999, 6
    %v2018 = vrot.slane %v2012, 6
    %v2021 = vadd.f32 %v418, %v2017
    %v2022 = vadd.f32 %v436, %v2018
    %v2023 = vxor.u32 %v2021, 2147483648
    %v2024 = vxor.u32 %v2022, 2147483648
    %v2025 = vmul.f32 %v2023, 1.442695
    %v2026 = vpow.pop %v2025
    %v2027 = vmul.f32 %v2024, 1.442695
    %v2028 = vpow.pop %v2027
    %v2029 = vadd.f32 %v2026, 1.0
    %v2030 = vadd.f32 %v2028, 1.0
    %v2031 = vrcp.pop %v2029
    %v2032 = vmul.f32 %v2029, %v2031
    %v2033 = vsub.f32 1.0, %v2032
    %v2034 = vmul.f32 %v2031, %v2033
    %v2035 = vadd.f32 %v2031, %v2034
    %vm2036 = vweird.f32 %v2029
    %vm2037 = vweird.f32 %v2031
    %vm2038 = vmor %vm2036, %vm2037
    %v2039 = vsel %vm2038, %v2031, %v2035
    %v2040 = vand.u32 2147483647, %v2029
    %vm2041 = vcmp.eq.f32.partialorder %v2040, 8.507059e+37
    %v2042 = vand.u32 %v2029, 2147483648
    %v2043 = vor.u32 1.1754944e-38, %v2042
    %v2044 = vsel %vm2041, %v2043, %v2039
    %v2045 = vmul.f32 1.0, %v2044
    %v2046 = vrcp.pop %v2030
    %v2047 = vmul.f32 %v2030, %v2046
    %v2048 = vsub.f32 1.0, %v2047
    %v2049 = vmul.f32 %v2046, %v2048
    %v2050 = vadd.f32 %v2046, %v2049
    %vm2051 = vweird.f32 %v2030
    %vm2052 = vweird.f32 %v2046
    %vm2053 = vmor %vm2051, %vm2052
    %v2054 = vsel %vm2053, %v2046, %v2050
    %v2055 = vand.u32 2147483647, %v2030
    %vm2056 = vcmp.eq.f32.partialorder %v2055, 8.507059e+37
    %v2057 = vand.u32 %v2030, 2147483648
    %v2058 = vor.u32 1.1754944e-38, %v2057
    %v2059 = vsel %vm2056, %v2058, %v2054
    %v2060 = vmul.f32 1.0, %v2059
    %v2061 = vtanh.pop %v2022
    %v2063 = vrot.slane %v1906, 6
    %v2065 = vmul.f32 %v2045, %v2063
    %v2066 = vmul.f32 %v2045, %v2061
    %2068 = vrot.lane.b32.xlu0 %v2066, 64
    %v2069 = vpop.permute.xlu0 %2068
    %v2071 = vadd.f32 %v2065, %v2069
    %v2072 = vtanh.pop %v2071
    %v2073 = vmul.f32 %v2060, %v2072
    %v2074 = vpack.c.bf16 %v2073, %v2073
    %v2075 = vpack.c.bf16 %v1986, %v1986
    %2077 = vrot.lane.b32.xlu0 %v2075, 32
    %v2078 = vpop.permute.xlu0 %2077
    %v2080 = vsel %vm588, %v2078, 0
    %2082 = vmatpush.bf16.msra.mxu0 0
    %2083 = vmatpush.bf16.msra.mxu0 0
    %2084 = vmatpush.bf16.msra.mxu0 0
    %2085 = vmatpush.bf16.msra.mxu0 0
    %2086 = vmatpush.bf16.msra.mxu0 0
    %2087 = vmatpush.bf16.msra.mxu0 0
    %2088 = vmatpush.bf16.msra.mxu0 %v585
    %2089 = vmatpush.bf16.msra.mxu0 %v584
    %2090 = vmatmul.bf16.gmra.mxu0 %v2080
    %v2091 = vpop.f32.mrf.mxu0
    %v2092 = vadd.f32 0.0, %v2091
    %v2093 = vpop.f32.mrf.mxu0
    %2094 = vdwg.mxu0
    %v2096 = vrot.slane %v2074, 1
    %2097 = vrot.lane.b32.xlu0 %v2096, 64
    %v2098 = vpop.permute.xlu0 %2097
    %v2100 = vsel %vm588, %v2098, 0
    %2102 = vmatpush.bf16.msra.mxu0 0
    %2103 = vmatpush.bf16.msra.mxu0 0
    %2104 = vmatpush.bf16.msra.mxu0 0
    %2105 = vmatpush.bf16.msra.mxu0 0
    %2106 = vmatpush.bf16.msra.mxu0 0
    %2107 = vmatpush.bf16.msra.mxu0 0
    %2108 = vmatpush.bf16.msra.mxu0 %v616
    %2109 = vmatpush.bf16.msra.mxu0 %v615
    %2110 = vmatmul.bf16.gmra.mxu0 %v2100
    %v2111 = vpop.f32.mrf.mxu0
    %v2112 = vadd.f32 %v2092, %v2111
    %v2113 = vpop.f32.mrf.mxu0
    %2114 = vdwg.mxu0
    %v2115 = vadd.f32 %v2112, %v455
    %v2116 = vxor.u32 %v2115, 2147483648
    %v2117 = vmul.f32 %v2116, 1.442695
    %v2118 = vpow.pop %v2117
    %v2119 = vadd.f32 %v2118, 1.0
    %v2120 = vrcp.pop %v2119
    %v2121 = vmul.f32 %v2119, %v2120
    %v2122 = vsub.f32 1.0, %v2121
    %v2123 = vmul.f32 %v2120, %v2122
    %v2124 = vadd.f32 %v2120, %v2123
    %vm2125 = vweird.f32 %v2119
    %vm2126 = vweird.f32 %v2120
    %vm2127 = vmor %vm2125, %vm2126
    %v2128 = vsel %vm2127, %v2120, %v2124
    %v2129 = vand.u32 2147483647, %v2119
    %vm2130 = vcmp.eq.f32.partialorder %v2129, 8.507059e+37
    %v2131 = vand.u32 %v2119, 2147483648
    %v2132 = vor.u32 1.1754944e-38, %v2131
    %v2133 = vsel %vm2130, %v2132, %v2128
    %v2134 = vmul.f32 1.0, %v2133
    %v2135 = vtanh.pop %v2115
    %v2136 = vmul.f32 %v2134, %v1980
    %2138 = vrot.lane.b32.xlu0 %v2135, 64
    %v2139 = vpop.permute.xlu0 %2138
    %v2141 = vmul.f32 %v2134, %v2139
    %2143 = vrot.lane.b32.xlu0 %v2141, 32
    %v2144 = vpop.permute.xlu0 %2143
    %v2146 = vadd.f32 %v2136, %v2144
    %v2147 = vtanh.pop %v2146
    %2149 = vrot.lane.b32.xlu0 %v2147, 64
    %v2150 = vpop.permute.xlu0 %2149
    %v2152 = vmul.f32 %v2134, %v2150
    %v2153 = vld [vmem:[#allocation9 + $0xc0] sm:$0xf]
    %v2154 = vld [vmem:[#allocation9 + $0xc8] sm:$0xf]
    %v2155 = vld [vmem:[#allocation9 + $0xd0] sm:$0xf]
    %v2156 = vld [vmem:[#allocation9 + $0xd8] sm:$0xf]
    %v2157 = vpack.c.bf16 %v2152, %v2152
    %v2158 = vld [vmem:[#allocation9 + $0xe0] sm:$0xf]
    %v2159 = vld [vmem:[#allocation9 + $0xe8] sm:$0xf]
    %v2160 = vld [vmem:[#allocation9 + $0xf0] sm:$0xf]
    %v2161 = vld [vmem:[#allocation9 + $0xf8] sm:$0xf]
    %v2162 = vpack.c.bf16 %v2146, %v2146
    %2164 = vrot.lane.b32.xlu0 %v2162, 96
    %v2165 = vpop.permute.xlu0 %2164
    %v2170 = vunpack.c.l.b16 %v2158
    %v2171 = vunpack.c.l.b16 %v2159
    %v2172 = vunpack.c.l.b16 %v2160
    %v2173 = vunpack.c.l.b16 %v2161
    %v2174 = vpack.c.b16 %v2171, %v2170
    %v2175 = vpack.c.b16 %v2173, %v2172
    %v2179 = vsel %vm588, %v2165, 0
    %2181 = vmatpush.bf16.msra.mxu0 0
    %2182 = vmatpush.bf16.msra.mxu0 0
    %2183 = vmatpush.bf16.msra.mxu0 0
    %2184 = vmatpush.bf16.msra.mxu0 0
    %2185 = vmatpush.bf16.msra.mxu0 0
    %2186 = vmatpush.bf16.msra.mxu0 0
    %2187 = vmatpush.bf16.msra.mxu0 %v2175
    %2188 = vmatpush.bf16.msra.mxu0 %v2174
    %2189 = vmatmul.bf16.gmra.mxu0 %v2179
    %v2190 = vpop.f32.mrf.mxu0
    %v2191 = vadd.f32 0.0, %v2190
    %v2192 = vpop.f32.mrf.mxu0
    %2193 = vdwg.mxu0
    %2195 = vrot.lane.b32.xlu0 %v2157, 32
    %v2196 = vpop.permute.xlu0 %2195
    %v2201 = vunpack.c.l.b16 %v2153
    %v2202 = vunpack.c.l.b16 %v2154
    %v2203 = vunpack.c.l.b16 %v2155
    %v2204 = vunpack.c.l.b16 %v2156
    %v2205 = vpack.c.b16 %v2202, %v2201
    %v2206 = vpack.c.b16 %v2204, %v2203
    %v2210 = vsel %vm588, %v2196, 0
    %2212 = vmatpush.bf16.msra.mxu0 0
    %2213 = vmatpush.bf16.msra.mxu0 0
    %2214 = vmatpush.bf16.msra.mxu0 0
    %2215 = vmatpush.bf16.msra.mxu0 0
    %2216 = vmatpush.bf16.msra.mxu0 0
    %2217 = vmatpush.bf16.msra.mxu0 0
    %2218 = vmatpush.bf16.msra.mxu0 %v2206
    %2219 = vmatpush.bf16.msra.mxu0 %v2205
    %2220 = vmatmul.bf16.gmra.mxu0 %v2210
    %v2221 = vpop.f32.mrf.mxu0
    %v2222 = vadd.f32 %v2191, %v2221
    %v2223 = vpop.f32.mrf.mxu0
    %2224 = vdwg.mxu0
    %v2225 = vld [vmem:[#allocation10 + $0x2] ss:$0 sm:$0xff]
    %v2226 = vadd.f32 %v2222, %v2225
    %v2227 = vmax.f32 %v2226, 0.0
    %v2228 = vld [vmem:[#allocation9 + $0x100] sm:$0xf]
    %v2229 = vld [vmem:[#allocation9 + $0x108] sm:$0xf]
    %v2230 = vld [vmem:[#allocation9 + $0x110] sm:$0xf]
    %v2231 = vld [vmem:[#allocation9 + $0x118] sm:$0xf]
    %v2232 = vld [vmem:[#allocation9 + $0x120] sm:$0xf]
    %v2233 = vld [vmem:[#allocation9 + $0x128] sm:$0xf]
    %v2234 = vld [vmem:[#allocation9 + $0x130] sm:$0xf]
    %v2235 = vld [vmem:[#allocation9 + $0x138] sm:$0xf]
    %v2236 = vpack.c.bf16 %v2071, %v2071
    %v2238 = vrot.slane %v2236, 1
    %2239 = vrot.lane.b32.xlu0 %v2238, 32
    %v2240 = vpop.permute.xlu0 %2239
    %v2245 = vunpack.c.l.b16 %v2232
    %v2246 = vunpack.c.l.b16 %v2233
    %v2247 = vunpack.c.l.b16 %v2234
    %v2248 = vunpack.c.l.b16 %v2235
    %v2249 = vpack.c.b16 %v2246, %v2245
    %v2250 = vpack.c.b16 %v2248, %v2247
    %v2254 = vsel %vm588, %v2240, 0
    %2256 = vmatpush.bf16.msra.mxu0 0
    %2257 = vmatpush.bf16.msra.mxu0 0
    %2258 = vmatpush.bf16.msra.mxu0 0
    %2259 = vmatpush.bf16.msra.mxu0 0
    %2260 = vmatpush.bf16.msra.mxu0 0
    %2261 = vmatpush.bf16.msra.mxu0 0
    %2262 = vmatpush.bf16.msra.mxu0 %v2250
    %2263 = vmatpush.bf16.msra.mxu0 %v2249
    %2264 = vmatmul.bf16.gmra.mxu0 %v2254
    %v2265 = vpop.f32.mrf.mxu0
    %v2266 = vadd.f32 0.0, %v2265
    %v2267 = vpop.f32.mrf.mxu0
    %2268 = vdwg.mxu0
    %2269 = vrot.lane.b32.xlu0 %v2096, 32
    %v2270 = vpop.permute.xlu0 %2269
    %v2275 = vunpack.c.l.b16 %v2228
    %v2276 = vunpack.c.l.b16 %v2229
    %v2277 = vunpack.c.l.b16 %v2230
    %v2278 = vunpack.c.l.b16 %v2231
    %v2279 = vpack.c.b16 %v2276, %v2275
    %v2280 = vpack.c.b16 %v2278, %v2277
    %v2284 = vsel %vm588, %v2270, 0
    %2286 = vmatpush.bf16.msra.mxu0 0
    %2287 = vmatpush.bf16.msra.mxu0 0
    %2288 = vmatpush.bf16.msra.mxu0 0
    %2289 = vmatpush.bf16.msra.mxu0 0
    %2290 = vmatpush.bf16.msra.mxu0 0
    %2291 = vmatpush.bf16.msra.mxu0 0
    %2292 = vmatpush.bf16.msra.mxu0 %v2280
    %2293 = vmatpush.bf16.msra.mxu0 %v2279
    %2294 = vmatmul.bf16.gmra.mxu0 %v2284
    %v2295 = vpop.f32.mrf.mxu0
    %v2296 = vadd.f32 %v2266, %v2295
    %v2297 = vpop.f32.mrf.mxu0
    %2298 = vdwg.mxu0
    %v2299 = vld [vmem:[#allocation10 + $0x3] ss:$0 sm:$0xff]
    %v2300 = vadd.f32 %v2296, %v2299
    %v2301 = vmax.f32 %v2300, 0.0
    %v2302 = vld [vmem:[#allocation9 + $0x140] sm:$0xf]
    %v2303 = vld [vmem:[#allocation9 + $0x148] sm:$0xf]
    %v2304 = vld [vmem:[#allocation9 + $0x150] sm:$0xf]
    %v2305 = vld [vmem:[#allocation9 + $0x158] sm:$0xf]
    %v2306 = vpack.c.bf16 %v2227, %v2227
    %v2307 = vld [vmem:[#allocation9 + $0x160] sm:$0xf]
    %v2308 = vld [vmem:[#allocation9 + $0x168] sm:$0xf]
    %v2309 = vld [vmem:[#allocation9 + $0x170] sm:$0xf]
    %v2310 = vld [vmem:[#allocation9 + $0x178] sm:$0xf]
    %v2311 = vpack.c.bf16 %v2301, %v2301
    %v2316 = vunpack.c.l.b16 %v2307
    %v2317 = vunpack.c.l.b16 %v2308
    %v2318 = vunpack.c.l.b16 %v2309
    %v2319 = vunpack.c.l.b16 %v2310
    %v2320 = vpack.c.b16 %v2317, %v2316
    %v2321 = vpack.c.b16 %v2319, %v2318
    %v2325 = vsel %vm588, %v2311, 0
    %2327 = vmatpush.bf16.msra.mxu0 0
    %2328 = vmatpush.bf16.msra.mxu0 0
    %2329 = vmatpush.bf16.msra.mxu0 0
    %2330 = vmatpush.bf16.msra.mxu0 0
    %2331 = vmatpush.bf16.msra.mxu0 0
    %2332 = vmatpush.bf16.msra.mxu0 0
    %2333 = vmatpush.bf16.msra.mxu0 %v2321
    %2334 = vmatpush.bf16.msra.mxu0 %v2320
    %2335 = vmatmul.bf16.gmra.mxu0 %v2325
    %v2336 = vpop.f32.mrf.mxu0
    %v2337 = vadd.f32 0.0, %v2336
    %v2338 = vpop.f32.mrf.mxu0
    %2339 = vdwg.mxu0
    %v2344 = vunpack.c.l.b16 %v2302
    %v2345 = vunpack.c.l.b16 %v2303
    %v2346 = vunpack.c.l.b16 %v2304
    %v2347 = vunpack.c.l.b16 %v2305
    %v2348 = vpack.c.b16 %v2345, %v2344
    %v2349 = vpack.c.b16 %v2347, %v2346
    %v2353 = vsel %vm588, %v2306, 0
    %2355 = vmatpush.bf16.msra.mxu0 0
    %2356 = vmatpush.bf16.msra.mxu0 0
    %2357 = vmatpush.bf16.msra.mxu0 0
    %2358 = vmatpush.bf16.msra.mxu0 0
    %2359 = vmatpush.bf16.msra.mxu0 0
    %2360 = vmatpush.bf16.msra.mxu0 0
    %2361 = vmatpush.bf16.msra.mxu0 %v2349
    %2362 = vmatpush.bf16.msra.mxu0 %v2348
    %2363 = vmatmul.bf16.gmra.mxu0 %v2353
    %v2364 = vpop.f32.mrf.mxu0
    %v2365 = vadd.f32 %v2337, %v2364
    %v2366 = vpop.f32.mrf.mxu0
    %2367 = vdwg.mxu0
    %v2368 = vld [vmem:[#allocation10 + $0x4] ss:$0 sm:$0xff]
    %v2369 = vadd.f32 %v2365, %v2368
    %v2370 = vld [vmem:[#allocation9 + $0x180] sm:$0x1]
    %v2371 = vunpack.c.l.bf16 %v2370
    %v2372 = vperm.slane %v2371, 0
    %v2373 = vmul.f32 %v2369, %v2372
    %vm2374 = vcmask 254976
    %v2375 = vsel %vm2374, %v2373, 0.0
    %2376 = vadd.xlane.f32.xlu0 %v2375
    %v2377 = vpop.xlane.xlu0 %2376
    %v2378 = vld [vmem:[#allocation10 + $0x5] ss:$0 sm:$0xff]
    %v2379 = vadd.f32 %v2377, %v2378
    %v2380 = vxor.u32 %v2379, 2147483648
    %v2381 = vmul.f32 %v2380, 1.442695
    %v2382 = vpow.pop %v2381
    %v2383 = vadd.f32 %v2382, 1.0
    %v2384 = vrcp.pop %v2383
    %v2385 = vmul.f32 %v2383, %v2384
    %v2386 = vsub.f32 1.0, %v2385
    %v2387 = vmul.f32 %v2384, %v2386
    %v2388 = vadd.f32 %v2384, %v2387
    %vm2389 = vweird.f32 %v2383
    %vm2390 = vweird.f32 %v2384
    %vm2391 = vmor %vm2389, %vm2390
    %v2392 = vsel %vm2391, %v2384, %v2388
    %v2393 = vand.u32 2147483647, %v2383
    %vm2394 = vcmp.eq.f32.partialorder %v2393, 8.507059e+37
    %v2395 = vand.u32 %v2383, 2147483648
    %v2396 = vor.u32 1.1754944e-38, %v2395
    %v2397 = vsel %vm2394, %v2396, %v2392
    %v2398 = vmul.f32 1.0, %v2397
    %vm2399 = vcmask 1024
    %2400 = vst.msk [vmem:[%s5] sm:$0x3] %vm2399, %v2398
    // Predicated region
    $region42: #{forward.1} parent=1 // pred_check
      _
    $region43: #{forward.1} parent=1 // pred_check_branch
      %2402 = sbr.rel (0) target = $region45
    $region44: #{forward.1} parent=1 // pred_region
      _
    $region45: #{forward.1} parent=1 // pred_fallthru
      _
    // Predicated region
    $region46: #{forward.1} parent=1 // pred_check
      _
    $region47: #{forward.1} parent=1 // pred_check_branch
      %2404 = sbr.rel (0) target = $region49
    $region48: #{forward.1} parent=1 // pred_region
      _
    $region49: #{forward.1} parent=1 // pred_fallthru
      _
    %2405 = vsyncpa [#allocation4], 1
    %2406 = vsyncpa [#allocation8], 1
    %2407 = vsyncpa [#allocation11], 1
    %2408 = vsyncpa [#allocation5], 1

</llo_original>
